<compile_context>
chip_gen: v6e
topology: v6e:2x2x1
jax: 0.10.0
libtpu: 0.0.40
codegen_flags: <defaults>
</compile_context>

<pallas_src>
import functools

import jax
import jax.numpy as jnp
from jax.experimental import pallas as pl
from jax.experimental.pallas import tpu as pltpu

HIDDEN = 768          # BERT hidden size (fixed: Conv1d in_channels=768)
CONV_SPECS = (        # (kernel_size, out_channels) for conv1 / conv2 / conv3
    (2, 32),
    (3, 64),
    (4, 128),
)
K_MAX = max(k for k, _ in CONV_SPECS)                 # 4
N_CONV = sum(c for _, c in CONV_SPECS)                # 224
N_PAD = 256                                           # lane-aligned fused width
FEAT_DIM = HIDDEN + N_CONV                            # 992


def _ws_kernel(x_ref, w_ref, b_ref, out_ref, *, lw, bt):
    """One grid step = `bt` batch rows.

    x_ref   : (bt, lw + 3, HIDDEN)  bf16 word embeddings, time zero-padded by 3
    w_ref   : (K_MAX, HIDDEN, N_PAD) bf16 fused tap-major conv weights
    b_ref   : (1, N_PAD)            f32 fused conv bias (zero-padded)
    out_ref : (bt, N_PAD)           f32 pooled conv features (cols >=224 are 0)
    """
    t_max = lw - 1  # longest valid conv output length (kernel_size=2 branch)

    # Validity mask: branch with kernel_size k only has outputs for
    # t < lw - k + 1; tail rows (which also touch the zero time-padding) are
    # masked to -inf before the max.  Computed once per grid step.
    t_idx = jax.lax.broadcasted_iota(jnp.int32, (t_max, N_PAD), 0)
    c_idx = jax.lax.broadcasted_iota(jnp.int32, (t_max, N_PAD), 1)
    c1 = CONV_SPECS[0][1]
    c12 = CONV_SPECS[0][1] + CONV_SPECS[1][1]
    valid_len = jnp.where(
        c_idx < c1, lw - CONV_SPECS[0][0] + 1,
        jnp.where(c_idx < c12, lw - CONV_SPECS[1][0] + 1,
                  lw - CONV_SPECS[2][0] + 1))
    valid = t_idx < valid_len

    bias = b_ref[...]  # (1, N_PAD) f32

    pooled_rows = []
    for bi in range(bt):                      # static unroll over batch rows
        x = x_ref[bi]                         # (lw + 3, HIDDEN) bf16
        # Fused conv as per-tap MXU matmuls: acc[t] = sum_dk x[t+dk] @ W[dk]
        acc = jnp.dot(x[0:t_max, :], w_ref[0],
                      preferred_element_type=jnp.float32)
        for dk in range(1, K_MAX):            # static unroll over taps
            acc += jnp.dot(x[dk:dk + t_max, :], w_ref[dk],
                           preferred_element_type=jnp.float32)
        # Global max-pool over valid time positions (bias/ReLU after the max:
        # max_t(relu(a_t + b)) == relu(max_t(a_t) + b)).
        acc = jnp.where(valid, acc, -jnp.inf)
        pooled = jnp.max(acc, axis=0, keepdims=True)        # (1, N_PAD)
        pooled_rows.append(jnp.maximum(pooled + bias, 0.0))  # bias + ReLU
    # Single lane-dense, unmasked (bt, N_PAD) store.
    out_ref[...] = jnp.concatenate(pooled_rows, axis=0)


def _fuse_params(params):
    """Concatenate the three conv weights/biases into one padded slab.

    Returns W_cat (K_MAX, HIDDEN, N_PAD) bf16 (taps beyond a branch's kernel
    size and columns >= 224 are zero) and b_cat (1, N_PAD) f32.
    """
    w_cat = jnp.zeros((K_MAX, HIDDEN, N_PAD), jnp.float32)
    b_cat = jnp.zeros((1, N_PAD), jnp.float32)
    off = 0
    for (w, bias), (k, c) in zip(params, CONV_SPECS):
        w_cat = w_cat.at[:k, :, off:off + c].set(w)
        b_cat = b_cat.at[:, off:off + c].set(bias)
        off += c
    return w_cat.astype(jnp.bfloat16), b_cat


def ws_feature_forward(last_hidden_state, pooler_output, params, *, block_b=8):
    """JAX wrapper reproducing ws_Feature.forward (post-BERT part).

    last_hidden_state : [B, S, 768] float32
    pooler_output     : [B, 768]    float32
    returns           : [B, 992]    float32
    """
    b, s, h = last_hidden_state.shape
    assert h == HIDDEN
    lw = s - 1                                 # drop [CLS] token
    assert lw >= K_MAX, "sequence too short for the kernel_size=4 conv branch"

    bt = min(block_b, b)                       # batch rows per grid step
    b_pad = pl.cdiv(b, bt) * bt

    # Drop [CLS], pad batch to a multiple of bt, pad time by K_MAX-1 zero rows
    # (the padded rows only touch masked-out positions), cast to bf16.
    word_emb = last_hidden_state[:, 1:, :]
    word_emb = jnp.pad(word_emb, ((0, b_pad - b), (0, K_MAX - 1), (0, 0)))
    word_emb = word_emb.astype(jnp.bfloat16)

    w_cat, b_cat = _fuse_params(params)

    kernel = functools.partial(_ws_kernel, lw=lw, bt=bt)
    full = lambda shape: pl.BlockSpec(shape, lambda i: (0,) * len(shape))

    conv_feats = pl.pallas_call(
        kernel,
        out_shape=jax.ShapeDtypeStruct((b_pad, N_PAD), jnp.float32),
        grid_spec=pltpu.PrefetchScalarGridSpec(
            num_scalar_prefetch=0,
            grid=(b_pad // bt,),
            in_specs=[
                pl.BlockSpec((bt, lw + K_MAX - 1, HIDDEN),
                             lambda i: (i, 0, 0)),          # word embeddings
                full(w_cat.shape),                           # fused weights
                full(b_cat.shape),                           # fused bias
            ],
            out_specs=pl.BlockSpec((bt, N_PAD), lambda i: (i, 0)),
        ),
        compiler_params=pltpu.CompilerParams(
            dimension_semantics=("parallel",)),              # batch-parallel
    )(word_emb, w_cat, b_cat)

    # torch.cat((pooler_output, x1, x2, x3), dim=1) — pooler pass-through is
    # done here so the kernel only writes the 224 conv features.
    return jnp.concatenate([pooler_output, conv_feats[:b, :N_CONV]], axis=1)


def init_params(key):
    """Deterministic conv weights/biases.

    PyTorch Conv1d weight is (out_ch, in_ch, k); we store it tap-major as
    (k, in_ch, out_ch), which the per-tap matmul formulation wants.
    """
    params = []
    for idx, (k, c_out) in enumerate(CONV_SPECS):
        kw, kb = jax.random.split(jax.random.fold_in(key, idx))
        fan_in = HIDDEN * k
        bound = 1.0 / jnp.sqrt(fan_in)
        w_torch = jax.random.uniform(kw, (c_out, HIDDEN, k), jnp.float32,
                                     minval=-bound, maxval=bound)
        w = jnp.transpose(w_torch, (2, 1, 0))            # (k, H, C_out)
        bias = jax.random.uniform(kb, (1, c_out), jnp.float32,
                                  minval=-bound, maxval=bound)
        params.append((w, bias))
    return tuple(params)


def reference_forward(last_hidden_state, pooler_output, params):
    """Pure-JAX f32 reference (mirrors the PyTorch code) for a sanity check."""
    word_emb = last_hidden_state[:, 1:, :]               # [B, Lw, H]
    feats = [pooler_output]
    for (w, bias), (k, _) in zip(params, CONV_SPECS):
        lw = word_emb.shape[1]
        t = lw - k + 1
        acc = sum(jnp.einsum('blh,hc->blc', word_emb[:, dk:dk + t, :], w[dk])
                  for dk in range(k))
        acc = jax.nn.relu(acc + bias[None, :, :])
        feats.append(jnp.max(acc, axis=1))               # global max-pool
    return jnp.concatenate(feats, axis=1)


if __name__ == "__main__":
    key = jax.random.PRNGKey(0)
    k_lhs, k_pool, k_params = jax.random.split(key, 3)

    B, S = 4, 16                                 # small shapes (module default S=256)
    last_hidden_state = jax.random.normal(k_lhs, (B, S, HIDDEN), jnp.float32)
    pooler_output = jax.random.normal(k_pool, (B, HIDDEN), jnp.float32)
    params = init_params(k_params)

    out = ws_feature_forward(last_hidden_state, pooler_output, params)
    out = jax.block_until_ready(out)

    ref = reference_forward(last_hidden_state, pooler_output, params)
    assert out.shape == (B, FEAT_DIM), out.shape
    err = float(jnp.max(jnp.abs(out - ref)))
    # bf16 matmul operands (f32 accumulation) vs. f32 reference -> loosened tol.
    assert err < 3e-2, err

    print("KERNEL_OK")
</pallas_src>

<mosaic_0001>
module attributes {stable_mosaic.version = 11 : i64} {
  func.func @_ws_kernel(%arg0: i32, %arg1: memref<4x18x768xbf16, #tpu.memory_space<vmem>>, %arg2: memref<4x768x256xbf16, #tpu.memory_space<vmem>>, %arg3: memref<1x256xf32, #tpu.memory_space<vmem>>, %arg4: memref<4x256xf32, #tpu.memory_space<vmem>>) attributes {dimension_semantics = [#tpu.dimension_semantics<parallel>], iteration_bounds = array<i64: 1>, scalar_prefetch = 0 : i64, scratch_operands = 0 : i64, tpu.core_type = #tpu.core_type<tc>, window_params = [{transform_indices = @transform_0, window_bounds = array<i64: 4, 18, 768>}, {pipeline_mode = #tpu.pipeline_mode<synchronous>, transform_indices = @transform_1, window_bounds = array<i64: 4, 768, 256>}, {pipeline_mode = #tpu.pipeline_mode<synchronous>, transform_indices = @transform_2, window_bounds = array<i64: 1, 256>}, {transform_indices = @transform_3, window_bounds = array<i64: 4, 256>}]} {
    %0 = tpu.iota {dimensions = array<i32: 0>} : vector<14x256xi32>
    %1 = tpu.iota {dimensions = array<i32: 1>} : vector<14x256xi32>
    %c32_i32 = arith.constant 32 : i32
    %2 = vector.broadcast %c32_i32 : i32 to vector<14x256xi32>
    %3 = arith.cmpi slt, %1, %2 : vector<14x256xi32>
    %c96_i32 = arith.constant 96 : i32
    %4 = vector.broadcast %c96_i32 : i32 to vector<14x256xi32>
    %5 = arith.cmpi slt, %1, %4 : vector<14x256xi32>
    %c13_i32 = arith.constant 13 : i32
    %c12_i32 = arith.constant 12 : i32
    %6 = vector.broadcast %c13_i32 : i32 to vector<14x256xi32>
    %7 = vector.broadcast %c12_i32 : i32 to vector<14x256xi32>
    %8 = arith.select %5, %6, %7 : vector<14x256xi1>, vector<14x256xi32>
    %c14_i32 = arith.constant 14 : i32
    %9 = vector.broadcast %c14_i32 : i32 to vector<14x256xi32>
    %10 = arith.select %3, %9, %8 : vector<14x256xi1>, vector<14x256xi32>
    %11 = arith.cmpi slt, %0, %10 : vector<14x256xi32>
    %c0 = arith.constant 0 : index
    %c0_0 = arith.constant 0 : index
    %12 = vector.load %arg3[%c0, %c0_0] : memref<1x256xf32, #tpu.memory_space<vmem>>, vector<1x256xf32>
    %c0_1 = arith.constant 0 : index
    %c0_2 = arith.constant 0 : index
    %c0_3 = arith.constant 0 : index
    %13 = vector.load %arg1[%c0_1, %c0_2, %c0_3] : memref<4x18x768xbf16, #tpu.memory_space<vmem>>, vector<1x18x768xbf16>
    %14 = vector.shape_cast %13 : vector<1x18x768xbf16> to vector<18x768xbf16>
    %15 = vector.extract_strided_slice %14 {offsets = [0, 0], sizes = [14, 768], strides = [1, 1]} : vector<18x768xbf16> to vector<14x768xbf16>
    %c0_4 = arith.constant 0 : index
    %c0_5 = arith.constant 0 : index
    %c0_6 = arith.constant 0 : index
    %16 = vector.load %arg2[%c0_4, %c0_5, %c0_6] : memref<4x768x256xbf16, #tpu.memory_space<vmem>>, vector<1x768x256xbf16>
    %17 = vector.shape_cast %16 : vector<1x768x256xbf16> to vector<768x256xbf16>
    %cst = arith.constant dense<0.000000e+00> : vector<14x256xf32>
    %18 = tpu.matmul %15, %17, %cst {dimension_numbers = #tpu.dot_dimension_numbers<[1], [0], [0], [1], [0, 0, 1, 1], [], []>} : vector<14x768xbf16>, vector<768x256xbf16>, vector<14x256xf32> -> vector<14x256xf32>
    %19 = vector.extract_strided_slice %14 {offsets = [1, 0], sizes = [14, 768], strides = [1, 1]} : vector<18x768xbf16> to vector<14x768xbf16>
    %c1 = arith.constant 1 : index
    %c0_7 = arith.constant 0 : index
    %c0_8 = arith.constant 0 : index
    %20 = vector.load %arg2[%c1, %c0_7, %c0_8] : memref<4x768x256xbf16, #tpu.memory_space<vmem>>, vector<1x768x256xbf16>
    %21 = vector.shape_cast %20 : vector<1x768x256xbf16> to vector<768x256xbf16>
    %cst_9 = arith.constant dense<0.000000e+00> : vector<14x256xf32>
    %22 = tpu.matmul %19, %21, %cst_9 {dimension_numbers = #tpu.dot_dimension_numbers<[1], [0], [0], [1], [0, 0, 1, 1], [], []>} : vector<14x768xbf16>, vector<768x256xbf16>, vector<14x256xf32> -> vector<14x256xf32>
    %23 = arith.addf %18, %22 : vector<14x256xf32>
    %24 = vector.extract_strided_slice %14 {offsets = [2, 0], sizes = [14, 768], strides = [1, 1]} : vector<18x768xbf16> to vector<14x768xbf16>
    %c2 = arith.constant 2 : index
    %c0_10 = arith.constant 0 : index
    %c0_11 = arith.constant 0 : index
    %25 = vector.load %arg2[%c2, %c0_10, %c0_11] : memref<4x768x256xbf16, #tpu.memory_space<vmem>>, vector<1x768x256xbf16>
    %26 = vector.shape_cast %25 : vector<1x768x256xbf16> to vector<768x256xbf16>
    %cst_12 = arith.constant dense<0.000000e+00> : vector<14x256xf32>
    %27 = tpu.matmul %24, %26, %cst_12 {dimension_numbers = #tpu.dot_dimension_numbers<[1], [0], [0], [1], [0, 0, 1, 1], [], []>} : vector<14x768xbf16>, vector<768x256xbf16>, vector<14x256xf32> -> vector<14x256xf32>
    %28 = arith.addf %23, %27 : vector<14x256xf32>
    %29 = vector.extract_strided_slice %14 {offsets = [3, 0], sizes = [14, 768], strides = [1, 1]} : vector<18x768xbf16> to vector<14x768xbf16>
    %c3 = arith.constant 3 : index
    %c0_13 = arith.constant 0 : index
    %c0_14 = arith.constant 0 : index
    %30 = vector.load %arg2[%c3, %c0_13, %c0_14] : memref<4x768x256xbf16, #tpu.memory_space<vmem>>, vector<1x768x256xbf16>
    %31 = vector.shape_cast %30 : vector<1x768x256xbf16> to vector<768x256xbf16>
    %cst_15 = arith.constant dense<0.000000e+00> : vector<14x256xf32>
    %32 = tpu.matmul %29, %31, %cst_15 {dimension_numbers = #tpu.dot_dimension_numbers<[1], [0], [0], [1], [0, 0, 1, 1], [], []>} : vector<14x768xbf16>, vector<768x256xbf16>, vector<14x256xf32> -> vector<14x256xf32>
    %33 = arith.addf %28, %32 : vector<14x256xf32>
    %cst_16 = arith.constant 0xFF800000 : f32
    %34 = vector.broadcast %cst_16 : f32 to vector<14x256xf32>
    %35 = arith.select %11, %33, %34 : vector<14x256xi1>, vector<14x256xf32>
    %cst_17 = arith.constant dense<0xFF800000> : vector<256xf32>
    %36 = vector.multi_reduction <maximumf>, %35, %cst_17 [0] : vector<14x256xf32> to vector<256xf32>
    %37 = vector.shape_cast %36 : vector<256xf32> to vector<1x256xf32>
    %38 = arith.addf %37, %12 : vector<1x256xf32>
    %cst_18 = arith.constant 0.000000e+00 : f32
    %39 = vector.broadcast %cst_18 : f32 to vector<1x256xf32>
    %40 = arith.maximumf %38, %39 : vector<1x256xf32>
    %c1_19 = arith.constant 1 : index
    %c0_20 = arith.constant 0 : index
    %c0_21 = arith.constant 0 : index
    %41 = vector.load %arg1[%c1_19, %c0_20, %c0_21] : memref<4x18x768xbf16, #tpu.memory_space<vmem>>, vector<1x18x768xbf16>
    %42 = vector.shape_cast %41 : vector<1x18x768xbf16> to vector<18x768xbf16>
    %43 = vector.extract_strided_slice %42 {offsets = [0, 0], sizes = [14, 768], strides = [1, 1]} : vector<18x768xbf16> to vector<14x768xbf16>
    %c0_22 = arith.constant 0 : index
    %c0_23 = arith.constant 0 : index
    %c0_24 = arith.constant 0 : index
    %44 = vector.load %arg2[%c0_22, %c0_23, %c0_24] : memref<4x768x256xbf16, #tpu.memory_space<vmem>>, vector<1x768x256xbf16>
    %45 = vector.shape_cast %44 : vector<1x768x256xbf16> to vector<768x256xbf16>
    %cst_25 = arith.constant dense<0.000000e+00> : vector<14x256xf32>
    %46 = tpu.matmul %43, %45, %cst_25 {dimension_numbers = #tpu.dot_dimension_numbers<[1], [0], [0], [1], [0, 0, 1, 1], [], []>} : vector<14x768xbf16>, vector<768x256xbf16>, vector<14x256xf32> -> vector<14x256xf32>
    %47 = vector.extract_strided_slice %42 {offsets = [1, 0], sizes = [14, 768], strides = [1, 1]} : vector<18x768xbf16> to vector<14x768xbf16>
    %c1_26 = arith.constant 1 : index
    %c0_27 = arith.constant 0 : index
    %c0_28 = arith.constant 0 : index
    %48 = vector.load %arg2[%c1_26, %c0_27, %c0_28] : memref<4x768x256xbf16, #tpu.memory_space<vmem>>, vector<1x768x256xbf16>
    %49 = vector.shape_cast %48 : vector<1x768x256xbf16> to vector<768x256xbf16>
    %cst_29 = arith.constant dense<0.000000e+00> : vector<14x256xf32>
    %50 = tpu.matmul %47, %49, %cst_29 {dimension_numbers = #tpu.dot_dimension_numbers<[1], [0], [0], [1], [0, 0, 1, 1], [], []>} : vector<14x768xbf16>, vector<768x256xbf16>, vector<14x256xf32> -> vector<14x256xf32>
    %51 = arith.addf %46, %50 : vector<14x256xf32>
    %52 = vector.extract_strided_slice %42 {offsets = [2, 0], sizes = [14, 768], strides = [1, 1]} : vector<18x768xbf16> to vector<14x768xbf16>
    %c2_30 = arith.constant 2 : index
    %c0_31 = arith.constant 0 : index
    %c0_32 = arith.constant 0 : index
    %53 = vector.load %arg2[%c2_30, %c0_31, %c0_32] : memref<4x768x256xbf16, #tpu.memory_space<vmem>>, vector<1x768x256xbf16>
    %54 = vector.shape_cast %53 : vector<1x768x256xbf16> to vector<768x256xbf16>
    %cst_33 = arith.constant dense<0.000000e+00> : vector<14x256xf32>
    %55 = tpu.matmul %52, %54, %cst_33 {dimension_numbers = #tpu.dot_dimension_numbers<[1], [0], [0], [1], [0, 0, 1, 1], [], []>} : vector<14x768xbf16>, vector<768x256xbf16>, vector<14x256xf32> -> vector<14x256xf32>
    %56 = arith.addf %51, %55 : vector<14x256xf32>
    %57 = vector.extract_strided_slice %42 {offsets = [3, 0], sizes = [14, 768], strides = [1, 1]} : vector<18x768xbf16> to vector<14x768xbf16>
    %c3_34 = arith.constant 3 : index
    %c0_35 = arith.constant 0 : index
    %c0_36 = arith.constant 0 : index
    %58 = vector.load %arg2[%c3_34, %c0_35, %c0_36] : memref<4x768x256xbf16, #tpu.memory_space<vmem>>, vector<1x768x256xbf16>
    %59 = vector.shape_cast %58 : vector<1x768x256xbf16> to vector<768x256xbf16>
    %cst_37 = arith.constant dense<0.000000e+00> : vector<14x256xf32>
    %60 = tpu.matmul %57, %59, %cst_37 {dimension_numbers = #tpu.dot_dimension_numbers<[1], [0], [0], [1], [0, 0, 1, 1], [], []>} : vector<14x768xbf16>, vector<768x256xbf16>, vector<14x256xf32> -> vector<14x256xf32>
    %61 = arith.addf %56, %60 : vector<14x256xf32>
    %cst_38 = arith.constant 0xFF800000 : f32
    %62 = vector.broadcast %cst_38 : f32 to vector<14x256xf32>
    %63 = arith.select %11, %61, %62 : vector<14x256xi1>, vector<14x256xf32>
    %cst_39 = arith.constant dense<0xFF800000> : vector<256xf32>
    %64 = vector.multi_reduction <maximumf>, %63, %cst_39 [0] : vector<14x256xf32> to vector<256xf32>
    %65 = vector.shape_cast %64 : vector<256xf32> to vector<1x256xf32>
    %66 = arith.addf %65, %12 : vector<1x256xf32>
    %cst_40 = arith.constant 0.000000e+00 : f32
    %67 = vector.broadcast %cst_40 : f32 to vector<1x256xf32>
    %68 = arith.maximumf %66, %67 : vector<1x256xf32>
    %c2_41 = arith.constant 2 : index
    %c0_42 = arith.constant 0 : index
    %c0_43 = arith.constant 0 : index
    %69 = vector.load %arg1[%c2_41, %c0_42, %c0_43] : memref<4x18x768xbf16, #tpu.memory_space<vmem>>, vector<1x18x768xbf16>
    %70 = vector.shape_cast %69 : vector<1x18x768xbf16> to vector<18x768xbf16>
    %71 = vector.extract_strided_slice %70 {offsets = [0, 0], sizes = [14, 768], strides = [1, 1]} : vector<18x768xbf16> to vector<14x768xbf16>
    %c0_44 = arith.constant 0 : index
    %c0_45 = arith.constant 0 : index
    %c0_46 = arith.constant 0 : index
    %72 = vector.load %arg2[%c0_44, %c0_45, %c0_46] : memref<4x768x256xbf16, #tpu.memory_space<vmem>>, vector<1x768x256xbf16>
    %73 = vector.shape_cast %72 : vector<1x768x256xbf16> to vector<768x256xbf16>
    %cst_47 = arith.constant dense<0.000000e+00> : vector<14x256xf32>
    %74 = tpu.matmul %71, %73, %cst_47 {dimension_numbers = #tpu.dot_dimension_numbers<[1], [0], [0], [1], [0, 0, 1, 1], [], []>} : vector<14x768xbf16>, vector<768x256xbf16>, vector<14x256xf32> -> vector<14x256xf32>
    %75 = vector.extract_strided_slice %70 {offsets = [1, 0], sizes = [14, 768], strides = [1, 1]} : vector<18x768xbf16> to vector<14x768xbf16>
    %c1_48 = arith.constant 1 : index
    %c0_49 = arith.constant 0 : index
    %c0_50 = arith.constant 0 : index
    %76 = vector.load %arg2[%c1_48, %c0_49, %c0_50] : memref<4x768x256xbf16, #tpu.memory_space<vmem>>, vector<1x768x256xbf16>
    %77 = vector.shape_cast %76 : vector<1x768x256xbf16> to vector<768x256xbf16>
    %cst_51 = arith.constant dense<0.000000e+00> : vector<14x256xf32>
    %78 = tpu.matmul %75, %77, %cst_51 {dimension_numbers = #tpu.dot_dimension_numbers<[1], [0], [0], [1], [0, 0, 1, 1], [], []>} : vector<14x768xbf16>, vector<768x256xbf16>, vector<14x256xf32> -> vector<14x256xf32>
    %79 = arith.addf %74, %78 : vector<14x256xf32>
    %80 = vector.extract_strided_slice %70 {offsets = [2, 0], sizes = [14, 768], strides = [1, 1]} : vector<18x768xbf16> to vector<14x768xbf16>
    %c2_52 = arith.constant 2 : index
    %c0_53 = arith.constant 0 : index
    %c0_54 = arith.constant 0 : index
    %81 = vector.load %arg2[%c2_52, %c0_53, %c0_54] : memref<4x768x256xbf16, #tpu.memory_space<vmem>>, vector<1x768x256xbf16>
    %82 = vector.shape_cast %81 : vector<1x768x256xbf16> to vector<768x256xbf16>
    %cst_55 = arith.constant dense<0.000000e+00> : vector<14x256xf32>
    %83 = tpu.matmul %80, %82, %cst_55 {dimension_numbers = #tpu.dot_dimension_numbers<[1], [0], [0], [1], [0, 0, 1, 1], [], []>} : vector<14x768xbf16>, vector<768x256xbf16>, vector<14x256xf32> -> vector<14x256xf32>
    %84 = arith.addf %79, %83 : vector<14x256xf32>
    %85 = vector.extract_strided_slice %70 {offsets = [3, 0], sizes = [14, 768], strides = [1, 1]} : vector<18x768xbf16> to vector<14x768xbf16>
    %c3_56 = arith.constant 3 : index
    %c0_57 = arith.constant 0 : index
    %c0_58 = arith.constant 0 : index
    %86 = vector.load %arg2[%c3_56, %c0_57, %c0_58] : memref<4x768x256xbf16, #tpu.memory_space<vmem>>, vector<1x768x256xbf16>
    %87 = vector.shape_cast %86 : vector<1x768x256xbf16> to vector<768x256xbf16>
    %cst_59 = arith.constant dense<0.000000e+00> : vector<14x256xf32>
    %88 = tpu.matmul %85, %87, %cst_59 {dimension_numbers = #tpu.dot_dimension_numbers<[1], [0], [0], [1], [0, 0, 1, 1], [], []>} : vector<14x768xbf16>, vector<768x256xbf16>, vector<14x256xf32> -> vector<14x256xf32>
    %89 = arith.addf %84, %88 : vector<14x256xf32>
    %cst_60 = arith.constant 0xFF800000 : f32
    %90 = vector.broadcast %cst_60 : f32 to vector<14x256xf32>
    %91 = arith.select %11, %89, %90 : vector<14x256xi1>, vector<14x256xf32>
    %cst_61 = arith.constant dense<0xFF800000> : vector<256xf32>
    %92 = vector.multi_reduction <maximumf>, %91, %cst_61 [0] : vector<14x256xf32> to vector<256xf32>
    %93 = vector.shape_cast %92 : vector<256xf32> to vector<1x256xf32>
    %94 = arith.addf %93, %12 : vector<1x256xf32>
    %cst_62 = arith.constant 0.000000e+00 : f32
    %95 = vector.broadcast %cst_62 : f32 to vector<1x256xf32>
    %96 = arith.maximumf %94, %95 : vector<1x256xf32>
    %c3_63 = arith.constant 3 : index
    %c0_64 = arith.constant 0 : index
    %c0_65 = arith.constant 0 : index
    %97 = vector.load %arg1[%c3_63, %c0_64, %c0_65] : memref<4x18x768xbf16, #tpu.memory_space<vmem>>, vector<1x18x768xbf16>
    %98 = vector.shape_cast %97 : vector<1x18x768xbf16> to vector<18x768xbf16>
    %99 = vector.extract_strided_slice %98 {offsets = [0, 0], sizes = [14, 768], strides = [1, 1]} : vector<18x768xbf16> to vector<14x768xbf16>
    %c0_66 = arith.constant 0 : index
    %c0_67 = arith.constant 0 : index
    %c0_68 = arith.constant 0 : index
    %100 = vector.load %arg2[%c0_66, %c0_67, %c0_68] : memref<4x768x256xbf16, #tpu.memory_space<vmem>>, vector<1x768x256xbf16>
    %101 = vector.shape_cast %100 : vector<1x768x256xbf16> to vector<768x256xbf16>
    %cst_69 = arith.constant dense<0.000000e+00> : vector<14x256xf32>
    %102 = tpu.matmul %99, %101, %cst_69 {dimension_numbers = #tpu.dot_dimension_numbers<[1], [0], [0], [1], [0, 0, 1, 1], [], []>} : vector<14x768xbf16>, vector<768x256xbf16>, vector<14x256xf32> -> vector<14x256xf32>
    %103 = vector.extract_strided_slice %98 {offsets = [1, 0], sizes = [14, 768], strides = [1, 1]} : vector<18x768xbf16> to vector<14x768xbf16>
    %c1_70 = arith.constant 1 : index
    %c0_71 = arith.constant 0 : index
    %c0_72 = arith.constant 0 : index
    %104 = vector.load %arg2[%c1_70, %c0_71, %c0_72] : memref<4x768x256xbf16, #tpu.memory_space<vmem>>, vector<1x768x256xbf16>
    %105 = vector.shape_cast %104 : vector<1x768x256xbf16> to vector<768x256xbf16>
    %cst_73 = arith.constant dense<0.000000e+00> : vector<14x256xf32>
    %106 = tpu.matmul %103, %105, %cst_73 {dimension_numbers = #tpu.dot_dimension_numbers<[1], [0], [0], [1], [0, 0, 1, 1], [], []>} : vector<14x768xbf16>, vector<768x256xbf16>, vector<14x256xf32> -> vector<14x256xf32>
    %107 = arith.addf %102, %106 : vector<14x256xf32>
    %108 = vector.extract_strided_slice %98 {offsets = [2, 0], sizes = [14, 768], strides = [1, 1]} : vector<18x768xbf16> to vector<14x768xbf16>
    %c2_74 = arith.constant 2 : index
    %c0_75 = arith.constant 0 : index
    %c0_76 = arith.constant 0 : index
    %109 = vector.load %arg2[%c2_74, %c0_75, %c0_76] : memref<4x768x256xbf16, #tpu.memory_space<vmem>>, vector<1x768x256xbf16>
    %110 = vector.shape_cast %109 : vector<1x768x256xbf16> to vector<768x256xbf16>
    %cst_77 = arith.constant dense<0.000000e+00> : vector<14x256xf32>
    %111 = tpu.matmul %108, %110, %cst_77 {dimension_numbers = #tpu.dot_dimension_numbers<[1], [0], [0], [1], [0, 0, 1, 1], [], []>} : vector<14x768xbf16>, vector<768x256xbf16>, vector<14x256xf32> -> vector<14x256xf32>
    %112 = arith.addf %107, %111 : vector<14x256xf32>
    %113 = vector.extract_strided_slice %98 {offsets = [3, 0], sizes = [14, 768], strides = [1, 1]} : vector<18x768xbf16> to vector<14x768xbf16>
    %c3_78 = arith.constant 3 : index
    %c0_79 = arith.constant 0 : index
    %c0_80 = arith.constant 0 : index
    %114 = vector.load %arg2[%c3_78, %c0_79, %c0_80] : memref<4x768x256xbf16, #tpu.memory_space<vmem>>, vector<1x768x256xbf16>
    %115 = vector.shape_cast %114 : vector<1x768x256xbf16> to vector<768x256xbf16>
    %cst_81 = arith.constant dense<0.000000e+00> : vector<14x256xf32>
    %116 = tpu.matmul %113, %115, %cst_81 {dimension_numbers = #tpu.dot_dimension_numbers<[1], [0], [0], [1], [0, 0, 1, 1], [], []>} : vector<14x768xbf16>, vector<768x256xbf16>, vector<14x256xf32> -> vector<14x256xf32>
    %117 = arith.addf %112, %116 : vector<14x256xf32>
    %cst_82 = arith.constant 0xFF800000 : f32
    %118 = vector.broadcast %cst_82 : f32 to vector<14x256xf32>
    %119 = arith.select %11, %117, %118 : vector<14x256xi1>, vector<14x256xf32>
    %cst_83 = arith.constant dense<0xFF800000> : vector<256xf32>
    %120 = vector.multi_reduction <maximumf>, %119, %cst_83 [0] : vector<14x256xf32> to vector<256xf32>
    %121 = vector.shape_cast %120 : vector<256xf32> to vector<1x256xf32>
    %122 = arith.addf %121, %12 : vector<1x256xf32>
    %cst_84 = arith.constant 0.000000e+00 : f32
    %123 = vector.broadcast %cst_84 : f32 to vector<1x256xf32>
    %124 = arith.maximumf %122, %123 : vector<1x256xf32>
    %125 = tpu.concatenate %40, %68, %96, %124 in 0 : vector<1x256xf32>, vector<1x256xf32>, vector<1x256xf32>, vector<1x256xf32> -> vector<4x256xf32>
    %c0_85 = arith.constant 0 : index
    %c0_86 = arith.constant 0 : index
    %126 = vector.load %arg4[%c0_85, %c0_86] : memref<4x256xf32, #tpu.memory_space<vmem>>, vector<4x256xf32>
    tpu.vector_store %arg4[%c0_85, %c0_86], %125 {strides = array<i32>} : memref<4x256xf32, #tpu.memory_space<vmem>>, vector<4x256xf32>,
    return
  }
  func.func @transform_0(%arg0: i32) -> (i32, i32, i32) {
    %c0_i32 = arith.constant 0 : i32
    %c0_i32_0 = arith.constant 0 : i32
    %c0_i32_1 = arith.constant 0 : i32
    return %arg0, %c0_i32, %c0_i32_0 : i32, i32, i32
  }
  func.func @transform_1(%arg0: i32) -> (i32, i32, i32) {
    %c0_i32 = arith.constant 0 : i32
    %c0_i32_0 = arith.constant 0 : i32
    %c0_i32_1 = arith.constant 0 : i32
    %c0_i32_2 = arith.constant 0 : i32
    return %c0_i32, %c0_i32_0, %c0_i32_1 : i32, i32, i32
  }
  func.func @transform_2(%arg0: i32) -> (i32, i32) {
    %c0_i32 = arith.constant 0 : i32
    %c0_i32_0 = arith.constant 0 : i32
    %c0_i32_1 = arith.constant 0 : i32
    return %c0_i32, %c0_i32_0 : i32, i32
  }
  func.func @transform_3(%arg0: i32) -> (i32, i32) {
    %c0_i32 = arith.constant 0 : i32
    %c0_i32_0 = arith.constant 0 : i32
    return %arg0, %c0_i32 : i32, i32
  }
}

</mosaic_0001>

<llo_original>
// kernel: tpu_custom_call.1
$region0: #{tpu_custom_call.1}
  #allocation0 [shape = 'u32[]', space=smem, size = 0x4, offset = 0x4, fixed_abs, tag = 'smem constant byte address 0x4 - core index']
  #allocation1 [shape = 'u32[144,128]{1,0:T(1,128)}', space=vmem, size = 0x12000, scoped, tag = 'internal scratch']
  %s0 = inlined_call_operand.vmem [shape: bf16[4,18,768], index: 0, kind: input, shape index: {}]
  %s1 = inlined_call_operand.hbm [shape: bf16[4,768,256], index: 1, kind: input, shape index: {}]
  %s2 = inlined_call_operand.hbm [shape: f32[1,256], index: 2, kind: input, shape index: {}]
  %s3 = inlined_call_operand.hbm [shape: f32[4,256], index: 3, kind: output, shape index: {}]
  %s4 = sld [smem:[#allocation0]]
  $region30: #{tpu_custom_call.1} parent=0
    _
  %s6 = ssub.s32 1, %s4
  %s7 = scalar_select 0, %s6, %s4
  $region1: #{tpu_custom_call.1} parent=0
    #allocation2 [shape = 'u8[1572864]{0}', space=vmem, size = 0x180000, scoped, tag = 'input window, operand 1, single buffered']
    #allocation3 [shape = 's32[1]{0}', space=sflag, size = 0x4, scoped, tag = 'scoped memory for tpu_custom_call.1']
    #allocation4 [shape = 's32[1]{0}', space=sflag, size = 0x4, scoped, tag = 'scoped memory for tpu_custom_call.1']
    #allocation5 [shape = 'u8[1024]{0}', space=vmem, size = 0x400, scoped, tag = 'input window, operand 2, single buffered']
    #allocation6 [shape = 's32[1]{0}', space=sflag, size = 0x4, scoped, tag = 'scoped memory for tpu_custom_call.1']
    #allocation7 [shape = 'u8[4096]{0}', space=vmem, size = 0x1000, scoped, tag = 'output window, operand 0, single buffered']
    %8 = vsyncpa [#allocation3], 0
    %9 = vsyncpa [#allocation6], 0
    %10 = vsyncpa [#allocation4], 0
    // Predicated region
    $region2: #{tpu_custom_call.1} parent=1 // pred_check
      _
    $region3: #{tpu_custom_call.1} parent=1 // pred_check_branch
      %12 = sbr.rel (0) target = $region5
    $region4: #{tpu_custom_call.1} parent=1 // pred_region
      _
    $region5: #{tpu_custom_call.1} parent=1 // pred_fallthru
      _
    // Predicated region
    $region6: #{tpu_custom_call.1} parent=1 // pred_check
      _
    $region7: #{tpu_custom_call.1} parent=1 // pred_check_branch
      %14 = sbr.rel (0) target = $region9
    $region8: #{tpu_custom_call.1} parent=1 // pred_region
      %s16 = ssub.s32 49152, 49152
      %17 = vsyncadd [#allocation3], %s16
      %s18 = sshll.u32 [#allocation2], 4
      %s19 = int_to_ptr.vmem [resolvable:$true] %s18
      %24 = dma.hbm_to_vmem [thread:$0]  %s1, 49152, %s19, [#allocation3], 128, 128, 8
    $region9: #{tpu_custom_call.1} parent=1 // pred_fallthru
      _
    // Predicated region
    $region10: #{tpu_custom_call.1} parent=1 // pred_check
      _
    $region11: #{tpu_custom_call.1} parent=1 // pred_check_branch
      %26 = sbr.rel (0) target = $region13
    $region12: #{tpu_custom_call.1} parent=1 // pred_region
      %s28 = ssub.s32 32, 32
      %29 = vsyncadd [#allocation6], %s28
      %s31 = sshll.u32 [#allocation5], 4
      %s32 = int_to_ptr.vmem [resolvable:$true] %s31
      %34 = dma.hbm_to_vmem [thread:$0]  %s2, 32, %s32, [#allocation6]
    $region13: #{tpu_custom_call.1} parent=1 // pred_fallthru
      _
    // Predicated region
    $region14: #{tpu_custom_call.1} parent=1 // pred_check
      _
    $region15: #{tpu_custom_call.1} parent=1 // pred_check_branch
      %36 = sbr.rel (0) target = $region17
    $region16: #{tpu_custom_call.1} parent=1 // pred_region
      %37 = dma.done [#allocation3], 49152
    $region17: #{tpu_custom_call.1} parent=1 // pred_fallthru
      _
    // Predicated region
    $region18: #{tpu_custom_call.1} parent=1 // pred_check
      _
    $region19: #{tpu_custom_call.1} parent=1 // pred_check_branch
      %39 = sbr.rel (0) target = $region21
    $region20: #{tpu_custom_call.1} parent=1 // pred_region
      %40 = dma.done [#allocation6], 32
    $region21: #{tpu_custom_call.1} parent=1 // pred_fallthru
      _
    %v41 = vlaneseq
    %v42 = vshrl.u32 %v41, 7
    %v43 = vadd.s32 %v42, 8
    %v44 = vlaneseq
    %v45 = vand.u32 %v44, 127
    %v46 = vadd.s32 %v45, 128
    %vm47 = vcmp.lt.s32.totalorder %v45, 32
    %vm48 = vcmp.lt.s32.totalorder %v46, 32
    %vm49 = vcmp.lt.s32.totalorder %v45, 96
    %vm50 = vcmp.lt.s32.totalorder %v46, 96
    %v51 = vsel %vm49, 13, 12
    %v52 = vsel %vm50, 13, 12
    %v53 = vsel %vm47, 14, %v51
    %v54 = vsel %vm48, 14, %v52
    %vm55 = vcmp.lt.s32.totalorder %v42, %v53
    %vm56 = vcmp.lt.s32.totalorder %v42, %v54
    %vm57 = vcmp.lt.s32.totalorder %v43, %v53
    %vm58 = vcmp.lt.s32.totalorder %v43, %v54
    %v59 = vld [vmem:[#allocation5] sm:$0x3]
    %v60 = vld [vmem:[%s0] sm:$0xff]
    %v61 = vld [vmem:[%s0 + $0x8] sm:$0xff]
    %v62 = vld [vmem:[%s0 + $0x10] sm:$0xff]
    %v63 = vld [vmem:[%s0 + $0x18] sm:$0xff]
    %v64 = vld [vmem:[%s0 + $0x20] sm:$0xff]
    %v65 = vld [vmem:[%s0 + $0x28] sm:$0xff]
    %v66 = vld [vmem:[%s0 + $0x30] sm:$0x11]
    %v67 = vld [vmem:[%s0 + $0x38] sm:$0x11]
    %v68 = vld [vmem:[%s0 + $0x40] sm:$0x11]
    %v69 = vld [vmem:[#allocation2] sm:$0xff]
    %v70 = vld [vmem:[#allocation2 + $0x8] sm:$0xff]
    %v71 = vld [vmem:[#allocation2 + $0x10] sm:$0xff]
    %v72 = vld [vmem:[#allocation2 + $0x18] sm:$0xff]
    %v73 = vld [vmem:[#allocation2 + $0x20] sm:$0xff]
    %v74 = vld [vmem:[#allocation2 + $0x28] sm:$0xff]
    %v75 = vld [vmem:[#allocation2 + $0x30] sm:$0xff]
    %v76 = vld [vmem:[#allocation2 + $0x38] sm:$0xff]
    %v77 = vld [vmem:[#allocation2 + $0x40] sm:$0xff]
    %v78 = vld [vmem:[#allocation2 + $0x48] sm:$0xff]
    %v79 = vld [vmem:[#allocation2 + $0x50] sm:$0xff]
    %v80 = vld [vmem:[#allocation2 + $0x58] sm:$0xff]
    %v81 = vld [vmem:[#allocation2 + $0x60] sm:$0xff]
    %v82 = vld [vmem:[#allocation2 + $0x68] sm:$0xff]
    %v83 = vld [vmem:[#allocation2 + $0x70] sm:$0xff]
    %v84 = vld [vmem:[#allocation2 + $0x78] sm:$0xff]
    %v85 = vld [vmem:[#allocation2 + $0x80] sm:$0xff]
    %v86 = vld [vmem:[#allocation2 + $0x88] sm:$0xff]
    %v87 = vld [vmem:[#allocation2 + $0x90] sm:$0xff]
    %v88 = vld [vmem:[#allocation2 + $0x98] sm:$0xff]
    %v89 = vld [vmem:[#allocation2 + $0xa0] sm:$0xff]
    %v90 = vld [vmem:[#allocation2 + $0xa8] sm:$0xff]
    %v91 = vld [vmem:[#allocation2 + $0xb0] sm:$0xff]
    %v92 = vld [vmem:[#allocation2 + $0xb8] sm:$0xff]
    %v93 = vld [vmem:[#allocation2 + $0xc0] sm:$0xff]
    %v94 = vld [vmem:[#allocation2 + $0xc8] sm:$0xff]
    %v95 = vld [vmem:[#allocation2 + $0xd0] sm:$0xff]
    %v96 = vld [vmem:[#allocation2 + $0xd8] sm:$0xff]
    %v97 = vld [vmem:[#allocation2 + $0xe0] sm:$0xff]
    %v98 = vld [vmem:[#allocation2 + $0xe8] sm:$0xff]
    %v99 = vld [vmem:[#allocation2 + $0xf0] sm:$0xff]
    %v100 = vld [vmem:[#allocation2 + $0xf8] sm:$0xff]
    %v101 = vld [vmem:[#allocation2 + $0x100] sm:$0xff]
    %v102 = vld [vmem:[#allocation2 + $0x108] sm:$0xff]
    %v103 = vld [vmem:[#allocation2 + $0x110] sm:$0xff]
    %v104 = vld [vmem:[#allocation2 + $0x118] sm:$0xff]
    %v105 = vld [vmem:[#allocation2 + $0x120] sm:$0xff]
    %v106 = vld [vmem:[#allocation2 + $0x128] sm:$0xff]
    %v107 = vld [vmem:[#allocation2 + $0x130] sm:$0xff]
    %v108 = vld [vmem:[#allocation2 + $0x138] sm:$0xff]
    %v109 = vld [vmem:[#allocation2 + $0x140] sm:$0xff]
    %v110 = vld [vmem:[#allocation2 + $0x148] sm:$0xff]
    %v111 = vld [vmem:[#allocation2 + $0x150] sm:$0xff]
    %v112 = vld [vmem:[#allocation2 + $0x158] sm:$0xff]
    %v113 = vld [vmem:[#allocation2 + $0x160] sm:$0xff]
    %v114 = vld [vmem:[#allocation2 + $0x168] sm:$0xff]
    %v115 = vld [vmem:[#allocation2 + $0x170] sm:$0xff]
    %v116 = vld [vmem:[#allocation2 + $0x178] sm:$0xff]
    %v117 = vld [vmem:[#allocation2 + $0x180] sm:$0xff]
    %v118 = vld [vmem:[#allocation2 + $0x188] sm:$0xff]
    %v119 = vld [vmem:[#allocation2 + $0x190] sm:$0xff]
    %v120 = vld [vmem:[#allocation2 + $0x198] sm:$0xff]
    %v121 = vld [vmem:[#allocation2 + $0x1a0] sm:$0xff]
    %v122 = vld [vmem:[#allocation2 + $0x1a8] sm:$0xff]
    %v123 = vld [vmem:[#allocation2 + $0x1b0] sm:$0xff]
    %v124 = vld [vmem:[#allocation2 + $0x1b8] sm:$0xff]
    %v125 = vld [vmem:[#allocation2 + $0x1c0] sm:$0xff]
    %v126 = vld [vmem:[#allocation2 + $0x1c8] sm:$0xff]
    %v127 = vld [vmem:[#allocation2 + $0x1d0] sm:$0xff]
    %v128 = vld [vmem:[#allocation2 + $0x1d8] sm:$0xff]
    %v129 = vld [vmem:[#allocation2 + $0x1e0] sm:$0xff]
    %v130 = vld [vmem:[#allocation2 + $0x1e8] sm:$0xff]
    %v131 = vld [vmem:[#allocation2 + $0x1f0] sm:$0xff]
    %v132 = vld [vmem:[#allocation2 + $0x1f8] sm:$0xff]
    %v133 = vld [vmem:[#allocation2 + $0x200] sm:$0xff]
    %v134 = vld [vmem:[#allocation2 + $0x208] sm:$0xff]
    %v135 = vld [vmem:[#allocation2 + $0x210] sm:$0xff]
    %v136 = vld [vmem:[#allocation2 + $0x218] sm:$0xff]
    %v137 = vld [vmem:[#allocation2 + $0x220] sm:$0xff]
    %v138 = vld [vmem:[#allocation2 + $0x228] sm:$0xff]
    %v139 = vld [vmem:[#allocation2 + $0x230] sm:$0xff]
    %v140 = vld [vmem:[#allocation2 + $0x238] sm:$0xff]
    %v141 = vld [vmem:[#allocation2 + $0x240] sm:$0xff]
    %v142 = vld [vmem:[#allocation2 + $0x248] sm:$0xff]
    %v143 = vld [vmem:[#allocation2 + $0x250] sm:$0xff]
    %v144 = vld [vmem:[#allocation2 + $0x258] sm:$0xff]
    %v145 = vld [vmem:[#allocation2 + $0x260] sm:$0xff]
    %v146 = vld [vmem:[#allocation2 + $0x268] sm:$0xff]
    %v147 = vld [vmem:[#allocation2 + $0x270] sm:$0xff]
    %v148 = vld [vmem:[#allocation2 + $0x278] sm:$0xff]
    %v149 = vld [vmem:[#allocation2 + $0x280] sm:$0xff]
    %v150 = vld [vmem:[#allocation2 + $0x288] sm:$0xff]
    %v151 = vld [vmem:[#allocation2 + $0x290] sm:$0xff]
    %v152 = vld [vmem:[#allocation2 + $0x298] sm:$0xff]
    %v153 = vld [vmem:[#allocation2 + $0x2a0] sm:$0xff]
    %v154 = vld [vmem:[#allocation2 + $0x2a8] sm:$0xff]
    %v155 = vld [vmem:[#allocation2 + $0x2b0] sm:$0xff]
    %v156 = vld [vmem:[#allocation2 + $0x2b8] sm:$0xff]
    %v157 = vld [vmem:[#allocation2 + $0x2c0] sm:$0xff]
    %v158 = vld [vmem:[#allocation2 + $0x2c8] sm:$0xff]
    %v159 = vld [vmem:[#allocation2 + $0x2d0] sm:$0xff]
    %v160 = vld [vmem:[#allocation2 + $0x2d8] sm:$0xff]
    %v161 = vld [vmem:[#allocation2 + $0x2e0] sm:$0xff]
    %v162 = vld [vmem:[#allocation2 + $0x2e8] sm:$0xff]
    %v163 = vld [vmem:[#allocation2 + $0x2f0] sm:$0xff]
    %v164 = vld [vmem:[#allocation2 + $0x2f8] sm:$0xff]
    %s165 = scalar_lea.vmem [#allocation2], 768
    %v166 = vld [vmem:[%s165] sm:$0xff]
    %v167 = vld [vmem:[%s165 + $0x8] sm:$0xff]
    %v168 = vld [vmem:[%s165 + $0x10] sm:$0xff]
    %v169 = vld [vmem:[%s165 + $0x18] sm:$0xff]
    %v170 = vld [vmem:[%s165 + $0x20] sm:$0xff]
    %v171 = vld [vmem:[%s165 + $0x28] sm:$0xff]
    %v172 = vld [vmem:[%s165 + $0x30] sm:$0xff]
    %v173 = vld [vmem:[%s165 + $0x38] sm:$0xff]
    %v174 = vld [vmem:[%s165 + $0x40] sm:$0xff]
    %v175 = vld [vmem:[%s165 + $0x48] sm:$0xff]
    %v176 = vld [vmem:[%s165 + $0x50] sm:$0xff]
    %v177 = vld [vmem:[%s165 + $0x58] sm:$0xff]
    %v178 = vld [vmem:[%s165 + $0x60] sm:$0xff]
    %v179 = vld [vmem:[%s165 + $0x68] sm:$0xff]
    %v180 = vld [vmem:[%s165 + $0x70] sm:$0xff]
    %v181 = vld [vmem:[%s165 + $0x78] sm:$0xff]
    %v182 = vld [vmem:[%s165 + $0x80] sm:$0xff]
    %v183 = vld [vmem:[%s165 + $0x88] sm:$0xff]
    %v184 = vld [vmem:[%s165 + $0x90] sm:$0xff]
    %v185 = vld [vmem:[%s165 + $0x98] sm:$0xff]
    %v186 = vld [vmem:[%s165 + $0xa0] sm:$0xff]
    %v187 = vld [vmem:[%s165 + $0xa8] sm:$0xff]
    %v188 = vld [vmem:[%s165 + $0xb0] sm:$0xff]
    %v189 = vld [vmem:[%s165 + $0xb8] sm:$0xff]
    %v190 = vld [vmem:[%s165 + $0xc0] sm:$0xff]
    %v191 = vld [vmem:[%s165 + $0xc8] sm:$0xff]
    %v192 = vld [vmem:[%s165 + $0xd0] sm:$0xff]
    %v193 = vld [vmem:[%s165 + $0xd8] sm:$0xff]
    %v194 = vld [vmem:[%s165 + $0xe0] sm:$0xff]
    %v195 = vld [vmem:[%s165 + $0xe8] sm:$0xff]
    %v196 = vld [vmem:[%s165 + $0xf0] sm:$0xff]
    %v197 = vld [vmem:[%s165 + $0xf8] sm:$0xff]
    %v198 = vld [vmem:[%s165 + $0x100] sm:$0xff]
    %v199 = vld [vmem:[%s165 + $0x108] sm:$0xff]
    %v200 = vld [vmem:[%s165 + $0x110] sm:$0xff]
    %v201 = vld [vmem:[%s165 + $0x118] sm:$0xff]
    %v202 = vld [vmem:[%s165 + $0x120] sm:$0xff]
    %v203 = vld [vmem:[%s165 + $0x128] sm:$0xff]
    %v204 = vld [vmem:[%s165 + $0x130] sm:$0xff]
    %v205 = vld [vmem:[%s165 + $0x138] sm:$0xff]
    %v206 = vld [vmem:[%s165 + $0x140] sm:$0xff]
    %v207 = vld [vmem:[%s165 + $0x148] sm:$0xff]
    %v208 = vld [vmem:[%s165 + $0x150] sm:$0xff]
    %v209 = vld [vmem:[%s165 + $0x158] sm:$0xff]
    %v210 = vld [vmem:[%s165 + $0x160] sm:$0xff]
    %v211 = vld [vmem:[%s165 + $0x168] sm:$0xff]
    %v212 = vld [vmem:[%s165 + $0x170] sm:$0xff]
    %v213 = vld [vmem:[%s165 + $0x178] sm:$0xff]
    %v214 = vld [vmem:[%s165 + $0x180] sm:$0xff]
    %v215 = vld [vmem:[%s165 + $0x188] sm:$0xff]
    %v216 = vld [vmem:[%s165 + $0x190] sm:$0xff]
    %v217 = vld [vmem:[%s165 + $0x198] sm:$0xff]
    %v218 = vld [vmem:[%s165 + $0x1a0] sm:$0xff]
    %v219 = vld [vmem:[%s165 + $0x1a8] sm:$0xff]
    %v220 = vld [vmem:[%s165 + $0x1b0] sm:$0xff]
    %v221 = vld [vmem:[%s165 + $0x1b8] sm:$0xff]
    %v222 = vld [vmem:[%s165 + $0x1c0] sm:$0xff]
    %v223 = vld [vmem:[%s165 + $0x1c8] sm:$0xff]
    %v224 = vld [vmem:[%s165 + $0x1d0] sm:$0xff]
    %v225 = vld [vmem:[%s165 + $0x1d8] sm:$0xff]
    %v226 = vld [vmem:[%s165 + $0x1e0] sm:$0xff]
    %v227 = vld [vmem:[%s165 + $0x1e8] sm:$0xff]
    %v228 = vld [vmem:[%s165 + $0x1f0] sm:$0xff]
    %v229 = vld [vmem:[%s165 + $0x1f8] sm:$0xff]
    %v230 = vld [vmem:[%s165 + $0x200] sm:$0xff]
    %v231 = vld [vmem:[%s165 + $0x208] sm:$0xff]
    %v232 = vld [vmem:[%s165 + $0x210] sm:$0xff]
    %v233 = vld [vmem:[%s165 + $0x218] sm:$0xff]
    %v234 = vld [vmem:[%s165 + $0x220] sm:$0xff]
    %v235 = vld [vmem:[%s165 + $0x228] sm:$0xff]
    %v236 = vld [vmem:[%s165 + $0x230] sm:$0xff]
    %v237 = vld [vmem:[%s165 + $0x238] sm:$0xff]
    %v238 = vld [vmem:[%s165 + $0x240] sm:$0xff]
    %v239 = vld [vmem:[%s165 + $0x248] sm:$0xff]
    %v240 = vld [vmem:[%s165 + $0x250] sm:$0xff]
    %v241 = vld [vmem:[%s165 + $0x258] sm:$0xff]
    %v242 = vld [vmem:[%s165 + $0x260] sm:$0xff]
    %v243 = vld [vmem:[%s165 + $0x268] sm:$0xff]
    %v244 = vld [vmem:[%s165 + $0x270] sm:$0xff]
    %v245 = vld [vmem:[%s165 + $0x278] sm:$0xff]
    %v246 = vld [vmem:[%s165 + $0x280] sm:$0xff]
    %v247 = vld [vmem:[%s165 + $0x288] sm:$0xff]
    %v248 = vld [vmem:[%s165 + $0x290] sm:$0xff]
    %v249 = vld [vmem:[%s165 + $0x298] sm:$0xff]
    %v250 = vld [vmem:[%s165 + $0x2a0] sm:$0xff]
    %v251 = vld [vmem:[%s165 + $0x2a8] sm:$0xff]
    %v252 = vld [vmem:[%s165 + $0x2b0] sm:$0xff]
    %v253 = vld [vmem:[%s165 + $0x2b8] sm:$0xff]
    %v254 = vld [vmem:[%s165 + $0x2c0] sm:$0xff]
    %v255 = vld [vmem:[%s165 + $0x2c8] sm:$0xff]
    %v256 = vld [vmem:[%s165 + $0x2d0] sm:$0xff]
    %v257 = vld [vmem:[%s165 + $0x2d8] sm:$0xff]
    %v258 = vld [vmem:[%s165 + $0x2e0] sm:$0xff]
    %v259 = vld [vmem:[%s165 + $0x2e8] sm:$0xff]
    %v260 = vld [vmem:[%s165 + $0x2f0] sm:$0xff]
    %v261 = vld [vmem:[%s165 + $0x2f8] sm:$0xff]
    %v268 = vunpack.c.l.b16 %v60
    %v269 = vunpack.c.h.b16 %v60
    %v270 = vunpack.c.l.b16 %v61
    %v271 = vunpack.c.h.b16 %v61
    %v272 = vunpack.c.l.b16 %v62
    %v273 = vunpack.c.h.b16 %v62
    %v274 = vunpack.c.l.b16 %v63
    %v275 = vunpack.c.h.b16 %v63
    %v276 = vunpack.c.l.b16 %v64
    %v277 = vunpack.c.h.b16 %v64
    %v278 = vunpack.c.l.b16 %v65
    %v279 = vunpack.c.h.b16 %v65
    %v280 = vpack.c.b16 %v274, %v268
    %v281 = vpack.c.b16 %v275, %v269
    %v282 = vpack.c.b16 %v276, %v270
    %v283 = vpack.c.b16 %v277, %v271
    %v284 = vpack.c.b16 %v278, %v272
    %v285 = vpack.c.b16 %v279, %v273
    %v287 = vshrl.u32 %v280, 16
    %v289 = vshll.u32 %v280, 16
    %v291 = vrot.slane %v289, 1
    %v292 = vor.u32 %v287, %v291
    %v294 = vshrl.u32 %v281, 16
    %v296 = vshll.u32 %v281, 16
    %v298 = vrot.slane %v296, 1
    %v299 = vor.u32 %v294, %v298
    %v301 = vshrl.u32 %v282, 16
    %v303 = vshll.u32 %v282, 16
    %v305 = vrot.slane %v303, 1
    %v306 = vor.u32 %v301, %v305
    %v308 = vshrl.u32 %v283, 16
    %v310 = vshll.u32 %v283, 16
    %v312 = vrot.slane %v310, 1
    %v313 = vor.u32 %v308, %v312
    %v315 = vshrl.u32 %v284, 16
    %v317 = vshll.u32 %v284, 16
    %v319 = vrot.slane %v317, 1
    %v320 = vor.u32 %v315, %v319
    %v322 = vshrl.u32 %v285, 16
    %v324 = vshll.u32 %v285, 16
    %v326 = vrot.slane %v324, 1
    %v327 = vor.u32 %v322, %v326
    %v430 = vunpack.c.l.b16 %v166
    %v431 = vunpack.c.h.b16 %v166
    %v432 = vunpack.c.l.b16 %v167
    %v433 = vunpack.c.h.b16 %v167
    %v434 = vunpack.c.l.b16 %v168
    %v435 = vunpack.c.h.b16 %v168
    %v436 = vunpack.c.l.b16 %v169
    %v437 = vunpack.c.h.b16 %v169
    %v438 = vunpack.c.l.b16 %v170
    %v439 = vunpack.c.h.b16 %v170
    %v440 = vunpack.c.l.b16 %v171
    %v441 = vunpack.c.h.b16 %v171
    %v442 = vunpack.c.l.b16 %v172
    %v443 = vunpack.c.h.b16 %v172
    %v444 = vunpack.c.l.b16 %v173
    %v445 = vunpack.c.h.b16 %v173
    %v446 = vunpack.c.l.b16 %v174
    %v447 = vunpack.c.h.b16 %v174
    %v448 = vunpack.c.l.b16 %v175
    %v449 = vunpack.c.h.b16 %v175
    %v450 = vunpack.c.l.b16 %v176
    %v451 = vunpack.c.h.b16 %v176
    %v452 = vunpack.c.l.b16 %v177
    %v453 = vunpack.c.h.b16 %v177
    %v454 = vunpack.c.l.b16 %v178
    %v455 = vunpack.c.h.b16 %v178
    %v456 = vunpack.c.l.b16 %v179
    %v457 = vunpack.c.h.b16 %v179
    %v458 = vunpack.c.l.b16 %v180
    %v459 = vunpack.c.h.b16 %v180
    %v460 = vunpack.c.l.b16 %v181
    %v461 = vunpack.c.h.b16 %v181
    %v462 = vunpack.c.l.b16 %v182
    %v463 = vunpack.c.h.b16 %v182
    %v464 = vunpack.c.l.b16 %v183
    %v465 = vunpack.c.h.b16 %v183
    %v466 = vunpack.c.l.b16 %v184
    %v467 = vunpack.c.h.b16 %v184
    %v468 = vunpack.c.l.b16 %v185
    %v469 = vunpack.c.h.b16 %v185
    %v470 = vunpack.c.l.b16 %v186
    %v471 = vunpack.c.h.b16 %v186
    %v472 = vunpack.c.l.b16 %v187
    %v473 = vunpack.c.h.b16 %v187
    %v474 = vunpack.c.l.b16 %v188
    %v475 = vunpack.c.h.b16 %v188
    %v476 = vunpack.c.l.b16 %v189
    %v477 = vunpack.c.h.b16 %v189
    %v478 = vunpack.c.l.b16 %v190
    %v479 = vunpack.c.h.b16 %v190
    %v480 = vunpack.c.l.b16 %v191
    %v481 = vunpack.c.h.b16 %v191
    %v482 = vunpack.c.l.b16 %v192
    %v483 = vunpack.c.h.b16 %v192
    %v484 = vunpack.c.l.b16 %v193
    %v485 = vunpack.c.h.b16 %v193
    %v486 = vunpack.c.l.b16 %v194
    %v487 = vunpack.c.h.b16 %v194
    %v488 = vunpack.c.l.b16 %v195
    %v489 = vunpack.c.h.b16 %v195
    %v490 = vunpack.c.l.b16 %v196
    %v491 = vunpack.c.h.b16 %v196
    %v492 = vunpack.c.l.b16 %v197
    %v493 = vunpack.c.h.b16 %v197
    %v494 = vunpack.c.l.b16 %v198
    %v495 = vunpack.c.h.b16 %v198
    %v496 = vunpack.c.l.b16 %v199
    %v497 = vunpack.c.h.b16 %v199
    %v498 = vunpack.c.l.b16 %v200
    %v499 = vunpack.c.h.b16 %v200
    %v500 = vunpack.c.l.b16 %v201
    %v501 = vunpack.c.h.b16 %v201
    %v502 = vunpack.c.l.b16 %v202
    %v503 = vunpack.c.h.b16 %v202
    %v504 = vunpack.c.l.b16 %v203
    %v505 = vunpack.c.h.b16 %v203
    %v506 = vunpack.c.l.b16 %v204
    %v507 = vunpack.c.h.b16 %v204
    %v508 = vunpack.c.l.b16 %v205
    %v509 = vunpack.c.h.b16 %v205
    %v510 = vunpack.c.l.b16 %v206
    %v511 = vunpack.c.h.b16 %v206
    %v512 = vunpack.c.l.b16 %v207
    %v513 = vunpack.c.h.b16 %v207
    %v514 = vunpack.c.l.b16 %v208
    %v515 = vunpack.c.h.b16 %v208
    %v516 = vunpack.c.l.b16 %v209
    %v517 = vunpack.c.h.b16 %v209
    %v518 = vunpack.c.l.b16 %v210
    %v519 = vunpack.c.h.b16 %v210
    %v520 = vunpack.c.l.b16 %v211
    %v521 = vunpack.c.h.b16 %v211
    %v522 = vunpack.c.l.b16 %v212
    %v523 = vunpack.c.h.b16 %v212
    %v524 = vunpack.c.l.b16 %v213
    %v525 = vunpack.c.h.b16 %v213
    %v526 = vunpack.c.l.b16 %v214
    %v527 = vunpack.c.h.b16 %v214
    %v528 = vunpack.c.l.b16 %v215
    %v529 = vunpack.c.h.b16 %v215
    %v530 = vunpack.c.l.b16 %v216
    %v531 = vunpack.c.h.b16 %v216
    %v532 = vunpack.c.l.b16 %v217
    %v533 = vunpack.c.h.b16 %v217
    %v534 = vunpack.c.l.b16 %v218
    %v535 = vunpack.c.h.b16 %v218
    %v536 = vunpack.c.l.b16 %v219
    %v537 = vunpack.c.h.b16 %v219
    %v538 = vunpack.c.l.b16 %v220
    %v539 = vunpack.c.h.b16 %v220
    %v540 = vunpack.c.l.b16 %v221
    %v541 = vunpack.c.h.b16 %v221
    %v542 = vunpack.c.l.b16 %v222
    %v543 = vunpack.c.h.b16 %v222
    %v544 = vunpack.c.l.b16 %v223
    %v545 = vunpack.c.h.b16 %v223
    %v546 = vunpack.c.l.b16 %v224
    %v547 = vunpack.c.h.b16 %v224
    %v548 = vunpack.c.l.b16 %v225
    %v549 = vunpack.c.h.b16 %v225
    %v550 = vunpack.c.l.b16 %v226
    %v551 = vunpack.c.h.b16 %v226
    %v552 = vunpack.c.l.b16 %v227
    %v553 = vunpack.c.h.b16 %v227
    %v554 = vunpack.c.l.b16 %v228
    %v555 = vunpack.c.h.b16 %v228
    %v556 = vunpack.c.l.b16 %v229
    %v557 = vunpack.c.h.b16 %v229
    %v558 = vunpack.c.l.b16 %v230
    %v559 = vunpack.c.h.b16 %v230
    %v560 = vunpack.c.l.b16 %v231
    %v561 = vunpack.c.h.b16 %v231
    %v562 = vunpack.c.l.b16 %v232
    %v563 = vunpack.c.h.b16 %v232
    %v564 = vunpack.c.l.b16 %v233
    %v565 = vunpack.c.h.b16 %v233
    %v566 = vunpack.c.l.b16 %v234
    %v567 = vunpack.c.h.b16 %v234
    %v568 = vunpack.c.l.b16 %v235
    %v569 = vunpack.c.h.b16 %v235
    %v570 = vunpack.c.l.b16 %v236
    %v571 = vunpack.c.h.b16 %v236
    %v572 = vunpack.c.l.b16 %v237
    %v573 = vunpack.c.h.b16 %v237
    %v574 = vunpack.c.l.b16 %v238
    %v575 = vunpack.c.h.b16 %v238
    %v576 = vunpack.c.l.b16 %v239
    %v577 = vunpack.c.h.b16 %v239
    %v578 = vunpack.c.l.b16 %v240
    %v579 = vunpack.c.h.b16 %v240
    %v580 = vunpack.c.l.b16 %v241
    %v581 = vunpack.c.h.b16 %v241
    %v582 = vunpack.c.l.b16 %v242
    %v583 = vunpack.c.h.b16 %v242
    %v584 = vunpack.c.l.b16 %v243
    %v585 = vunpack.c.h.b16 %v243
    %v586 = vunpack.c.l.b16 %v244
    %v587 = vunpack.c.h.b16 %v244
    %v588 = vunpack.c.l.b16 %v245
    %v589 = vunpack.c.h.b16 %v245
    %v590 = vunpack.c.l.b16 %v246
    %v591 = vunpack.c.h.b16 %v246
    %v592 = vunpack.c.l.b16 %v247
    %v593 = vunpack.c.h.b16 %v247
    %v594 = vunpack.c.l.b16 %v248
    %v595 = vunpack.c.h.b16 %v248
    %v596 = vunpack.c.l.b16 %v249
    %v597 = vunpack.c.h.b16 %v249
    %v598 = vunpack.c.l.b16 %v250
    %v599 = vunpack.c.h.b16 %v250
    %v600 = vunpack.c.l.b16 %v251
    %v601 = vunpack.c.h.b16 %v251
    %v602 = vunpack.c.l.b16 %v252
    %v603 = vunpack.c.h.b16 %v252
    %v604 = vunpack.c.l.b16 %v253
    %v605 = vunpack.c.h.b16 %v253
    %v606 = vunpack.c.l.b16 %v254
    %v607 = vunpack.c.h.b16 %v254
    %v608 = vunpack.c.l.b16 %v255
    %v609 = vunpack.c.h.b16 %v255
    %v610 = vunpack.c.l.b16 %v256
    %v611 = vunpack.c.h.b16 %v256
    %v612 = vunpack.c.l.b16 %v257
    %v613 = vunpack.c.h.b16 %v257
    %v614 = vunpack.c.l.b16 %v258
    %v615 = vunpack.c.h.b16 %v258
    %v616 = vunpack.c.l.b16 %v259
    %v617 = vunpack.c.h.b16 %v259
    %v618 = vunpack.c.l.b16 %v260
    %v619 = vunpack.c.h.b16 %v260
    %v620 = vunpack.c.l.b16 %v261
    %v621 = vunpack.c.h.b16 %v261
    %v622 = vpack.c.b16 %v432, %v430
    %v623 = vpack.c.b16 %v433, %v431
    %v624 = vpack.c.b16 %v436, %v434
    %v625 = vpack.c.b16 %v437, %v435
    %v626 = vpack.c.b16 %v440, %v438
    %v627 = vpack.c.b16 %v441, %v439
    %v628 = vpack.c.b16 %v444, %v442
    %v629 = vpack.c.b16 %v445, %v443
    %v630 = vpack.c.b16 %v448, %v446
    %v631 = vpack.c.b16 %v449, %v447
    %v632 = vpack.c.b16 %v452, %v450
    %v633 = vpack.c.b16 %v453, %v451
    %v634 = vpack.c.b16 %v456, %v454
    %v635 = vpack.c.b16 %v457, %v455
    %v636 = vpack.c.b16 %v460, %v458
    %v637 = vpack.c.b16 %v461, %v459
    %v638 = vpack.c.b16 %v464, %v462
    %v639 = vpack.c.b16 %v465, %v463
    %v640 = vpack.c.b16 %v468, %v466
    %v641 = vpack.c.b16 %v469, %v467
    %v642 = vpack.c.b16 %v472, %v470
    %v643 = vpack.c.b16 %v473, %v471
    %v644 = vpack.c.b16 %v476, %v474
    %v645 = vpack.c.b16 %v477, %v475
    %v646 = vpack.c.b16 %v480, %v478
    %v647 = vpack.c.b16 %v481, %v479
    %v648 = vpack.c.b16 %v484, %v482
    %v649 = vpack.c.b16 %v485, %v483
    %v650 = vpack.c.b16 %v488, %v486
    %v651 = vpack.c.b16 %v489, %v487
    %v652 = vpack.c.b16 %v492, %v490
    %v653 = vpack.c.b16 %v493, %v491
    %v654 = vpack.c.b16 %v496, %v494
    %v655 = vpack.c.b16 %v497, %v495
    %v656 = vpack.c.b16 %v500, %v498
    %v657 = vpack.c.b16 %v501, %v499
    %v658 = vpack.c.b16 %v504, %v502
    %v659 = vpack.c.b16 %v505, %v503
    %v660 = vpack.c.b16 %v508, %v506
    %v661 = vpack.c.b16 %v509, %v507
    %v662 = vpack.c.b16 %v512, %v510
    %v663 = vpack.c.b16 %v513, %v511
    %v664 = vpack.c.b16 %v516, %v514
    %v665 = vpack.c.b16 %v517, %v515
    %v666 = vpack.c.b16 %v520, %v518
    %v667 = vpack.c.b16 %v521, %v519
    %v668 = vpack.c.b16 %v524, %v522
    %v669 = vpack.c.b16 %v525, %v523
    %v670 = vpack.c.b16 %v528, %v526
    %v671 = vpack.c.b16 %v529, %v527
    %v672 = vpack.c.b16 %v532, %v530
    %v673 = vpack.c.b16 %v533, %v531
    %v674 = vpack.c.b16 %v536, %v534
    %v675 = vpack.c.b16 %v537, %v535
    %v676 = vpack.c.b16 %v540, %v538
    %v677 = vpack.c.b16 %v541, %v539
    %v678 = vpack.c.b16 %v544, %v542
    %v679 = vpack.c.b16 %v545, %v543
    %v680 = vpack.c.b16 %v548, %v546
    %v681 = vpack.c.b16 %v549, %v547
    %v682 = vpack.c.b16 %v552, %v550
    %v683 = vpack.c.b16 %v553, %v551
    %v684 = vpack.c.b16 %v556, %v554
    %v685 = vpack.c.b16 %v557, %v555
    %v686 = vpack.c.b16 %v560, %v558
    %v687 = vpack.c.b16 %v561, %v559
    %v688 = vpack.c.b16 %v564, %v562
    %v689 = vpack.c.b16 %v565, %v563
    %v690 = vpack.c.b16 %v568, %v566
    %v691 = vpack.c.b16 %v569, %v567
    %v692 = vpack.c.b16 %v572, %v570
    %v693 = vpack.c.b16 %v573, %v571
    %v694 = vpack.c.b16 %v576, %v574
    %v695 = vpack.c.b16 %v577, %v575
    %v696 = vpack.c.b16 %v580, %v578
    %v697 = vpack.c.b16 %v581, %v579
    %v698 = vpack.c.b16 %v584, %v582
    %v699 = vpack.c.b16 %v585, %v583
    %v700 = vpack.c.b16 %v588, %v586
    %v701 = vpack.c.b16 %v589, %v587
    %v702 = vpack.c.b16 %v592, %v590
    %v703 = vpack.c.b16 %v593, %v591
    %v704 = vpack.c.b16 %v596, %v594
    %v705 = vpack.c.b16 %v597, %v595
    %v706 = vpack.c.b16 %v600, %v598
    %v707 = vpack.c.b16 %v601, %v599
    %v708 = vpack.c.b16 %v604, %v602
    %v709 = vpack.c.b16 %v605, %v603
    %v710 = vpack.c.b16 %v608, %v606
    %v711 = vpack.c.b16 %v609, %v607
    %v712 = vpack.c.b16 %v612, %v610
    %v713 = vpack.c.b16 %v613, %v611
    %v714 = vpack.c.b16 %v616, %v614
    %v715 = vpack.c.b16 %v617, %v615
    %v716 = vpack.c.b16 %v620, %v618
    %v717 = vpack.c.b16 %v621, %v619
    %814 = vmatprep.subr.bf16.mxu0 %v637
    %815 = vmatpush1.bf16.msra.mxu0 %v636
    %816 = vmatprep.subr.bf16.mxu0 %v635
    %817 = vmatpush1.bf16.msra.mxu0 %v634
    %818 = vmatprep.subr.bf16.mxu0 %v633
    %819 = vmatpush1.bf16.msra.mxu0 %v632
    %820 = vmatprep.subr.bf16.mxu0 %v631
    %821 = vmatpush1.bf16.msra.mxu0 %v630
    %822 = vmatprep.subr.bf16.mxu0 %v629
    %823 = vmatpush1.bf16.msra.mxu0 %v628
    %824 = vmatprep.subr.bf16.mxu0 %v627
    %825 = vmatpush1.bf16.msra.mxu0 %v626
    %826 = vmatprep.subr.bf16.mxu0 %v625
    %827 = vmatpush1.bf16.msra.mxu0 %v624
    %828 = vmatprep.subr.bf16.mxu0 %v623
    %829 = vmatpush1.bf16.msra.mxu0 %v622
    %830 = vmatprep.subr.bf16.mxu0 %v653
    %831 = vmatpush2.bf16.msra.mxu0 %v652
    %832 = vmatprep.subr.bf16.mxu0 %v651
    %833 = vmatpush2.bf16.msra.mxu0 %v650
    %834 = vmatprep.subr.bf16.mxu0 %v649
    %835 = vmatpush2.bf16.msra.mxu0 %v648
    %836 = vmatprep.subr.bf16.mxu0 %v647
    %837 = vmatpush2.bf16.msra.mxu0 %v646
    %838 = vmatprep.subr.bf16.mxu0 %v645
    %839 = vmatpush2.bf16.msra.mxu0 %v644
    %840 = vmatprep.subr.bf16.mxu0 %v643
    %841 = vmatpush2.bf16.msra.mxu0 %v642
    %842 = vmatprep.subr.bf16.mxu0 %v641
    %843 = vmatpush2.bf16.msra.mxu0 %v640
    %844 = vmatprep.subr.bf16.mxu0 %v639
    %845 = vmatpush2.bf16.msra.mxu0 %v638
    %846 = vmatprep.mubr.bf16.mxu0 %v299
    %847 = vmatmul.mubr.bf16.gmra.mxu0 %v292
    %v848 = vpop.f32.mrf.mxu0
    %v849 = vadd.f32 0.0, %v848
    %v850 = vpop.f32.mrf.mxu0
    %v851 = vadd.f32 0.0, %v850
    %v852 = vpop.f32.mrf.mxu0
    %v853 = vadd.f32 0.0, %v852
    %v854 = vpop.f32.mrf.mxu0
    %v855 = vadd.f32 0.0, %v854
    %856 = vdwg.mxu0
    %857 = vmatprep.subr.bf16.mxu0 %v669
    %858 = vmatpush1.bf16.msra.mxu0 %v668
    %859 = vmatprep.subr.bf16.mxu0 %v667
    %860 = vmatpush1.bf16.msra.mxu0 %v666
    %861 = vmatprep.subr.bf16.mxu0 %v665
    %862 = vmatpush1.bf16.msra.mxu0 %v664
    %863 = vmatprep.subr.bf16.mxu0 %v663
    %864 = vmatpush1.bf16.msra.mxu0 %v662
    %865 = vmatprep.subr.bf16.mxu0 %v661
    %866 = vmatpush1.bf16.msra.mxu0 %v660
    %867 = vmatprep.subr.bf16.mxu0 %v659
    %868 = vmatpush1.bf16.msra.mxu0 %v658
    %869 = vmatprep.subr.bf16.mxu0 %v657
    %870 = vmatpush1.bf16.msra.mxu0 %v656
    %871 = vmatprep.subr.bf16.mxu0 %v655
    %872 = vmatpush1.bf16.msra.mxu0 %v654
    %873 = vmatprep.subr.bf16.mxu0 %v685
    %874 = vmatpush2.bf16.msra.mxu0 %v684
    %875 = vmatprep.subr.bf16.mxu0 %v683
    %876 = vmatpush2.bf16.msra.mxu0 %v682
    %877 = vmatprep.subr.bf16.mxu0 %v681
    %878 = vmatpush2.bf16.msra.mxu0 %v680
    %879 = vmatprep.subr.bf16.mxu0 %v679
    %880 = vmatpush2.bf16.msra.mxu0 %v678
    %881 = vmatprep.subr.bf16.mxu0 %v677
    %882 = vmatpush2.bf16.msra.mxu0 %v676
    %883 = vmatprep.subr.bf16.mxu0 %v675
    %884 = vmatpush2.bf16.msra.mxu0 %v674
    %885 = vmatprep.subr.bf16.mxu0 %v673
    %886 = vmatpush2.bf16.msra.mxu0 %v672
    %887 = vmatprep.subr.bf16.mxu0 %v671
    %888 = vmatpush2.bf16.msra.mxu0 %v670
    %889 = vmatprep.mubr.bf16.mxu0 %v313
    %890 = vmatmul.mubr.bf16.gmra.mxu0 %v306
    %v891 = vpop.f32.mrf.mxu0
    %v892 = vadd.f32 %v849, %v891
    %v893 = vpop.f32.mrf.mxu0
    %v894 = vadd.f32 %v851, %v893
    %v895 = vpop.f32.mrf.mxu0
    %v896 = vadd.f32 %v853, %v895
    %v897 = vpop.f32.mrf.mxu0
    %v898 = vadd.f32 %v855, %v897
    %899 = vdwg.mxu0
    %900 = vmatprep.subr.bf16.mxu0 %v701
    %901 = vmatpush1.bf16.msra.mxu0 %v700
    %902 = vmatprep.subr.bf16.mxu0 %v699
    %903 = vmatpush1.bf16.msra.mxu0 %v698
    %904 = vmatprep.subr.bf16.mxu0 %v697
    %905 = vmatpush1.bf16.msra.mxu0 %v696
    %906 = vmatprep.subr.bf16.mxu0 %v695
    %907 = vmatpush1.bf16.msra.mxu0 %v694
    %908 = vmatprep.subr.bf16.mxu0 %v693
    %909 = vmatpush1.bf16.msra.mxu0 %v692
    %910 = vmatprep.subr.bf16.mxu0 %v691
    %911 = vmatpush1.bf16.msra.mxu0 %v690
    %912 = vmatprep.subr.bf16.mxu0 %v689
    %913 = vmatpush1.bf16.msra.mxu0 %v688
    %914 = vmatprep.subr.bf16.mxu0 %v687
    %915 = vmatpush1.bf16.msra.mxu0 %v686
    %916 = vmatprep.subr.bf16.mxu0 %v717
    %917 = vmatpush2.bf16.msra.mxu0 %v716
    %918 = vmatprep.subr.bf16.mxu0 %v715
    %919 = vmatpush2.bf16.msra.mxu0 %v714
    %920 = vmatprep.subr.bf16.mxu0 %v713
    %921 = vmatpush2.bf16.msra.mxu0 %v712
    %922 = vmatprep.subr.bf16.mxu0 %v711
    %923 = vmatpush2.bf16.msra.mxu0 %v710
    %924 = vmatprep.subr.bf16.mxu0 %v709
    %925 = vmatpush2.bf16.msra.mxu0 %v708
    %926 = vmatprep.subr.bf16.mxu0 %v707
    %927 = vmatpush2.bf16.msra.mxu0 %v706
    %928 = vmatprep.subr.bf16.mxu0 %v705
    %929 = vmatpush2.bf16.msra.mxu0 %v704
    %930 = vmatprep.subr.bf16.mxu0 %v703
    %931 = vmatpush2.bf16.msra.mxu0 %v702
    %932 = vmatprep.mubr.bf16.mxu0 %v327
    %933 = vmatmul.mubr.bf16.gmra.mxu0 %v320
    %v934 = vpop.f32.mrf.mxu0
    %v935 = vadd.f32 %v892, %v934
    %v936 = vpop.f32.mrf.mxu0
    %v937 = vadd.f32 %v894, %v936
    %v938 = vpop.f32.mrf.mxu0
    %v939 = vadd.f32 %v896, %v938
    %v940 = vpop.f32.mrf.mxu0
    %v941 = vadd.f32 %v898, %v940
    %942 = vdwg.mxu0
    %v1045 = vunpack.c.l.b16 %v69
    %v1046 = vunpack.c.h.b16 %v69
    %v1047 = vunpack.c.l.b16 %v70
    %v1048 = vunpack.c.h.b16 %v70
    %v1049 = vunpack.c.l.b16 %v71
    %v1050 = vunpack.c.h.b16 %v71
    %v1051 = vunpack.c.l.b16 %v72
    %v1052 = vunpack.c.h.b16 %v72
    %v1053 = vunpack.c.l.b16 %v73
    %v1054 = vunpack.c.h.b16 %v73
    %v1055 = vunpack.c.l.b16 %v74
    %v1056 = vunpack.c.h.b16 %v74
    %v1057 = vunpack.c.l.b16 %v75
    %v1058 = vunpack.c.h.b16 %v75
    %v1059 = vunpack.c.l.b16 %v76
    %v1060 = vunpack.c.h.b16 %v76
    %v1061 = vunpack.c.l.b16 %v77
    %v1062 = vunpack.c.h.b16 %v77
    %v1063 = vunpack.c.l.b16 %v78
    %v1064 = vunpack.c.h.b16 %v78
    %v1065 = vunpack.c.l.b16 %v79
    %v1066 = vunpack.c.h.b16 %v79
    %v1067 = vunpack.c.l.b16 %v80
    %v1068 = vunpack.c.h.b16 %v80
    %v1069 = vunpack.c.l.b16 %v81
    %v1070 = vunpack.c.h.b16 %v81
    %v1071 = vunpack.c.l.b16 %v82
    %v1072 = vunpack.c.h.b16 %v82
    %v1073 = vunpack.c.l.b16 %v83
    %v1074 = vunpack.c.h.b16 %v83
    %v1075 = vunpack.c.l.b16 %v84
    %v1076 = vunpack.c.h.b16 %v84
    %v1077 = vunpack.c.l.b16 %v85
    %v1078 = vunpack.c.h.b16 %v85
    %v1079 = vunpack.c.l.b16 %v86
    %v1080 = vunpack.c.h.b16 %v86
    %v1081 = vunpack.c.l.b16 %v87
    %v1082 = vunpack.c.h.b16 %v87
    %v1083 = vunpack.c.l.b16 %v88
    %v1084 = vunpack.c.h.b16 %v88
    %v1085 = vunpack.c.l.b16 %v89
    %v1086 = vunpack.c.h.b16 %v89
    %v1087 = vunpack.c.l.b16 %v90
    %v1088 = vunpack.c.h.b16 %v90
    %v1089 = vunpack.c.l.b16 %v91
    %v1090 = vunpack.c.h.b16 %v91
    %v1091 = vunpack.c.l.b16 %v92
    %v1092 = vunpack.c.h.b16 %v92
    %v1093 = vunpack.c.l.b16 %v93
    %v1094 = vunpack.c.h.b16 %v93
    %v1095 = vunpack.c.l.b16 %v94
    %v1096 = vunpack.c.h.b16 %v94
    %v1097 = vunpack.c.l.b16 %v95
    %v1098 = vunpack.c.h.b16 %v95
    %v1099 = vunpack.c.l.b16 %v96
    %v1100 = vunpack.c.h.b16 %v96
    %v1101 = vunpack.c.l.b16 %v97
    %v1102 = vunpack.c.h.b16 %v97
    %v1103 = vunpack.c.l.b16 %v98
    %v1104 = vunpack.c.h.b16 %v98
    %v1105 = vunpack.c.l.b16 %v99
    %v1106 = vunpack.c.h.b16 %v99
    %v1107 = vunpack.c.l.b16 %v100
    %v1108 = vunpack.c.h.b16 %v100
    %v1109 = vunpack.c.l.b16 %v101
    %v1110 = vunpack.c.h.b16 %v101
    %v1111 = vunpack.c.l.b16 %v102
    %v1112 = vunpack.c.h.b16 %v102
    %v1113 = vunpack.c.l.b16 %v103
    %v1114 = vunpack.c.h.b16 %v103
    %v1115 = vunpack.c.l.b16 %v104
    %v1116 = vunpack.c.h.b16 %v104
    %v1117 = vunpack.c.l.b16 %v105
    %v1118 = vunpack.c.h.b16 %v105
    %v1119 = vunpack.c.l.b16 %v106
    %v1120 = vunpack.c.h.b16 %v106
    %v1121 = vunpack.c.l.b16 %v107
    %v1122 = vunpack.c.h.b16 %v107
    %v1123 = vunpack.c.l.b16 %v108
    %v1124 = vunpack.c.h.b16 %v108
    %v1125 = vunpack.c.l.b16 %v109
    %v1126 = vunpack.c.h.b16 %v109
    %v1127 = vunpack.c.l.b16 %v110
    %v1128 = vunpack.c.h.b16 %v110
    %v1129 = vunpack.c.l.b16 %v111
    %v1130 = vunpack.c.h.b16 %v111
    %v1131 = vunpack.c.l.b16 %v112
    %v1132 = vunpack.c.h.b16 %v112
    %v1133 = vunpack.c.l.b16 %v113
    %v1134 = vunpack.c.h.b16 %v113
    %v1135 = vunpack.c.l.b16 %v114
    %v1136 = vunpack.c.h.b16 %v114
    %v1137 = vunpack.c.l.b16 %v115
    %v1138 = vunpack.c.h.b16 %v115
    %v1139 = vunpack.c.l.b16 %v116
    %v1140 = vunpack.c.h.b16 %v116
    %v1141 = vunpack.c.l.b16 %v117
    %v1142 = vunpack.c.h.b16 %v117
    %v1143 = vunpack.c.l.b16 %v118
    %v1144 = vunpack.c.h.b16 %v118
    %v1145 = vunpack.c.l.b16 %v119
    %v1146 = vunpack.c.h.b16 %v119
    %v1147 = vunpack.c.l.b16 %v120
    %v1148 = vunpack.c.h.b16 %v120
    %v1149 = vunpack.c.l.b16 %v121
    %v1150 = vunpack.c.h.b16 %v121
    %v1151 = vunpack.c.l.b16 %v122
    %v1152 = vunpack.c.h.b16 %v122
    %v1153 = vunpack.c.l.b16 %v123
    %v1154 = vunpack.c.h.b16 %v123
    %v1155 = vunpack.c.l.b16 %v124
    %v1156 = vunpack.c.h.b16 %v124
    %v1157 = vunpack.c.l.b16 %v125
    %v1158 = vunpack.c.h.b16 %v125
    %v1159 = vunpack.c.l.b16 %v126
    %v1160 = vunpack.c.h.b16 %v126
    %v1161 = vunpack.c.l.b16 %v127
    %v1162 = vunpack.c.h.b16 %v127
    %v1163 = vunpack.c.l.b16 %v128
    %v1164 = vunpack.c.h.b16 %v128
    %v1165 = vunpack.c.l.b16 %v129
    %v1166 = vunpack.c.h.b16 %v129
    %v1167 = vunpack.c.l.b16 %v130
    %v1168 = vunpack.c.h.b16 %v130
    %v1169 = vunpack.c.l.b16 %v131
    %v1170 = vunpack.c.h.b16 %v131
    %v1171 = vunpack.c.l.b16 %v132
    %v1172 = vunpack.c.h.b16 %v132
    %v1173 = vunpack.c.l.b16 %v133
    %v1174 = vunpack.c.h.b16 %v133
    %v1175 = vunpack.c.l.b16 %v134
    %v1176 = vunpack.c.h.b16 %v134
    %v1177 = vunpack.c.l.b16 %v135
    %v1178 = vunpack.c.h.b16 %v135
    %v1179 = vunpack.c.l.b16 %v136
    %v1180 = vunpack.c.h.b16 %v136
    %v1181 = vunpack.c.l.b16 %v137
    %v1182 = vunpack.c.h.b16 %v137
    %v1183 = vunpack.c.l.b16 %v138
    %v1184 = vunpack.c.h.b16 %v138
    %v1185 = vunpack.c.l.b16 %v139
    %v1186 = vunpack.c.h.b16 %v139
    %v1187 = vunpack.c.l.b16 %v140
    %v1188 = vunpack.c.h.b16 %v140
    %v1189 = vunpack.c.l.b16 %v141
    %v1190 = vunpack.c.h.b16 %v141
    %v1191 = vunpack.c.l.b16 %v142
    %v1192 = vunpack.c.h.b16 %v142
    %v1193 = vunpack.c.l.b16 %v143
    %v1194 = vunpack.c.h.b16 %v143
    %v1195 = vunpack.c.l.b16 %v144
    %v1196 = vunpack.c.h.b16 %v144
    %v1197 = vunpack.c.l.b16 %v145
    %v1198 = vunpack.c.h.b16 %v145
    %v1199 = vunpack.c.l.b16 %v146
    %v1200 = vunpack.c.h.b16 %v146
    %v1201 = vunpack.c.l.b16 %v147
    %v1202 = vunpack.c.h.b16 %v147
    %v1203 = vunpack.c.l.b16 %v148
    %v1204 = vunpack.c.h.b16 %v148
    %v1205 = vunpack.c.l.b16 %v149
    %v1206 = vunpack.c.h.b16 %v149
    %v1207 = vunpack.c.l.b16 %v150
    %v1208 = vunpack.c.h.b16 %v150
    %v1209 = vunpack.c.l.b16 %v151
    %v1210 = vunpack.c.h.b16 %v151
    %v1211 = vunpack.c.l.b16 %v152
    %v1212 = vunpack.c.h.b16 %v152
    %v1213 = vunpack.c.l.b16 %v153
    %v1214 = vunpack.c.h.b16 %v153
    %v1215 = vunpack.c.l.b16 %v154
    %v1216 = vunpack.c.h.b16 %v154
    %v1217 = vunpack.c.l.b16 %v155
    %v1218 = vunpack.c.h.b16 %v155
    %v1219 = vunpack.c.l.b16 %v156
    %v1220 = vunpack.c.h.b16 %v156
    %v1221 = vunpack.c.l.b16 %v157
    %v1222 = vunpack.c.h.b16 %v157
    %v1223 = vunpack.c.l.b16 %v158
    %v1224 = vunpack.c.h.b16 %v158
    %v1225 = vunpack.c.l.b16 %v159
    %v1226 = vunpack.c.h.b16 %v159
    %v1227 = vunpack.c.l.b16 %v160
    %v1228 = vunpack.c.h.b16 %v160
    %v1229 = vunpack.c.l.b16 %v161
    %v1230 = vunpack.c.h.b16 %v161
    %v1231 = vunpack.c.l.b16 %v162
    %v1232 = vunpack.c.h.b16 %v162
    %v1233 = vunpack.c.l.b16 %v163
    %v1234 = vunpack.c.h.b16 %v163
    %v1235 = vunpack.c.l.b16 %v164
    %v1236 = vunpack.c.h.b16 %v164
    %v1237 = vpack.c.b16 %v1047, %v1045
    %v1238 = vpack.c.b16 %v1048, %v1046
    %v1239 = vpack.c.b16 %v1051, %v1049
    %v1240 = vpack.c.b16 %v1052, %v1050
    %v1241 = vpack.c.b16 %v1055, %v1053
    %v1242 = vpack.c.b16 %v1056, %v1054
    %v1243 = vpack.c.b16 %v1059, %v1057
    %v1244 = vpack.c.b16 %v1060, %v1058
    %v1245 = vpack.c.b16 %v1063, %v1061
    %v1246 = vpack.c.b16 %v1064, %v1062
    %v1247 = vpack.c.b16 %v1067, %v1065
    %v1248 = vpack.c.b16 %v1068, %v1066
    %v1249 = vpack.c.b16 %v1071, %v1069
    %v1250 = vpack.c.b16 %v1072, %v1070
    %v1251 = vpack.c.b16 %v1075, %v1073
    %v1252 = vpack.c.b16 %v1076, %v1074
    %v1253 = vpack.c.b16 %v1079, %v1077
    %v1254 = vpack.c.b16 %v1080, %v1078
    %v1255 = vpack.c.b16 %v1083, %v1081
    %v1256 = vpack.c.b16 %v1084, %v1082
    %v1257 = vpack.c.b16 %v1087, %v1085
    %v1258 = vpack.c.b16 %v1088, %v1086
    %v1259 = vpack.c.b16 %v1091, %v1089
    %v1260 = vpack.c.b16 %v1092, %v1090
    %v1261 = vpack.c.b16 %v1095, %v1093
    %v1262 = vpack.c.b16 %v1096, %v1094
    %v1263 = vpack.c.b16 %v1099, %v1097
    %v1264 = vpack.c.b16 %v1100, %v1098
    %v1265 = vpack.c.b16 %v1103, %v1101
    %v1266 = vpack.c.b16 %v1104, %v1102
    %v1267 = vpack.c.b16 %v1107, %v1105
    %v1268 = vpack.c.b16 %v1108, %v1106
    %v1269 = vpack.c.b16 %v1111, %v1109
    %v1270 = vpack.c.b16 %v1112, %v1110
    %v1271 = vpack.c.b16 %v1115, %v1113
    %v1272 = vpack.c.b16 %v1116, %v1114
    %v1273 = vpack.c.b16 %v1119, %v1117
    %v1274 = vpack.c.b16 %v1120, %v1118
    %v1275 = vpack.c.b16 %v1123, %v1121
    %v1276 = vpack.c.b16 %v1124, %v1122
    %v1277 = vpack.c.b16 %v1127, %v1125
    %v1278 = vpack.c.b16 %v1128, %v1126
    %v1279 = vpack.c.b16 %v1131, %v1129
    %v1280 = vpack.c.b16 %v1132, %v1130
    %v1281 = vpack.c.b16 %v1135, %v1133
    %v1282 = vpack.c.b16 %v1136, %v1134
    %v1283 = vpack.c.b16 %v1139, %v1137
    %v1284 = vpack.c.b16 %v1140, %v1138
    %v1285 = vpack.c.b16 %v1143, %v1141
    %v1286 = vpack.c.b16 %v1144, %v1142
    %v1287 = vpack.c.b16 %v1147, %v1145
    %v1288 = vpack.c.b16 %v1148, %v1146
    %v1289 = vpack.c.b16 %v1151, %v1149
    %v1290 = vpack.c.b16 %v1152, %v1150
    %v1291 = vpack.c.b16 %v1155, %v1153
    %v1292 = vpack.c.b16 %v1156, %v1154
    %v1293 = vpack.c.b16 %v1159, %v1157
    %v1294 = vpack.c.b16 %v1160, %v1158
    %v1295 = vpack.c.b16 %v1163, %v1161
    %v1296 = vpack.c.b16 %v1164, %v1162
    %v1297 = vpack.c.b16 %v1167, %v1165
    %v1298 = vpack.c.b16 %v1168, %v1166
    %v1299 = vpack.c.b16 %v1171, %v1169
    %v1300 = vpack.c.b16 %v1172, %v1170
    %v1301 = vpack.c.b16 %v1175, %v1173
    %v1302 = vpack.c.b16 %v1176, %v1174
    %v1303 = vpack.c.b16 %v1179, %v1177
    %v1304 = vpack.c.b16 %v1180, %v1178
    %v1305 = vpack.c.b16 %v1183, %v1181
    %v1306 = vpack.c.b16 %v1184, %v1182
    %v1307 = vpack.c.b16 %v1187, %v1185
    %v1308 = vpack.c.b16 %v1188, %v1186
    %v1309 = vpack.c.b16 %v1191, %v1189
    %v1310 = vpack.c.b16 %v1192, %v1190
    %v1311 = vpack.c.b16 %v1195, %v1193
    %v1312 = vpack.c.b16 %v1196, %v1194
    %v1313 = vpack.c.b16 %v1199, %v1197
    %v1314 = vpack.c.b16 %v1200, %v1198
    %v1315 = vpack.c.b16 %v1203, %v1201
    %v1316 = vpack.c.b16 %v1204, %v1202
    %v1317 = vpack.c.b16 %v1207, %v1205
    %v1318 = vpack.c.b16 %v1208, %v1206
    %v1319 = vpack.c.b16 %v1211, %v1209
    %v1320 = vpack.c.b16 %v1212, %v1210
    %v1321 = vpack.c.b16 %v1215, %v1213
    %v1322 = vpack.c.b16 %v1216, %v1214
    %v1323 = vpack.c.b16 %v1219, %v1217
    %v1324 = vpack.c.b16 %v1220, %v1218
    %v1325 = vpack.c.b16 %v1223, %v1221
    %v1326 = vpack.c.b16 %v1224, %v1222
    %v1327 = vpack.c.b16 %v1227, %v1225
    %v1328 = vpack.c.b16 %v1228, %v1226
    %v1329 = vpack.c.b16 %v1231, %v1229
    %v1330 = vpack.c.b16 %v1232, %v1230
    %v1331 = vpack.c.b16 %v1235, %v1233
    %v1332 = vpack.c.b16 %v1236, %v1234
    %1429 = vmatprep.subr.bf16.mxu0 %v1252
    %1430 = vmatpush1.bf16.msra.mxu0 %v1251
    %1431 = vmatprep.subr.bf16.mxu0 %v1250
    %1432 = vmatpush1.bf16.msra.mxu0 %v1249
    %1433 = vmatprep.subr.bf16.mxu0 %v1248
    %1434 = vmatpush1.bf16.msra.mxu0 %v1247
    %1435 = vmatprep.subr.bf16.mxu0 %v1246
    %1436 = vmatpush1.bf16.msra.mxu0 %v1245
    %1437 = vmatprep.subr.bf16.mxu0 %v1244
    %1438 = vmatpush1.bf16.msra.mxu0 %v1243
    %1439 = vmatprep.subr.bf16.mxu0 %v1242
    %1440 = vmatpush1.bf16.msra.mxu0 %v1241
    %1441 = vmatprep.subr.bf16.mxu0 %v1240
    %1442 = vmatpush1.bf16.msra.mxu0 %v1239
    %1443 = vmatprep.subr.bf16.mxu0 %v1238
    %1444 = vmatpush1.bf16.msra.mxu0 %v1237
    %1445 = vmatprep.subr.bf16.mxu0 %v1268
    %1446 = vmatpush2.bf16.msra.mxu0 %v1267
    %1447 = vmatprep.subr.bf16.mxu0 %v1266
    %1448 = vmatpush2.bf16.msra.mxu0 %v1265
    %1449 = vmatprep.subr.bf16.mxu0 %v1264
    %1450 = vmatpush2.bf16.msra.mxu0 %v1263
    %1451 = vmatprep.subr.bf16.mxu0 %v1262
    %1452 = vmatpush2.bf16.msra.mxu0 %v1261
    %1453 = vmatprep.subr.bf16.mxu0 %v1260
    %1454 = vmatpush2.bf16.msra.mxu0 %v1259
    %1455 = vmatprep.subr.bf16.mxu0 %v1258
    %1456 = vmatpush2.bf16.msra.mxu0 %v1257
    %1457 = vmatprep.subr.bf16.mxu0 %v1256
    %1458 = vmatpush2.bf16.msra.mxu0 %v1255
    %1459 = vmatprep.subr.bf16.mxu0 %v1254
    %1460 = vmatpush2.bf16.msra.mxu0 %v1253
    %1461 = vmatprep.mubr.bf16.mxu0 %v281
    %1462 = vmatmul.mubr.bf16.gmra.mxu0 %v280
    %v1463 = vpop.f32.mrf.mxu0
    %v1464 = vadd.f32 %v935, %v1463
    %v1465 = vpop.f32.mrf.mxu0
    %v1466 = vadd.f32 %v937, %v1465
    %v1467 = vpop.f32.mrf.mxu0
    %v1468 = vadd.f32 %v939, %v1467
    %v1469 = vpop.f32.mrf.mxu0
    %v1470 = vadd.f32 %v941, %v1469
    %1471 = vdwg.mxu0
    %1472 = vmatprep.subr.bf16.mxu0 %v1284
    %1473 = vmatpush1.bf16.msra.mxu0 %v1283
    %1474 = vmatprep.subr.bf16.mxu0 %v1282
    %1475 = vmatpush1.bf16.msra.mxu0 %v1281
    %1476 = vmatprep.subr.bf16.mxu0 %v1280
    %1477 = vmatpush1.bf16.msra.mxu0 %v1279
    %1478 = vmatprep.subr.bf16.mxu0 %v1278
    %1479 = vmatpush1.bf16.msra.mxu0 %v1277
    %1480 = vmatprep.subr.bf16.mxu0 %v1276
    %1481 = vmatpush1.bf16.msra.mxu0 %v1275
    %1482 = vmatprep.subr.bf16.mxu0 %v1274
    %1483 = vmatpush1.bf16.msra.mxu0 %v1273
    %1484 = vmatprep.subr.bf16.mxu0 %v1272
    %1485 = vmatpush1.bf16.msra.mxu0 %v1271
    %1486 = vmatprep.subr.bf16.mxu0 %v1270
    %1487 = vmatpush1.bf16.msra.mxu0 %v1269
    %1488 = vmatprep.subr.bf16.mxu0 %v1300
    %1489 = vmatpush2.bf16.msra.mxu0 %v1299
    %1490 = vmatprep.subr.bf16.mxu0 %v1298
    %1491 = vmatpush2.bf16.msra.mxu0 %v1297
    %1492 = vmatprep.subr.bf16.mxu0 %v1296
    %1493 = vmatpush2.bf16.msra.mxu0 %v1295
    %1494 = vmatprep.subr.bf16.mxu0 %v1294
    %1495 = vmatpush2.bf16.msra.mxu0 %v1293
    %1496 = vmatprep.subr.bf16.mxu0 %v1292
    %1497 = vmatpush2.bf16.msra.mxu0 %v1291
    %1498 = vmatprep.subr.bf16.mxu0 %v1290
    %1499 = vmatpush2.bf16.msra.mxu0 %v1289
    %1500 = vmatprep.subr.bf16.mxu0 %v1288
    %1501 = vmatpush2.bf16.msra.mxu0 %v1287
    %1502 = vmatprep.subr.bf16.mxu0 %v1286
    %1503 = vmatpush2.bf16.msra.mxu0 %v1285
    %1504 = vmatprep.mubr.bf16.mxu0 %v283
    %1505 = vmatmul.mubr.bf16.gmra.mxu0 %v282
    %v1506 = vpop.f32.mrf.mxu0
    %v1507 = vadd.f32 %v1464, %v1506
    %v1508 = vpop.f32.mrf.mxu0
    %v1509 = vadd.f32 %v1466, %v1508
    %v1510 = vpop.f32.mrf.mxu0
    %v1511 = vadd.f32 %v1468, %v1510
    %v1512 = vpop.f32.mrf.mxu0
    %v1513 = vadd.f32 %v1470, %v1512
    %1514 = vdwg.mxu0
    %1515 = vmatprep.subr.bf16.mxu0 %v1316
    %1516 = vmatpush1.bf16.msra.mxu0 %v1315
    %1517 = vmatprep.subr.bf16.mxu0 %v1314
    %1518 = vmatpush1.bf16.msra.mxu0 %v1313
    %1519 = vmatprep.subr.bf16.mxu0 %v1312
    %1520 = vmatpush1.bf16.msra.mxu0 %v1311
    %1521 = vmatprep.subr.bf16.mxu0 %v1310
    %1522 = vmatpush1.bf16.msra.mxu0 %v1309
    %1523 = vmatprep.subr.bf16.mxu0 %v1308
    %1524 = vmatpush1.bf16.msra.mxu0 %v1307
    %1525 = vmatprep.subr.bf16.mxu0 %v1306
    %1526 = vmatpush1.bf16.msra.mxu0 %v1305
    %1527 = vmatprep.subr.bf16.mxu0 %v1304
    %1528 = vmatpush1.bf16.msra.mxu0 %v1303
    %1529 = vmatprep.subr.bf16.mxu0 %v1302
    %1530 = vmatpush1.bf16.msra.mxu0 %v1301
    %1531 = vmatprep.subr.bf16.mxu0 %v1332
    %1532 = vmatpush2.bf16.msra.mxu0 %v1331
    %1533 = vmatprep.subr.bf16.mxu0 %v1330
    %1534 = vmatpush2.bf16.msra.mxu0 %v1329
    %1535 = vmatprep.subr.bf16.mxu0 %v1328
    %1536 = vmatpush2.bf16.msra.mxu0 %v1327
    %1537 = vmatprep.subr.bf16.mxu0 %v1326
    %1538 = vmatpush2.bf16.msra.mxu0 %v1325
    %1539 = vmatprep.subr.bf16.mxu0 %v1324
    %1540 = vmatpush2.bf16.msra.mxu0 %v1323
    %1541 = vmatprep.subr.bf16.mxu0 %v1322
    %1542 = vmatpush2.bf16.msra.mxu0 %v1321
    %1543 = vmatprep.subr.bf16.mxu0 %v1320
    %1544 = vmatpush2.bf16.msra.mxu0 %v1319
    %1545 = vmatprep.subr.bf16.mxu0 %v1318
    %1546 = vmatpush2.bf16.msra.mxu0 %v1317
    %1547 = vmatprep.mubr.bf16.mxu0 %v285
    %1548 = vmatmul.mubr.bf16.gmra.mxu0 %v284
    %v1549 = vpop.f32.mrf.mxu0
    %v1550 = vadd.f32 %v1507, %v1549
    %v1551 = vpop.f32.mrf.mxu0
    %v1552 = vadd.f32 %v1509, %v1551
    %v1553 = vpop.f32.mrf.mxu0
    %v1554 = vadd.f32 %v1511, %v1553
    %v1555 = vpop.f32.mrf.mxu0
    %v1556 = vadd.f32 %v1513, %v1555
    %1557 = vdwg.mxu0
    %s1558 = scalar_lea.vmem [#allocation2], 1536
    %v1559 = vld [vmem:[%s1558] sm:$0xff]
    %v1560 = vld [vmem:[%s1558 + $0x8] sm:$0xff]
    %v1561 = vld [vmem:[%s1558 + $0x10] sm:$0xff]
    %v1562 = vld [vmem:[%s1558 + $0x18] sm:$0xff]
    %v1563 = vld [vmem:[%s1558 + $0x20] sm:$0xff]
    %v1564 = vld [vmem:[%s1558 + $0x28] sm:$0xff]
    %v1565 = vld [vmem:[%s1558 + $0x30] sm:$0xff]
    %v1566 = vld [vmem:[%s1558 + $0x38] sm:$0xff]
    %v1567 = vld [vmem:[%s1558 + $0x40] sm:$0xff]
    %v1568 = vld [vmem:[%s1558 + $0x48] sm:$0xff]
    %v1569 = vld [vmem:[%s1558 + $0x50] sm:$0xff]
    %v1570 = vld [vmem:[%s1558 + $0x58] sm:$0xff]
    %v1571 = vld [vmem:[%s1558 + $0x60] sm:$0xff]
    %v1572 = vld [vmem:[%s1558 + $0x68] sm:$0xff]
    %v1573 = vld [vmem:[%s1558 + $0x70] sm:$0xff]
    %v1574 = vld [vmem:[%s1558 + $0x78] sm:$0xff]
    %v1575 = vld [vmem:[%s1558 + $0x80] sm:$0xff]
    %v1576 = vld [vmem:[%s1558 + $0x88] sm:$0xff]
    %v1577 = vld [vmem:[%s1558 + $0x90] sm:$0xff]
    %v1578 = vld [vmem:[%s1558 + $0x98] sm:$0xff]
    %v1579 = vld [vmem:[%s1558 + $0xa0] sm:$0xff]
    %v1580 = vld [vmem:[%s1558 + $0xa8] sm:$0xff]
    %v1581 = vld [vmem:[%s1558 + $0xb0] sm:$0xff]
    %v1582 = vld [vmem:[%s1558 + $0xb8] sm:$0xff]
    %v1583 = vld [vmem:[%s1558 + $0xc0] sm:$0xff]
    %v1584 = vld [vmem:[%s1558 + $0xc8] sm:$0xff]
    %v1585 = vld [vmem:[%s1558 + $0xd0] sm:$0xff]
    %v1586 = vld [vmem:[%s1558 + $0xd8] sm:$0xff]
    %v1587 = vld [vmem:[%s1558 + $0xe0] sm:$0xff]
    %v1588 = vld [vmem:[%s1558 + $0xe8] sm:$0xff]
    %v1589 = vld [vmem:[%s1558 + $0xf0] sm:$0xff]
    %v1590 = vld [vmem:[%s1558 + $0xf8] sm:$0xff]
    %v1591 = vld [vmem:[%s1558 + $0x100] sm:$0xff]
    %v1592 = vld [vmem:[%s1558 + $0x108] sm:$0xff]
    %v1593 = vld [vmem:[%s1558 + $0x110] sm:$0xff]
    %v1594 = vld [vmem:[%s1558 + $0x118] sm:$0xff]
    %v1595 = vld [vmem:[%s1558 + $0x120] sm:$0xff]
    %v1596 = vld [vmem:[%s1558 + $0x128] sm:$0xff]
    %v1597 = vld [vmem:[%s1558 + $0x130] sm:$0xff]
    %v1598 = vld [vmem:[%s1558 + $0x138] sm:$0xff]
    %v1599 = vld [vmem:[%s1558 + $0x140] sm:$0xff]
    %v1600 = vld [vmem:[%s1558 + $0x148] sm:$0xff]
    %v1601 = vld [vmem:[%s1558 + $0x150] sm:$0xff]
    %v1602 = vld [vmem:[%s1558 + $0x158] sm:$0xff]
    %v1603 = vld [vmem:[%s1558 + $0x160] sm:$0xff]
    %v1604 = vld [vmem:[%s1558 + $0x168] sm:$0xff]
    %v1605 = vld [vmem:[%s1558 + $0x170] sm:$0xff]
    %v1606 = vld [vmem:[%s1558 + $0x178] sm:$0xff]
    %v1607 = vld [vmem:[%s1558 + $0x180] sm:$0xff]
    %v1608 = vld [vmem:[%s1558 + $0x188] sm:$0xff]
    %v1609 = vld [vmem:[%s1558 + $0x190] sm:$0xff]
    %v1610 = vld [vmem:[%s1558 + $0x198] sm:$0xff]
    %v1611 = vld [vmem:[%s1558 + $0x1a0] sm:$0xff]
    %v1612 = vld [vmem:[%s1558 + $0x1a8] sm:$0xff]
    %v1613 = vld [vmem:[%s1558 + $0x1b0] sm:$0xff]
    %v1614 = vld [vmem:[%s1558 + $0x1b8] sm:$0xff]
    %v1615 = vld [vmem:[%s1558 + $0x1c0] sm:$0xff]
    %v1616 = vld [vmem:[%s1558 + $0x1c8] sm:$0xff]
    %v1617 = vld [vmem:[%s1558 + $0x1d0] sm:$0xff]
    %v1618 = vld [vmem:[%s1558 + $0x1d8] sm:$0xff]
    %v1619 = vld [vmem:[%s1558 + $0x1e0] sm:$0xff]
    %v1620 = vld [vmem:[%s1558 + $0x1e8] sm:$0xff]
    %v1621 = vld [vmem:[%s1558 + $0x1f0] sm:$0xff]
    %v1622 = vld [vmem:[%s1558 + $0x1f8] sm:$0xff]
    %v1623 = vld [vmem:[%s1558 + $0x200] sm:$0xff]
    %v1624 = vld [vmem:[%s1558 + $0x208] sm:$0xff]
    %v1625 = vld [vmem:[%s1558 + $0x210] sm:$0xff]
    %v1626 = vld [vmem:[%s1558 + $0x218] sm:$0xff]
    %v1627 = vld [vmem:[%s1558 + $0x220] sm:$0xff]
    %v1628 = vld [vmem:[%s1558 + $0x228] sm:$0xff]
    %v1629 = vld [vmem:[%s1558 + $0x230] sm:$0xff]
    %v1630 = vld [vmem:[%s1558 + $0x238] sm:$0xff]
    %v1631 = vld [vmem:[%s1558 + $0x240] sm:$0xff]
    %v1632 = vld [vmem:[%s1558 + $0x248] sm:$0xff]
    %v1633 = vld [vmem:[%s1558 + $0x250] sm:$0xff]
    %v1634 = vld [vmem:[%s1558 + $0x258] sm:$0xff]
    %v1635 = vld [vmem:[%s1558 + $0x260] sm:$0xff]
    %v1636 = vld [vmem:[%s1558 + $0x268] sm:$0xff]
    %v1637 = vld [vmem:[%s1558 + $0x270] sm:$0xff]
    %v1638 = vld [vmem:[%s1558 + $0x278] sm:$0xff]
    %v1639 = vld [vmem:[%s1558 + $0x280] sm:$0xff]
    %v1640 = vld [vmem:[%s1558 + $0x288] sm:$0xff]
    %v1641 = vld [vmem:[%s1558 + $0x290] sm:$0xff]
    %v1642 = vld [vmem:[%s1558 + $0x298] sm:$0xff]
    %v1643 = vld [vmem:[%s1558 + $0x2a0] sm:$0xff]
    %v1644 = vld [vmem:[%s1558 + $0x2a8] sm:$0xff]
    %v1645 = vld [vmem:[%s1558 + $0x2b0] sm:$0xff]
    %v1646 = vld [vmem:[%s1558 + $0x2b8] sm:$0xff]
    %v1647 = vld [vmem:[%s1558 + $0x2c0] sm:$0xff]
    %v1648 = vld [vmem:[%s1558 + $0x2c8] sm:$0xff]
    %v1649 = vld [vmem:[%s1558 + $0x2d0] sm:$0xff]
    %v1650 = vld [vmem:[%s1558 + $0x2d8] sm:$0xff]
    %v1651 = vld [vmem:[%s1558 + $0x2e0] sm:$0xff]
    %v1652 = vld [vmem:[%s1558 + $0x2e8] sm:$0xff]
    %v1653 = vld [vmem:[%s1558 + $0x2f0] sm:$0xff]
    %v1654 = vld [vmem:[%s1558 + $0x2f8] sm:$0xff]
    %v1655 = vrot.slane %v280, 1
    %v1656 = vrot.slane %v281, 1
    %v1657 = vrot.slane %v282, 1
    %v1658 = vrot.slane %v283, 1
    %v1659 = vrot.slane %v284, 1
    %v1660 = vrot.slane %v285, 1
    %v1763 = vunpack.c.l.b16 %v1559
    %v1764 = vunpack.c.h.b16 %v1559
    %v1765 = vunpack.c.l.b16 %v1560
    %v1766 = vunpack.c.h.b16 %v1560
    %v1767 = vunpack.c.l.b16 %v1561
    %v1768 = vunpack.c.h.b16 %v1561
    %v1769 = vunpack.c.l.b16 %v1562
    %v1770 = vunpack.c.h.b16 %v1562
    %v1771 = vunpack.c.l.b16 %v1563
    %v1772 = vunpack.c.h.b16 %v1563
    %v1773 = vunpack.c.l.b16 %v1564
    %v1774 = vunpack.c.h.b16 %v1564
    %v1775 = vunpack.c.l.b16 %v1565
    %v1776 = vunpack.c.h.b16 %v1565
    %v1777 = vunpack.c.l.b16 %v1566
    %v1778 = vunpack.c.h.b16 %v1566
    %v1779 = vunpack.c.l.b16 %v1567
    %v1780 = vunpack.c.h.b16 %v1567
    %v1781 = vunpack.c.l.b16 %v1568
    %v1782 = vunpack.c.h.b16 %v1568
    %v1783 = vunpack.c.l.b16 %v1569
    %v1784 = vunpack.c.h.b16 %v1569
    %v1785 = vunpack.c.l.b16 %v1570
    %v1786 = vunpack.c.h.b16 %v1570
    %v1787 = vunpack.c.l.b16 %v1571
    %v1788 = vunpack.c.h.b16 %v1571
    %v1789 = vunpack.c.l.b16 %v1572
    %v1790 = vunpack.c.h.b16 %v1572
    %v1791 = vunpack.c.l.b16 %v1573
    %v1792 = vunpack.c.h.b16 %v1573
    %v1793 = vunpack.c.l.b16 %v1574
    %v1794 = vunpack.c.h.b16 %v1574
    %v1795 = vunpack.c.l.b16 %v1575
    %v1796 = vunpack.c.h.b16 %v1575
    %v1797 = vunpack.c.l.b16 %v1576
    %v1798 = vunpack.c.h.b16 %v1576
    %v1799 = vunpack.c.l.b16 %v1577
    %v1800 = vunpack.c.h.b16 %v1577
    %v1801 = vunpack.c.l.b16 %v1578
    %v1802 = vunpack.c.h.b16 %v1578
    %v1803 = vunpack.c.l.b16 %v1579
    %v1804 = vunpack.c.h.b16 %v1579
    %v1805 = vunpack.c.l.b16 %v1580
    %v1806 = vunpack.c.h.b16 %v1580
    %v1807 = vunpack.c.l.b16 %v1581
    %v1808 = vunpack.c.h.b16 %v1581
    %v1809 = vunpack.c.l.b16 %v1582
    %v1810 = vunpack.c.h.b16 %v1582
    %v1811 = vunpack.c.l.b16 %v1583
    %v1812 = vunpack.c.h.b16 %v1583
    %v1813 = vunpack.c.l.b16 %v1584
    %v1814 = vunpack.c.h.b16 %v1584
    %v1815 = vunpack.c.l.b16 %v1585
    %v1816 = vunpack.c.h.b16 %v1585
    %v1817 = vunpack.c.l.b16 %v1586
    %v1818 = vunpack.c.h.b16 %v1586
    %v1819 = vunpack.c.l.b16 %v1587
    %v1820 = vunpack.c.h.b16 %v1587
    %v1821 = vunpack.c.l.b16 %v1588
    %v1822 = vunpack.c.h.b16 %v1588
    %v1823 = vunpack.c.l.b16 %v1589
    %v1824 = vunpack.c.h.b16 %v1589
    %v1825 = vunpack.c.l.b16 %v1590
    %v1826 = vunpack.c.h.b16 %v1590
    %v1827 = vunpack.c.l.b16 %v1591
    %v1828 = vunpack.c.h.b16 %v1591
    %v1829 = vunpack.c.l.b16 %v1592
    %v1830 = vunpack.c.h.b16 %v1592
    %v1831 = vunpack.c.l.b16 %v1593
    %v1832 = vunpack.c.h.b16 %v1593
    %v1833 = vunpack.c.l.b16 %v1594
    %v1834 = vunpack.c.h.b16 %v1594
    %v1835 = vunpack.c.l.b16 %v1595
    %v1836 = vunpack.c.h.b16 %v1595
    %v1837 = vunpack.c.l.b16 %v1596
    %v1838 = vunpack.c.h.b16 %v1596
    %v1839 = vunpack.c.l.b16 %v1597
    %v1840 = vunpack.c.h.b16 %v1597
    %v1841 = vunpack.c.l.b16 %v1598
    %v1842 = vunpack.c.h.b16 %v1598
    %v1843 = vunpack.c.l.b16 %v1599
    %v1844 = vunpack.c.h.b16 %v1599
    %v1845 = vunpack.c.l.b16 %v1600
    %v1846 = vunpack.c.h.b16 %v1600
    %v1847 = vunpack.c.l.b16 %v1601
    %v1848 = vunpack.c.h.b16 %v1601
    %v1849 = vunpack.c.l.b16 %v1602
    %v1850 = vunpack.c.h.b16 %v1602
    %v1851 = vunpack.c.l.b16 %v1603
    %v1852 = vunpack.c.h.b16 %v1603
    %v1853 = vunpack.c.l.b16 %v1604
    %v1854 = vunpack.c.h.b16 %v1604
    %v1855 = vunpack.c.l.b16 %v1605
    %v1856 = vunpack.c.h.b16 %v1605
    %v1857 = vunpack.c.l.b16 %v1606
    %v1858 = vunpack.c.h.b16 %v1606
    %v1859 = vunpack.c.l.b16 %v1607
    %v1860 = vunpack.c.h.b16 %v1607
    %v1861 = vunpack.c.l.b16 %v1608
    %v1862 = vunpack.c.h.b16 %v1608
    %v1863 = vunpack.c.l.b16 %v1609
    %v1864 = vunpack.c.h.b16 %v1609
    %v1865 = vunpack.c.l.b16 %v1610
    %v1866 = vunpack.c.h.b16 %v1610
    %v1867 = vunpack.c.l.b16 %v1611
    %v1868 = vunpack.c.h.b16 %v1611
    %v1869 = vunpack.c.l.b16 %v1612
    %v1870 = vunpack.c.h.b16 %v1612
    %v1871 = vunpack.c.l.b16 %v1613
    %v1872 = vunpack.c.h.b16 %v1613
    %v1873 = vunpack.c.l.b16 %v1614
    %v1874 = vunpack.c.h.b16 %v1614
    %v1875 = vunpack.c.l.b16 %v1615
    %v1876 = vunpack.c.h.b16 %v1615
    %v1877 = vunpack.c.l.b16 %v1616
    %v1878 = vunpack.c.h.b16 %v1616
    %v1879 = vunpack.c.l.b16 %v1617
    %v1880 = vunpack.c.h.b16 %v1617
    %v1881 = vunpack.c.l.b16 %v1618
    %v1882 = vunpack.c.h.b16 %v1618
    %v1883 = vunpack.c.l.b16 %v1619
    %v1884 = vunpack.c.h.b16 %v1619
    %v1885 = vunpack.c.l.b16 %v1620
    %v1886 = vunpack.c.h.b16 %v1620
    %v1887 = vunpack.c.l.b16 %v1621
    %v1888 = vunpack.c.h.b16 %v1621
    %v1889 = vunpack.c.l.b16 %v1622
    %v1890 = vunpack.c.h.b16 %v1622
    %v1891 = vunpack.c.l.b16 %v1623
    %v1892 = vunpack.c.h.b16 %v1623
    %v1893 = vunpack.c.l.b16 %v1624
    %v1894 = vunpack.c.h.b16 %v1624
    %v1895 = vunpack.c.l.b16 %v1625
    %v1896 = vunpack.c.h.b16 %v1625
    %v1897 = vunpack.c.l.b16 %v1626
    %v1898 = vunpack.c.h.b16 %v1626
    %v1899 = vunpack.c.l.b16 %v1627
    %v1900 = vunpack.c.h.b16 %v1627
    %v1901 = vunpack.c.l.b16 %v1628
    %v1902 = vunpack.c.h.b16 %v1628
    %v1903 = vunpack.c.l.b16 %v1629
    %v1904 = vunpack.c.h.b16 %v1629
    %v1905 = vunpack.c.l.b16 %v1630
    %v1906 = vunpack.c.h.b16 %v1630
    %v1907 = vunpack.c.l.b16 %v1631
    %v1908 = vunpack.c.h.b16 %v1631
    %v1909 = vunpack.c.l.b16 %v1632
    %v1910 = vunpack.c.h.b16 %v1632
    %v1911 = vunpack.c.l.b16 %v1633
    %v1912 = vunpack.c.h.b16 %v1633
    %v1913 = vunpack.c.l.b16 %v1634
    %v1914 = vunpack.c.h.b16 %v1634
    %v1915 = vunpack.c.l.b16 %v1635
    %v1916 = vunpack.c.h.b16 %v1635
    %v1917 = vunpack.c.l.b16 %v1636
    %v1918 = vunpack.c.h.b16 %v1636
    %v1919 = vunpack.c.l.b16 %v1637
    %v1920 = vunpack.c.h.b16 %v1637
    %v1921 = vunpack.c.l.b16 %v1638
    %v1922 = vunpack.c.h.b16 %v1638
    %v1923 = vunpack.c.l.b16 %v1639
    %v1924 = vunpack.c.h.b16 %v1639
    %v1925 = vunpack.c.l.b16 %v1640
    %v1926 = vunpack.c.h.b16 %v1640
    %v1927 = vunpack.c.l.b16 %v1641
    %v1928 = vunpack.c.h.b16 %v1641
    %v1929 = vunpack.c.l.b16 %v1642
    %v1930 = vunpack.c.h.b16 %v1642
    %v1931 = vunpack.c.l.b16 %v1643
    %v1932 = vunpack.c.h.b16 %v1643
    %v1933 = vunpack.c.l.b16 %v1644
    %v1934 = vunpack.c.h.b16 %v1644
    %v1935 = vunpack.c.l.b16 %v1645
    %v1936 = vunpack.c.h.b16 %v1645
    %v1937 = vunpack.c.l.b16 %v1646
    %v1938 = vunpack.c.h.b16 %v1646
    %v1939 = vunpack.c.l.b16 %v1647
    %v1940 = vunpack.c.h.b16 %v1647
    %v1941 = vunpack.c.l.b16 %v1648
    %v1942 = vunpack.c.h.b16 %v1648
    %v1943 = vunpack.c.l.b16 %v1649
    %v1944 = vunpack.c.h.b16 %v1649
    %v1945 = vunpack.c.l.b16 %v1650
    %v1946 = vunpack.c.h.b16 %v1650
    %v1947 = vunpack.c.l.b16 %v1651
    %v1948 = vunpack.c.h.b16 %v1651
    %v1949 = vunpack.c.l.b16 %v1652
    %v1950 = vunpack.c.h.b16 %v1652
    %v1951 = vunpack.c.l.b16 %v1653
    %v1952 = vunpack.c.h.b16 %v1653
    %v1953 = vunpack.c.l.b16 %v1654
    %v1954 = vunpack.c.h.b16 %v1654
    %v1955 = vpack.c.b16 %v1765, %v1763
    %v1956 = vpack.c.b16 %v1766, %v1764
    %v1957 = vpack.c.b16 %v1769, %v1767
    %v1958 = vpack.c.b16 %v1770, %v1768
    %v1959 = vpack.c.b16 %v1773, %v1771
    %v1960 = vpack.c.b16 %v1774, %v1772
    %v1961 = vpack.c.b16 %v1777, %v1775
    %v1962 = vpack.c.b16 %v1778, %v1776
    %v1963 = vpack.c.b16 %v1781, %v1779
    %v1964 = vpack.c.b16 %v1782, %v1780
    %v1965 = vpack.c.b16 %v1785, %v1783
    %v1966 = vpack.c.b16 %v1786, %v1784
    %v1967 = vpack.c.b16 %v1789, %v1787
    %v1968 = vpack.c.b16 %v1790, %v1788
    %v1969 = vpack.c.b16 %v1793, %v1791
    %v1970 = vpack.c.b16 %v1794, %v1792
    %v1971 = vpack.c.b16 %v1797, %v1795
    %v1972 = vpack.c.b16 %v1798, %v1796
    %v1973 = vpack.c.b16 %v1801, %v1799
    %v1974 = vpack.c.b16 %v1802, %v1800
    %v1975 = vpack.c.b16 %v1805, %v1803
    %v1976 = vpack.c.b16 %v1806, %v1804
    %v1977 = vpack.c.b16 %v1809, %v1807
    %v1978 = vpack.c.b16 %v1810, %v1808
    %v1979 = vpack.c.b16 %v1813, %v1811
    %v1980 = vpack.c.b16 %v1814, %v1812
    %v1981 = vpack.c.b16 %v1817, %v1815
    %v1982 = vpack.c.b16 %v1818, %v1816
    %v1983 = vpack.c.b16 %v1821, %v1819
    %v1984 = vpack.c.b16 %v1822, %v1820
    %v1985 = vpack.c.b16 %v1825, %v1823
    %v1986 = vpack.c.b16 %v1826, %v1824
    %v1987 = vpack.c.b16 %v1829, %v1827
    %v1988 = vpack.c.b16 %v1830, %v1828
    %v1989 = vpack.c.b16 %v1833, %v1831
    %v1990 = vpack.c.b16 %v1834, %v1832
    %v1991 = vpack.c.b16 %v1837, %v1835
    %v1992 = vpack.c.b16 %v1838, %v1836
    %v1993 = vpack.c.b16 %v1841, %v1839
    %v1994 = vpack.c.b16 %v1842, %v1840
    %v1995 = vpack.c.b16 %v1845, %v1843
    %v1996 = vpack.c.b16 %v1846, %v1844
    %v1997 = vpack.c.b16 %v1849, %v1847
    %v1998 = vpack.c.b16 %v1850, %v1848
    %v1999 = vpack.c.b16 %v1853, %v1851
    %v2000 = vpack.c.b16 %v1854, %v1852
    %v2001 = vpack.c.b16 %v1857, %v1855
    %v2002 = vpack.c.b16 %v1858, %v1856
    %v2003 = vpack.c.b16 %v1861, %v1859
    %v2004 = vpack.c.b16 %v1862, %v1860
    %v2005 = vpack.c.b16 %v1865, %v1863
    %v2006 = vpack.c.b16 %v1866, %v1864
    %v2007 = vpack.c.b16 %v1869, %v1867
    %v2008 = vpack.c.b16 %v1870, %v1868
    %v2009 = vpack.c.b16 %v1873, %v1871
    %v2010 = vpack.c.b16 %v1874, %v1872
    %v2011 = vpack.c.b16 %v1877, %v1875
    %v2012 = vpack.c.b16 %v1878, %v1876
    %v2013 = vpack.c.b16 %v1881, %v1879
    %v2014 = vpack.c.b16 %v1882, %v1880
    %v2015 = vpack.c.b16 %v1885, %v1883
    %v2016 = vpack.c.b16 %v1886, %v1884
    %v2017 = vpack.c.b16 %v1889, %v1887
    %v2018 = vpack.c.b16 %v1890, %v1888
    %v2019 = vpack.c.b16 %v1893, %v1891
    %v2020 = vpack.c.b16 %v1894, %v1892
    %v2021 = vpack.c.b16 %v1897, %v1895
    %v2022 = vpack.c.b16 %v1898, %v1896
    %v2023 = vpack.c.b16 %v1901, %v1899
    %v2024 = vpack.c.b16 %v1902, %v1900
    %v2025 = vpack.c.b16 %v1905, %v1903
    %v2026 = vpack.c.b16 %v1906, %v1904
    %v2027 = vpack.c.b16 %v1909, %v1907
    %v2028 = vpack.c.b16 %v1910, %v1908
    %v2029 = vpack.c.b16 %v1913, %v1911
    %v2030 = vpack.c.b16 %v1914, %v1912
    %v2031 = vpack.c.b16 %v1917, %v1915
    %v2032 = vpack.c.b16 %v1918, %v1916
    %v2033 = vpack.c.b16 %v1921, %v1919
    %v2034 = vpack.c.b16 %v1922, %v1920
    %v2035 = vpack.c.b16 %v1925, %v1923
    %v2036 = vpack.c.b16 %v1926, %v1924
    %v2037 = vpack.c.b16 %v1929, %v1927
    %v2038 = vpack.c.b16 %v1930, %v1928
    %v2039 = vpack.c.b16 %v1933, %v1931
    %v2040 = vpack.c.b16 %v1934, %v1932
    %v2041 = vpack.c.b16 %v1937, %v1935
    %v2042 = vpack.c.b16 %v1938, %v1936
    %v2043 = vpack.c.b16 %v1941, %v1939
    %v2044 = vpack.c.b16 %v1942, %v1940
    %v2045 = vpack.c.b16 %v1945, %v1943
    %v2046 = vpack.c.b16 %v1946, %v1944
    %v2047 = vpack.c.b16 %v1949, %v1947
    %v2048 = vpack.c.b16 %v1950, %v1948
    %v2049 = vpack.c.b16 %v1953, %v1951
    %v2050 = vpack.c.b16 %v1954, %v1952
    %2147 = vmatprep.subr.bf16.mxu0 %v1970
    %2148 = vmatpush1.bf16.msra.mxu0 %v1969
    %2149 = vmatprep.subr.bf16.mxu0 %v1968
    %2150 = vmatpush1.bf16.msra.mxu0 %v1967
    %2151 = vmatprep.subr.bf16.mxu0 %v1966
    %2152 = vmatpush1.bf16.msra.mxu0 %v1965
    %2153 = vmatprep.subr.bf16.mxu0 %v1964
    %2154 = vmatpush1.bf16.msra.mxu0 %v1963
    %2155 = vmatprep.subr.bf16.mxu0 %v1962
    %2156 = vmatpush1.bf16.msra.mxu0 %v1961
    %2157 = vmatprep.subr.bf16.mxu0 %v1960
    %2158 = vmatpush1.bf16.msra.mxu0 %v1959
    %2159 = vmatprep.subr.bf16.mxu0 %v1958
    %2160 = vmatpush1.bf16.msra.mxu0 %v1957
    %2161 = vmatprep.subr.bf16.mxu0 %v1956
    %2162 = vmatpush1.bf16.msra.mxu0 %v1955
    %2163 = vmatprep.subr.bf16.mxu0 %v1986
    %2164 = vmatpush2.bf16.msra.mxu0 %v1985
    %2165 = vmatprep.subr.bf16.mxu0 %v1984
    %2166 = vmatpush2.bf16.msra.mxu0 %v1983
    %2167 = vmatprep.subr.bf16.mxu0 %v1982
    %2168 = vmatpush2.bf16.msra.mxu0 %v1981
    %2169 = vmatprep.subr.bf16.mxu0 %v1980
    %2170 = vmatpush2.bf16.msra.mxu0 %v1979
    %2171 = vmatprep.subr.bf16.mxu0 %v1978
    %2172 = vmatpush2.bf16.msra.mxu0 %v1977
    %2173 = vmatprep.subr.bf16.mxu0 %v1976
    %2174 = vmatpush2.bf16.msra.mxu0 %v1975
    %2175 = vmatprep.subr.bf16.mxu0 %v1974
    %2176 = vmatpush2.bf16.msra.mxu0 %v1973
    %2177 = vmatprep.subr.bf16.mxu0 %v1972
    %2178 = vmatpush2.bf16.msra.mxu0 %v1971
    %2179 = vmatprep.mubr.bf16.mxu0 %v1656
    %2180 = vmatmul.mubr.bf16.gmra.mxu0 %v1655
    %v2181 = vpop.f32.mrf.mxu0
    %v2182 = vadd.f32 0.0, %v2181
    %v2183 = vpop.f32.mrf.mxu0
    %v2184 = vadd.f32 0.0, %v2183
    %v2185 = vpop.f32.mrf.mxu0
    %v2186 = vadd.f32 0.0, %v2185
    %v2187 = vpop.f32.mrf.mxu0
    %v2188 = vadd.f32 0.0, %v2187
    %2189 = vdwg.mxu0
    %2190 = vmatprep.subr.bf16.mxu0 %v2002
    %2191 = vmatpush1.bf16.msra.mxu0 %v2001
    %2192 = vmatprep.subr.bf16.mxu0 %v2000
    %2193 = vmatpush1.bf16.msra.mxu0 %v1999
    %2194 = vmatprep.subr.bf16.mxu0 %v1998
    %2195 = vmatpush1.bf16.msra.mxu0 %v1997
    %2196 = vmatprep.subr.bf16.mxu0 %v1996
    %2197 = vmatpush1.bf16.msra.mxu0 %v1995
    %2198 = vmatprep.subr.bf16.mxu0 %v1994
    %2199 = vmatpush1.bf16.msra.mxu0 %v1993
    %2200 = vmatprep.subr.bf16.mxu0 %v1992
    %2201 = vmatpush1.bf16.msra.mxu0 %v1991
    %2202 = vmatprep.subr.bf16.mxu0 %v1990
    %2203 = vmatpush1.bf16.msra.mxu0 %v1989
    %2204 = vmatprep.subr.bf16.mxu0 %v1988
    %2205 = vmatpush1.bf16.msra.mxu0 %v1987
    %2206 = vmatprep.subr.bf16.mxu0 %v2018
    %2207 = vmatpush2.bf16.msra.mxu0 %v2017
    %2208 = vmatprep.subr.bf16.mxu0 %v2016
    %2209 = vmatpush2.bf16.msra.mxu0 %v2015
    %2210 = vmatprep.subr.bf16.mxu0 %v2014
    %2211 = vmatpush2.bf16.msra.mxu0 %v2013
    %2212 = vmatprep.subr.bf16.mxu0 %v2012
    %2213 = vmatpush2.bf16.msra.mxu0 %v2011
    %2214 = vmatprep.subr.bf16.mxu0 %v2010
    %2215 = vmatpush2.bf16.msra.mxu0 %v2009
    %2216 = vmatprep.subr.bf16.mxu0 %v2008
    %2217 = vmatpush2.bf16.msra.mxu0 %v2007
    %2218 = vmatprep.subr.bf16.mxu0 %v2006
    %2219 = vmatpush2.bf16.msra.mxu0 %v2005
    %2220 = vmatprep.subr.bf16.mxu0 %v2004
    %2221 = vmatpush2.bf16.msra.mxu0 %v2003
    %2222 = vmatprep.mubr.bf16.mxu0 %v1658
    %2223 = vmatmul.mubr.bf16.gmra.mxu0 %v1657
    %v2224 = vpop.f32.mrf.mxu0
    %v2225 = vadd.f32 %v2182, %v2224
    %v2226 = vpop.f32.mrf.mxu0
    %v2227 = vadd.f32 %v2184, %v2226
    %v2228 = vpop.f32.mrf.mxu0
    %v2229 = vadd.f32 %v2186, %v2228
    %v2230 = vpop.f32.mrf.mxu0
    %v2231 = vadd.f32 %v2188, %v2230
    %2232 = vdwg.mxu0
    %2233 = vmatprep.subr.bf16.mxu0 %v2034
    %2234 = vmatpush1.bf16.msra.mxu0 %v2033
    %2235 = vmatprep.subr.bf16.mxu0 %v2032
    %2236 = vmatpush1.bf16.msra.mxu0 %v2031
    %2237 = vmatprep.subr.bf16.mxu0 %v2030
    %2238 = vmatpush1.bf16.msra.mxu0 %v2029
    %2239 = vmatprep.subr.bf16.mxu0 %v2028
    %2240 = vmatpush1.bf16.msra.mxu0 %v2027
    %2241 = vmatprep.subr.bf16.mxu0 %v2026
    %2242 = vmatpush1.bf16.msra.mxu0 %v2025
    %2243 = vmatprep.subr.bf16.mxu0 %v2024
    %2244 = vmatpush1.bf16.msra.mxu0 %v2023
    %2245 = vmatprep.subr.bf16.mxu0 %v2022
    %2246 = vmatpush1.bf16.msra.mxu0 %v2021
    %2247 = vmatprep.subr.bf16.mxu0 %v2020
    %2248 = vmatpush1.bf16.msra.mxu0 %v2019
    %2249 = vmatprep.subr.bf16.mxu0 %v2050
    %2250 = vmatpush2.bf16.msra.mxu0 %v2049
    %2251 = vmatprep.subr.bf16.mxu0 %v2048
    %2252 = vmatpush2.bf16.msra.mxu0 %v2047
    %2253 = vmatprep.subr.bf16.mxu0 %v2046
    %2254 = vmatpush2.bf16.msra.mxu0 %v2045
    %2255 = vmatprep.subr.bf16.mxu0 %v2044
    %2256 = vmatpush2.bf16.msra.mxu0 %v2043
    %2257 = vmatprep.subr.bf16.mxu0 %v2042
    %2258 = vmatpush2.bf16.msra.mxu0 %v2041
    %2259 = vmatprep.subr.bf16.mxu0 %v2040
    %2260 = vmatpush2.bf16.msra.mxu0 %v2039
    %2261 = vmatprep.subr.bf16.mxu0 %v2038
    %2262 = vmatpush2.bf16.msra.mxu0 %v2037
    %2263 = vmatprep.subr.bf16.mxu0 %v2036
    %2264 = vmatpush2.bf16.msra.mxu0 %v2035
    %2265 = vmatprep.mubr.bf16.mxu0 %v1660
    %2266 = vmatmul.mubr.bf16.gmra.mxu0 %v1659
    %v2267 = vpop.f32.mrf.mxu0
    %v2268 = vadd.f32 %v2225, %v2267
    %v2269 = vpop.f32.mrf.mxu0
    %v2270 = vadd.f32 %v2227, %v2269
    %v2271 = vpop.f32.mrf.mxu0
    %v2272 = vadd.f32 %v2229, %v2271
    %v2273 = vpop.f32.mrf.mxu0
    %v2274 = vadd.f32 %v2231, %v2273
    %2275 = vdwg.mxu0
    %v2276 = vadd.f32 %v1550, %v2268
    %v2277 = vadd.f32 %v1552, %v2270
    %v2278 = vadd.f32 %v1554, %v2272
    %v2279 = vadd.f32 %v1556, %v2274
    %s2280 = scalar_lea.vmem [#allocation2], 2304
    %v2281 = vld [vmem:[%s2280] sm:$0xff]
    %v2282 = vld [vmem:[%s2280 + $0x8] sm:$0xff]
    %v2283 = vld [vmem:[%s2280 + $0x10] sm:$0xff]
    %v2284 = vld [vmem:[%s2280 + $0x18] sm:$0xff]
    %v2285 = vld [vmem:[%s2280 + $0x20] sm:$0xff]
    %v2286 = vld [vmem:[%s2280 + $0x28] sm:$0xff]
    %v2287 = vld [vmem:[%s2280 + $0x30] sm:$0xff]
    %v2288 = vld [vmem:[%s2280 + $0x38] sm:$0xff]
    %v2289 = vld [vmem:[%s2280 + $0x40] sm:$0xff]
    %v2290 = vld [vmem:[%s2280 + $0x48] sm:$0xff]
    %v2291 = vld [vmem:[%s2280 + $0x50] sm:$0xff]
    %v2292 = vld [vmem:[%s2280 + $0x58] sm:$0xff]
    %v2293 = vld [vmem:[%s2280 + $0x60] sm:$0xff]
    %v2294 = vld [vmem:[%s2280 + $0x68] sm:$0xff]
    %v2295 = vld [vmem:[%s2280 + $0x70] sm:$0xff]
    %v2296 = vld [vmem:[%s2280 + $0x78] sm:$0xff]
    %v2297 = vld [vmem:[%s2280 + $0x80] sm:$0xff]
    %v2298 = vld [vmem:[%s2280 + $0x88] sm:$0xff]
    %v2299 = vld [vmem:[%s2280 + $0x90] sm:$0xff]
    %v2300 = vld [vmem:[%s2280 + $0x98] sm:$0xff]
    %v2301 = vld [vmem:[%s2280 + $0xa0] sm:$0xff]
    %v2302 = vld [vmem:[%s2280 + $0xa8] sm:$0xff]
    %v2303 = vld [vmem:[%s2280 + $0xb0] sm:$0xff]
    %v2304 = vld [vmem:[%s2280 + $0xb8] sm:$0xff]
    %v2305 = vld [vmem:[%s2280 + $0xc0] sm:$0xff]
    %v2306 = vld [vmem:[%s2280 + $0xc8] sm:$0xff]
    %v2307 = vld [vmem:[%s2280 + $0xd0] sm:$0xff]
    %v2308 = vld [vmem:[%s2280 + $0xd8] sm:$0xff]
    %v2309 = vld [vmem:[%s2280 + $0xe0] sm:$0xff]
    %v2310 = vld [vmem:[%s2280 + $0xe8] sm:$0xff]
    %v2311 = vld [vmem:[%s2280 + $0xf0] sm:$0xff]
    %v2312 = vld [vmem:[%s2280 + $0xf8] sm:$0xff]
    %v2313 = vld [vmem:[%s2280 + $0x100] sm:$0xff]
    %v2314 = vld [vmem:[%s2280 + $0x108] sm:$0xff]
    %v2315 = vld [vmem:[%s2280 + $0x110] sm:$0xff]
    %v2316 = vld [vmem:[%s2280 + $0x118] sm:$0xff]
    %v2317 = vld [vmem:[%s2280 + $0x120] sm:$0xff]
    %v2318 = vld [vmem:[%s2280 + $0x128] sm:$0xff]
    %v2319 = vld [vmem:[%s2280 + $0x130] sm:$0xff]
    %v2320 = vld [vmem:[%s2280 + $0x138] sm:$0xff]
    %v2321 = vld [vmem:[%s2280 + $0x140] sm:$0xff]
    %v2322 = vld [vmem:[%s2280 + $0x148] sm:$0xff]
    %v2323 = vld [vmem:[%s2280 + $0x150] sm:$0xff]
    %v2324 = vld [vmem:[%s2280 + $0x158] sm:$0xff]
    %v2325 = vld [vmem:[%s2280 + $0x160] sm:$0xff]
    %v2326 = vld [vmem:[%s2280 + $0x168] sm:$0xff]
    %v2327 = vld [vmem:[%s2280 + $0x170] sm:$0xff]
    %v2328 = vld [vmem:[%s2280 + $0x178] sm:$0xff]
    %v2329 = vld [vmem:[%s2280 + $0x180] sm:$0xff]
    %v2330 = vld [vmem:[%s2280 + $0x188] sm:$0xff]
    %v2331 = vld [vmem:[%s2280 + $0x190] sm:$0xff]
    %v2332 = vld [vmem:[%s2280 + $0x198] sm:$0xff]
    %v2333 = vld [vmem:[%s2280 + $0x1a0] sm:$0xff]
    %v2334 = vld [vmem:[%s2280 + $0x1a8] sm:$0xff]
    %v2335 = vld [vmem:[%s2280 + $0x1b0] sm:$0xff]
    %v2336 = vld [vmem:[%s2280 + $0x1b8] sm:$0xff]
    %v2337 = vld [vmem:[%s2280 + $0x1c0] sm:$0xff]
    %v2338 = vld [vmem:[%s2280 + $0x1c8] sm:$0xff]
    %v2339 = vld [vmem:[%s2280 + $0x1d0] sm:$0xff]
    %v2340 = vld [vmem:[%s2280 + $0x1d8] sm:$0xff]
    %v2341 = vld [vmem:[%s2280 + $0x1e0] sm:$0xff]
    %v2342 = vld [vmem:[%s2280 + $0x1e8] sm:$0xff]
    %v2343 = vld [vmem:[%s2280 + $0x1f0] sm:$0xff]
    %v2344 = vld [vmem:[%s2280 + $0x1f8] sm:$0xff]
    %v2345 = vld [vmem:[%s2280 + $0x200] sm:$0xff]
    %v2346 = vld [vmem:[%s2280 + $0x208] sm:$0xff]
    %v2347 = vld [vmem:[%s2280 + $0x210] sm:$0xff]
    %v2348 = vld [vmem:[%s2280 + $0x218] sm:$0xff]
    %v2349 = vld [vmem:[%s2280 + $0x220] sm:$0xff]
    %v2350 = vld [vmem:[%s2280 + $0x228] sm:$0xff]
    %v2351 = vld [vmem:[%s2280 + $0x230] sm:$0xff]
    %v2352 = vld [vmem:[%s2280 + $0x238] sm:$0xff]
    %v2353 = vld [vmem:[%s2280 + $0x240] sm:$0xff]
    %v2354 = vld [vmem:[%s2280 + $0x248] sm:$0xff]
    %v2355 = vld [vmem:[%s2280 + $0x250] sm:$0xff]
    %v2356 = vld [vmem:[%s2280 + $0x258] sm:$0xff]
    %v2357 = vld [vmem:[%s2280 + $0x260] sm:$0xff]
    %v2358 = vld [vmem:[%s2280 + $0x268] sm:$0xff]
    %v2359 = vld [vmem:[%s2280 + $0x270] sm:$0xff]
    %v2360 = vld [vmem:[%s2280 + $0x278] sm:$0xff]
    %v2361 = vld [vmem:[%s2280 + $0x280] sm:$0xff]
    %v2362 = vld [vmem:[%s2280 + $0x288] sm:$0xff]
    %v2363 = vld [vmem:[%s2280 + $0x290] sm:$0xff]
    %v2364 = vld [vmem:[%s2280 + $0x298] sm:$0xff]
    %v2365 = vld [vmem:[%s2280 + $0x2a0] sm:$0xff]
    %v2366 = vld [vmem:[%s2280 + $0x2a8] sm:$0xff]
    %v2367 = vld [vmem:[%s2280 + $0x2b0] sm:$0xff]
    %v2368 = vld [vmem:[%s2280 + $0x2b8] sm:$0xff]
    %v2369 = vld [vmem:[%s2280 + $0x2c0] sm:$0xff]
    %v2370 = vld [vmem:[%s2280 + $0x2c8] sm:$0xff]
    %v2371 = vld [vmem:[%s2280 + $0x2d0] sm:$0xff]
    %v2372 = vld [vmem:[%s2280 + $0x2d8] sm:$0xff]
    %v2373 = vld [vmem:[%s2280 + $0x2e0] sm:$0xff]
    %v2374 = vld [vmem:[%s2280 + $0x2e8] sm:$0xff]
    %v2375 = vld [vmem:[%s2280 + $0x2f0] sm:$0xff]
    %v2376 = vld [vmem:[%s2280 + $0x2f8] sm:$0xff]
    %v2380 = vunpack.c.l.b16 %v66
    %v2381 = vunpack.c.h.b16 %v66
    %v2382 = vunpack.c.l.b16 %v67
    %v2383 = vunpack.c.h.b16 %v67
    %v2384 = vunpack.c.l.b16 %v68
    %v2385 = vunpack.c.h.b16 %v68
    %v2386 = vpack.c.b16 %v2380, %v2380
    %v2387 = vpack.c.b16 %v2381, %v2381
    %v2388 = vpack.c.b16 %v2382, %v2382
    %v2389 = vpack.c.b16 %v2383, %v2383
    %v2390 = vpack.c.b16 %v2384, %v2384
    %v2391 = vpack.c.b16 %v2385, %v2385
    %vm2392 = vsmask.f32 6400
    %v2393 = vrot.slane %v287, 1
    %v2394 = vrot.slane %v289, 2
    %v2395 = vor.u32 %v2393, %v2394
    %v2397 = vshll.u32 %v2386, 16
    %v2399 = vrot.slane %v2397, 2
    %v2400 = vsel %vm2392, %v2395, %v2399
    %v2401 = vrot.slane %v294, 1
    %v2402 = vrot.slane %v296, 2
    %v2403 = vor.u32 %v2401, %v2402
    %v2405 = vshll.u32 %v2387, 16
    %v2407 = vrot.slane %v2405, 2
    %v2408 = vsel %vm2392, %v2403, %v2407
    %v2409 = vrot.slane %v301, 1
    %v2410 = vrot.slane %v303, 2
    %v2411 = vor.u32 %v2409, %v2410
    %v2413 = vshll.u32 %v2388, 16
    %v2415 = vrot.slane %v2413, 2
    %v2416 = vsel %vm2392, %v2411, %v2415
    %v2417 = vrot.slane %v308, 1
    %v2418 = vrot.slane %v310, 2
    %v2419 = vor.u32 %v2417, %v2418
    %v2421 = vshll.u32 %v2389, 16
    %v2423 = vrot.slane %v2421, 2
    %v2424 = vsel %vm2392, %v2419, %v2423
    %v2425 = vrot.slane %v315, 1
    %v2426 = vrot.slane %v317, 2
    %v2427 = vor.u32 %v2425, %v2426
    %v2429 = vshll.u32 %v2390, 16
    %v2431 = vrot.slane %v2429, 2
    %v2432 = vsel %vm2392, %v2427, %v2431
    %v2433 = vrot.slane %v322, 1
    %v2434 = vrot.slane %v324, 2
    %v2435 = vor.u32 %v2433, %v2434
    %v2437 = vshll.u32 %v2391, 16
    %v2439 = vrot.slane %v2437, 2
    %v2440 = vsel %vm2392, %v2435, %v2439
    %v2543 = vunpack.c.l.b16 %v2281
    %v2544 = vunpack.c.h.b16 %v2281
    %v2545 = vunpack.c.l.b16 %v2282
    %v2546 = vunpack.c.h.b16 %v2282
    %v2547 = vunpack.c.l.b16 %v2283
    %v2548 = vunpack.c.h.b16 %v2283
    %v2549 = vunpack.c.l.b16 %v2284
    %v2550 = vunpack.c.h.b16 %v2284
    %v2551 = vunpack.c.l.b16 %v2285
    %v2552 = vunpack.c.h.b16 %v2285
    %v2553 = vunpack.c.l.b16 %v2286
    %v2554 = vunpack.c.h.b16 %v2286
    %v2555 = vunpack.c.l.b16 %v2287
    %v2556 = vunpack.c.h.b16 %v2287
    %v2557 = vunpack.c.l.b16 %v2288
    %v2558 = vunpack.c.h.b16 %v2288
    %v2559 = vunpack.c.l.b16 %v2289
    %v2560 = vunpack.c.h.b16 %v2289
    %v2561 = vunpack.c.l.b16 %v2290
    %v2562 = vunpack.c.h.b16 %v2290
    %v2563 = vunpack.c.l.b16 %v2291
    %v2564 = vunpack.c.h.b16 %v2291
    %v2565 = vunpack.c.l.b16 %v2292
    %v2566 = vunpack.c.h.b16 %v2292
    %v2567 = vunpack.c.l.b16 %v2293
    %v2568 = vunpack.c.h.b16 %v2293
    %v2569 = vunpack.c.l.b16 %v2294
    %v2570 = vunpack.c.h.b16 %v2294
    %v2571 = vunpack.c.l.b16 %v2295
    %v2572 = vunpack.c.h.b16 %v2295
    %v2573 = vunpack.c.l.b16 %v2296
    %v2574 = vunpack.c.h.b16 %v2296
    %v2575 = vunpack.c.l.b16 %v2297
    %v2576 = vunpack.c.h.b16 %v2297
    %v2577 = vunpack.c.l.b16 %v2298
    %v2578 = vunpack.c.h.b16 %v2298
    %v2579 = vunpack.c.l.b16 %v2299
    %v2580 = vunpack.c.h.b16 %v2299
    %v2581 = vunpack.c.l.b16 %v2300
    %v2582 = vunpack.c.h.b16 %v2300
    %v2583 = vunpack.c.l.b16 %v2301
    %v2584 = vunpack.c.h.b16 %v2301
    %v2585 = vunpack.c.l.b16 %v2302
    %v2586 = vunpack.c.h.b16 %v2302
    %v2587 = vunpack.c.l.b16 %v2303
    %v2588 = vunpack.c.h.b16 %v2303
    %v2589 = vunpack.c.l.b16 %v2304
    %v2590 = vunpack.c.h.b16 %v2304
    %v2591 = vunpack.c.l.b16 %v2305
    %v2592 = vunpack.c.h.b16 %v2305
    %v2593 = vunpack.c.l.b16 %v2306
    %v2594 = vunpack.c.h.b16 %v2306
    %v2595 = vunpack.c.l.b16 %v2307
    %v2596 = vunpack.c.h.b16 %v2307
    %v2597 = vunpack.c.l.b16 %v2308
    %v2598 = vunpack.c.h.b16 %v2308
    %v2599 = vunpack.c.l.b16 %v2309
    %v2600 = vunpack.c.h.b16 %v2309
    %v2601 = vunpack.c.l.b16 %v2310
    %v2602 = vunpack.c.h.b16 %v2310
    %v2603 = vunpack.c.l.b16 %v2311
    %v2604 = vunpack.c.h.b16 %v2311
    %v2605 = vunpack.c.l.b16 %v2312
    %v2606 = vunpack.c.h.b16 %v2312
    %v2607 = vunpack.c.l.b16 %v2313
    %v2608 = vunpack.c.h.b16 %v2313
    %v2609 = vunpack.c.l.b16 %v2314
    %v2610 = vunpack.c.h.b16 %v2314
    %v2611 = vunpack.c.l.b16 %v2315
    %v2612 = vunpack.c.h.b16 %v2315
    %v2613 = vunpack.c.l.b16 %v2316
    %v2614 = vunpack.c.h.b16 %v2316
    %v2615 = vunpack.c.l.b16 %v2317
    %v2616 = vunpack.c.h.b16 %v2317
    %v2617 = vunpack.c.l.b16 %v2318
    %v2618 = vunpack.c.h.b16 %v2318
    %v2619 = vunpack.c.l.b16 %v2319
    %v2620 = vunpack.c.h.b16 %v2319
    %v2621 = vunpack.c.l.b16 %v2320
    %v2622 = vunpack.c.h.b16 %v2320
    %v2623 = vunpack.c.l.b16 %v2321
    %v2624 = vunpack.c.h.b16 %v2321
    %v2625 = vunpack.c.l.b16 %v2322
    %v2626 = vunpack.c.h.b16 %v2322
    %v2627 = vunpack.c.l.b16 %v2323
    %v2628 = vunpack.c.h.b16 %v2323
    %v2629 = vunpack.c.l.b16 %v2324
    %v2630 = vunpack.c.h.b16 %v2324
    %v2631 = vunpack.c.l.b16 %v2325
    %v2632 = vunpack.c.h.b16 %v2325
    %v2633 = vunpack.c.l.b16 %v2326
    %v2634 = vunpack.c.h.b16 %v2326
    %v2635 = vunpack.c.l.b16 %v2327
    %v2636 = vunpack.c.h.b16 %v2327
    %v2637 = vunpack.c.l.b16 %v2328
    %v2638 = vunpack.c.h.b16 %v2328
    %v2639 = vunpack.c.l.b16 %v2329
    %v2640 = vunpack.c.h.b16 %v2329
    %v2641 = vunpack.c.l.b16 %v2330
    %v2642 = vunpack.c.h.b16 %v2330
    %v2643 = vunpack.c.l.b16 %v2331
    %v2644 = vunpack.c.h.b16 %v2331
    %v2645 = vunpack.c.l.b16 %v2332
    %v2646 = vunpack.c.h.b16 %v2332
    %v2647 = vunpack.c.l.b16 %v2333
    %v2648 = vunpack.c.h.b16 %v2333
    %v2649 = vunpack.c.l.b16 %v2334
    %v2650 = vunpack.c.h.b16 %v2334
    %v2651 = vunpack.c.l.b16 %v2335
    %v2652 = vunpack.c.h.b16 %v2335
    %v2653 = vunpack.c.l.b16 %v2336
    %v2654 = vunpack.c.h.b16 %v2336
    %v2655 = vunpack.c.l.b16 %v2337
    %v2656 = vunpack.c.h.b16 %v2337
    %v2657 = vunpack.c.l.b16 %v2338
    %v2658 = vunpack.c.h.b16 %v2338
    %v2659 = vunpack.c.l.b16 %v2339
    %v2660 = vunpack.c.h.b16 %v2339
    %v2661 = vunpack.c.l.b16 %v2340
    %v2662 = vunpack.c.h.b16 %v2340
    %v2663 = vunpack.c.l.b16 %v2341
    %v2664 = vunpack.c.h.b16 %v2341
    %v2665 = vunpack.c.l.b16 %v2342
    %v2666 = vunpack.c.h.b16 %v2342
    %v2667 = vunpack.c.l.b16 %v2343
    %v2668 = vunpack.c.h.b16 %v2343
    %v2669 = vunpack.c.l.b16 %v2344
    %v2670 = vunpack.c.h.b16 %v2344
    %v2671 = vunpack.c.l.b16 %v2345
    %v2672 = vunpack.c.h.b16 %v2345
    %v2673 = vunpack.c.l.b16 %v2346
    %v2674 = vunpack.c.h.b16 %v2346
    %v2675 = vunpack.c.l.b16 %v2347
    %v2676 = vunpack.c.h.b16 %v2347
    %v2677 = vunpack.c.l.b16 %v2348
    %v2678 = vunpack.c.h.b16 %v2348
    %v2679 = vunpack.c.l.b16 %v2349
    %v2680 = vunpack.c.h.b16 %v2349
    %v2681 = vunpack.c.l.b16 %v2350
    %v2682 = vunpack.c.h.b16 %v2350
    %v2683 = vunpack.c.l.b16 %v2351
    %v2684 = vunpack.c.h.b16 %v2351
    %v2685 = vunpack.c.l.b16 %v2352
    %v2686 = vunpack.c.h.b16 %v2352
    %v2687 = vunpack.c.l.b16 %v2353
    %v2688 = vunpack.c.h.b16 %v2353
    %v2689 = vunpack.c.l.b16 %v2354
    %v2690 = vunpack.c.h.b16 %v2354
    %v2691 = vunpack.c.l.b16 %v2355
    %v2692 = vunpack.c.h.b16 %v2355
    %v2693 = vunpack.c.l.b16 %v2356
    %v2694 = vunpack.c.h.b16 %v2356
    %v2695 = vunpack.c.l.b16 %v2357
    %v2696 = vunpack.c.h.b16 %v2357
    %v2697 = vunpack.c.l.b16 %v2358
    %v2698 = vunpack.c.h.b16 %v2358
    %v2699 = vunpack.c.l.b16 %v2359
    %v2700 = vunpack.c.h.b16 %v2359
    %v2701 = vunpack.c.l.b16 %v2360
    %v2702 = vunpack.c.h.b16 %v2360
    %v2703 = vunpack.c.l.b16 %v2361
    %v2704 = vunpack.c.h.b16 %v2361
    %v2705 = vunpack.c.l.b16 %v2362
    %v2706 = vunpack.c.h.b16 %v2362
    %v2707 = vunpack.c.l.b16 %v2363
    %v2708 = vunpack.c.h.b16 %v2363
    %v2709 = vunpack.c.l.b16 %v2364
    %v2710 = vunpack.c.h.b16 %v2364
    %v2711 = vunpack.c.l.b16 %v2365
    %v2712 = vunpack.c.h.b16 %v2365
    %v2713 = vunpack.c.l.b16 %v2366
    %v2714 = vunpack.c.h.b16 %v2366
    %v2715 = vunpack.c.l.b16 %v2367
    %v2716 = vunpack.c.h.b16 %v2367
    %v2717 = vunpack.c.l.b16 %v2368
    %v2718 = vunpack.c.h.b16 %v2368
    %v2719 = vunpack.c.l.b16 %v2369
    %v2720 = vunpack.c.h.b16 %v2369
    %v2721 = vunpack.c.l.b16 %v2370
    %v2722 = vunpack.c.h.b16 %v2370
    %v2723 = vunpack.c.l.b16 %v2371
    %v2724 = vunpack.c.h.b16 %v2371
    %v2725 = vunpack.c.l.b16 %v2372
    %v2726 = vunpack.c.h.b16 %v2372
    %v2727 = vunpack.c.l.b16 %v2373
    %v2728 = vunpack.c.h.b16 %v2373
    %v2729 = vunpack.c.l.b16 %v2374
    %v2730 = vunpack.c.h.b16 %v2374
    %v2731 = vunpack.c.l.b16 %v2375
    %v2732 = vunpack.c.h.b16 %v2375
    %v2733 = vunpack.c.l.b16 %v2376
    %v2734 = vunpack.c.h.b16 %v2376
    %v2735 = vpack.c.b16 %v2545, %v2543
    %v2736 = vpack.c.b16 %v2546, %v2544
    %v2737 = vpack.c.b16 %v2549, %v2547
    %v2738 = vpack.c.b16 %v2550, %v2548
    %v2739 = vpack.c.b16 %v2553, %v2551
    %v2740 = vpack.c.b16 %v2554, %v2552
    %v2741 = vpack.c.b16 %v2557, %v2555
    %v2742 = vpack.c.b16 %v2558, %v2556
    %v2743 = vpack.c.b16 %v2561, %v2559
    %v2744 = vpack.c.b16 %v2562, %v2560
    %v2745 = vpack.c.b16 %v2565, %v2563
    %v2746 = vpack.c.b16 %v2566, %v2564
    %v2747 = vpack.c.b16 %v2569, %v2567
    %v2748 = vpack.c.b16 %v2570, %v2568
    %v2749 = vpack.c.b16 %v2573, %v2571
    %v2750 = vpack.c.b16 %v2574, %v2572
    %v2751 = vpack.c.b16 %v2577, %v2575
    %v2752 = vpack.c.b16 %v2578, %v2576
    %v2753 = vpack.c.b16 %v2581, %v2579
    %v2754 = vpack.c.b16 %v2582, %v2580
    %v2755 = vpack.c.b16 %v2585, %v2583
    %v2756 = vpack.c.b16 %v2586, %v2584
    %v2757 = vpack.c.b16 %v2589, %v2587
    %v2758 = vpack.c.b16 %v2590, %v2588
    %v2759 = vpack.c.b16 %v2593, %v2591
    %v2760 = vpack.c.b16 %v2594, %v2592
    %v2761 = vpack.c.b16 %v2597, %v2595
    %v2762 = vpack.c.b16 %v2598, %v2596
    %v2763 = vpack.c.b16 %v2601, %v2599
    %v2764 = vpack.c.b16 %v2602, %v2600
    %v2765 = vpack.c.b16 %v2605, %v2603
    %v2766 = vpack.c.b16 %v2606, %v2604
    %v2767 = vpack.c.b16 %v2609, %v2607
    %v2768 = vpack.c.b16 %v2610, %v2608
    %v2769 = vpack.c.b16 %v2613, %v2611
    %v2770 = vpack.c.b16 %v2614, %v2612
    %v2771 = vpack.c.b16 %v2617, %v2615
    %v2772 = vpack.c.b16 %v2618, %v2616
    %v2773 = vpack.c.b16 %v2621, %v2619
    %v2774 = vpack.c.b16 %v2622, %v2620
    %v2775 = vpack.c.b16 %v2625, %v2623
    %v2776 = vpack.c.b16 %v2626, %v2624
    %v2777 = vpack.c.b16 %v2629, %v2627
    %v2778 = vpack.c.b16 %v2630, %v2628
    %v2779 = vpack.c.b16 %v2633, %v2631
    %v2780 = vpack.c.b16 %v2634, %v2632
    %v2781 = vpack.c.b16 %v2637, %v2635
    %v2782 = vpack.c.b16 %v2638, %v2636
    %v2783 = vpack.c.b16 %v2641, %v2639
    %v2784 = vpack.c.b16 %v2642, %v2640
    %v2785 = vpack.c.b16 %v2645, %v2643
    %v2786 = vpack.c.b16 %v2646, %v2644
    %v2787 = vpack.c.b16 %v2649, %v2647
    %v2788 = vpack.c.b16 %v2650, %v2648
    %v2789 = vpack.c.b16 %v2653, %v2651
    %v2790 = vpack.c.b16 %v2654, %v2652
    %v2791 = vpack.c.b16 %v2657, %v2655
    %v2792 = vpack.c.b16 %v2658, %v2656
    %v2793 = vpack.c.b16 %v2661, %v2659
    %v2794 = vpack.c.b16 %v2662, %v2660
    %v2795 = vpack.c.b16 %v2665, %v2663
    %v2796 = vpack.c.b16 %v2666, %v2664
    %v2797 = vpack.c.b16 %v2669, %v2667
    %v2798 = vpack.c.b16 %v2670, %v2668
    %v2799 = vpack.c.b16 %v2673, %v2671
    %v2800 = vpack.c.b16 %v2674, %v2672
    %v2801 = vpack.c.b16 %v2677, %v2675
    %v2802 = vpack.c.b16 %v2678, %v2676
    %v2803 = vpack.c.b16 %v2681, %v2679
    %v2804 = vpack.c.b16 %v2682, %v2680
    %v2805 = vpack.c.b16 %v2685, %v2683
    %v2806 = vpack.c.b16 %v2686, %v2684
    %v2807 = vpack.c.b16 %v2689, %v2687
    %v2808 = vpack.c.b16 %v2690, %v2688
    %v2809 = vpack.c.b16 %v2693, %v2691
    %v2810 = vpack.c.b16 %v2694, %v2692
    %v2811 = vpack.c.b16 %v2697, %v2695
    %v2812 = vpack.c.b16 %v2698, %v2696
    %v2813 = vpack.c.b16 %v2701, %v2699
    %v2814 = vpack.c.b16 %v2702, %v2700
    %v2815 = vpack.c.b16 %v2705, %v2703
    %v2816 = vpack.c.b16 %v2706, %v2704
    %v2817 = vpack.c.b16 %v2709, %v2707
    %v2818 = vpack.c.b16 %v2710, %v2708
    %v2819 = vpack.c.b16 %v2713, %v2711
    %v2820 = vpack.c.b16 %v2714, %v2712
    %v2821 = vpack.c.b16 %v2717, %v2715
    %v2822 = vpack.c.b16 %v2718, %v2716
    %v2823 = vpack.c.b16 %v2721, %v2719
    %v2824 = vpack.c.b16 %v2722, %v2720
    %v2825 = vpack.c.b16 %v2725, %v2723
    %v2826 = vpack.c.b16 %v2726, %v2724
    %v2827 = vpack.c.b16 %v2729, %v2727
    %v2828 = vpack.c.b16 %v2730, %v2728
    %v2829 = vpack.c.b16 %v2733, %v2731
    %v2830 = vpack.c.b16 %v2734, %v2732
    %2927 = vmatprep.subr.bf16.mxu0 %v2750
    %2928 = vmatpush1.bf16.msra.mxu0 %v2749
    %2929 = vmatprep.subr.bf16.mxu0 %v2748
    %2930 = vmatpush1.bf16.msra.mxu0 %v2747
    %2931 = vmatprep.subr.bf16.mxu0 %v2746
    %2932 = vmatpush1.bf16.msra.mxu0 %v2745
    %2933 = vmatprep.subr.bf16.mxu0 %v2744
    %2934 = vmatpush1.bf16.msra.mxu0 %v2743
    %2935 = vmatprep.subr.bf16.mxu0 %v2742
    %2936 = vmatpush1.bf16.msra.mxu0 %v2741
    %2937 = vmatprep.subr.bf16.mxu0 %v2740
    %2938 = vmatpush1.bf16.msra.mxu0 %v2739
    %2939 = vmatprep.subr.bf16.mxu0 %v2738
    %2940 = vmatpush1.bf16.msra.mxu0 %v2737
    %2941 = vmatprep.subr.bf16.mxu0 %v2736
    %2942 = vmatpush1.bf16.msra.mxu0 %v2735
    %2943 = vmatprep.subr.bf16.mxu0 %v2766
    %2944 = vmatpush2.bf16.msra.mxu0 %v2765
    %2945 = vmatprep.subr.bf16.mxu0 %v2764
    %2946 = vmatpush2.bf16.msra.mxu0 %v2763
    %2947 = vmatprep.subr.bf16.mxu0 %v2762
    %2948 = vmatpush2.bf16.msra.mxu0 %v2761
    %2949 = vmatprep.subr.bf16.mxu0 %v2760
    %2950 = vmatpush2.bf16.msra.mxu0 %v2759
    %2951 = vmatprep.subr.bf16.mxu0 %v2758
    %2952 = vmatpush2.bf16.msra.mxu0 %v2757
    %2953 = vmatprep.subr.bf16.mxu0 %v2756
    %2954 = vmatpush2.bf16.msra.mxu0 %v2755
    %2955 = vmatprep.subr.bf16.mxu0 %v2754
    %2956 = vmatpush2.bf16.msra.mxu0 %v2753
    %2957 = vmatprep.subr.bf16.mxu0 %v2752
    %2958 = vmatpush2.bf16.msra.mxu0 %v2751
    %2959 = vmatprep.mubr.bf16.mxu0 %v2408
    %2960 = vmatmul.mubr.bf16.gmra.mxu0 %v2400
    %v2961 = vpop.f32.mrf.mxu0
    %v2962 = vadd.f32 0.0, %v2961
    %v2963 = vpop.f32.mrf.mxu0
    %v2964 = vadd.f32 0.0, %v2963
    %v2965 = vpop.f32.mrf.mxu0
    %v2966 = vadd.f32 0.0, %v2965
    %v2967 = vpop.f32.mrf.mxu0
    %v2968 = vadd.f32 0.0, %v2967
    %2969 = vdwg.mxu0
    %2970 = vmatprep.subr.bf16.mxu0 %v2782
    %2971 = vmatpush1.bf16.msra.mxu0 %v2781
    %2972 = vmatprep.subr.bf16.mxu0 %v2780
    %2973 = vmatpush1.bf16.msra.mxu0 %v2779
    %2974 = vmatprep.subr.bf16.mxu0 %v2778
    %2975 = vmatpush1.bf16.msra.mxu0 %v2777
    %2976 = vmatprep.subr.bf16.mxu0 %v2776
    %2977 = vmatpush1.bf16.msra.mxu0 %v2775
    %2978 = vmatprep.subr.bf16.mxu0 %v2774
    %2979 = vmatpush1.bf16.msra.mxu0 %v2773
    %2980 = vmatprep.subr.bf16.mxu0 %v2772
    %2981 = vmatpush1.bf16.msra.mxu0 %v2771
    %2982 = vmatprep.subr.bf16.mxu0 %v2770
    %2983 = vmatpush1.bf16.msra.mxu0 %v2769
    %2984 = vmatprep.subr.bf16.mxu0 %v2768
    %2985 = vmatpush1.bf16.msra.mxu0 %v2767
    %2986 = vmatprep.subr.bf16.mxu0 %v2798
    %2987 = vmatpush2.bf16.msra.mxu0 %v2797
    %2988 = vmatprep.subr.bf16.mxu0 %v2796
    %2989 = vmatpush2.bf16.msra.mxu0 %v2795
    %2990 = vmatprep.subr.bf16.mxu0 %v2794
    %2991 = vmatpush2.bf16.msra.mxu0 %v2793
    %2992 = vmatprep.subr.bf16.mxu0 %v2792
    %2993 = vmatpush2.bf16.msra.mxu0 %v2791
    %2994 = vmatprep.subr.bf16.mxu0 %v2790
    %2995 = vmatpush2.bf16.msra.mxu0 %v2789
    %2996 = vmatprep.subr.bf16.mxu0 %v2788
    %2997 = vmatpush2.bf16.msra.mxu0 %v2787
    %2998 = vmatprep.subr.bf16.mxu0 %v2786
    %2999 = vmatpush2.bf16.msra.mxu0 %v2785
    %3000 = vmatprep.subr.bf16.mxu0 %v2784
    %3001 = vmatpush2.bf16.msra.mxu0 %v2783
    %3002 = vmatprep.mubr.bf16.mxu0 %v2424
    %3003 = vmatmul.mubr.bf16.gmra.mxu0 %v2416
    %v3004 = vpop.f32.mrf.mxu0
    %v3005 = vadd.f32 %v2962, %v3004
    %v3006 = vpop.f32.mrf.mxu0
    %v3007 = vadd.f32 %v2964, %v3006
    %v3008 = vpop.f32.mrf.mxu0
    %v3009 = vadd.f32 %v2966, %v3008
    %v3010 = vpop.f32.mrf.mxu0
    %v3011 = vadd.f32 %v2968, %v3010
    %3012 = vdwg.mxu0
    %3013 = vmatprep.subr.bf16.mxu0 %v2814
    %3014 = vmatpush1.bf16.msra.mxu0 %v2813
    %3015 = vmatprep.subr.bf16.mxu0 %v2812
    %3016 = vmatpush1.bf16.msra.mxu0 %v2811
    %3017 = vmatprep.subr.bf16.mxu0 %v2810
    %3018 = vmatpush1.bf16.msra.mxu0 %v2809
    %3019 = vmatprep.subr.bf16.mxu0 %v2808
    %3020 = vmatpush1.bf16.msra.mxu0 %v2807
    %3021 = vmatprep.subr.bf16.mxu0 %v2806
    %3022 = vmatpush1.bf16.msra.mxu0 %v2805
    %3023 = vmatprep.subr.bf16.mxu0 %v2804
    %3024 = vmatpush1.bf16.msra.mxu0 %v2803
    %3025 = vmatprep.subr.bf16.mxu0 %v2802
    %3026 = vmatpush1.bf16.msra.mxu0 %v2801
    %3027 = vmatprep.subr.bf16.mxu0 %v2800
    %3028 = vmatpush1.bf16.msra.mxu0 %v2799
    %3029 = vmatprep.subr.bf16.mxu0 %v2830
    %3030 = vmatpush2.bf16.msra.mxu0 %v2829
    %3031 = vmatprep.subr.bf16.mxu0 %v2828
    %3032 = vmatpush2.bf16.msra.mxu0 %v2827
    %3033 = vmatprep.subr.bf16.mxu0 %v2826
    %3034 = vmatpush2.bf16.msra.mxu0 %v2825
    %3035 = vmatprep.subr.bf16.mxu0 %v2824
    %3036 = vmatpush2.bf16.msra.mxu0 %v2823
    %3037 = vmatprep.subr.bf16.mxu0 %v2822
    %3038 = vmatpush2.bf16.msra.mxu0 %v2821
    %3039 = vmatprep.subr.bf16.mxu0 %v2820
    %3040 = vmatpush2.bf16.msra.mxu0 %v2819
    %3041 = vmatprep.subr.bf16.mxu0 %v2818
    %3042 = vmatpush2.bf16.msra.mxu0 %v2817
    %3043 = vmatprep.subr.bf16.mxu0 %v2816
    %3044 = vmatpush2.bf16.msra.mxu0 %v2815
    %3045 = vmatprep.mubr.bf16.mxu0 %v2440
    %3046 = vmatmul.mubr.bf16.gmra.mxu0 %v2432
    %v3047 = vpop.f32.mrf.mxu0
    %v3048 = vadd.f32 %v3005, %v3047
    %v3049 = vpop.f32.mrf.mxu0
    %v3050 = vadd.f32 %v3007, %v3049
    %v3051 = vpop.f32.mrf.mxu0
    %v3052 = vadd.f32 %v3009, %v3051
    %v3053 = vpop.f32.mrf.mxu0
    %v3054 = vadd.f32 %v3011, %v3053
    %3055 = vdwg.mxu0
    %v3056 = vadd.f32 %v2276, %v3048
    %v3057 = vadd.f32 %v2277, %v3050
    %v3058 = vadd.f32 %v2278, %v3052
    %v3059 = vadd.f32 %v2279, %v3054
    %v3060 = vsel %vm55, %v3056, -inf
    %v3061 = vsel %vm56, %v3057, -inf
    %v3062 = vsel %vm57, %v3058, -inf
    %v3063 = vsel %vm58, %v3059, -inf
    %vm3064 = vcmask 1045504
    %v3065 = vsel %vm3064, %v3062, -inf
    %v3066 = vmax.f32 %v3060, %v3065
    %v3067 = vrot.slane %v3066, 4
    %v3068 = vmax.f32 %v3066, %v3067
    %v3069 = vrot.slane %v3068, 2
    %v3070 = vmax.f32 %v3068, %v3069
    %v3071 = vrot.slane %v3070, 1
    %v3072 = vmax.f32 %v3070, %v3071
    %v3073 = vsel %vm3064, %v3063, -inf
    %v3074 = vmax.f32 %v3061, %v3073
    %v3075 = vrot.slane %v3074, 4
    %v3076 = vmax.f32 %v3074, %v3075
    %v3077 = vrot.slane %v3076, 2
    %v3078 = vmax.f32 %v3076, %v3077
    %v3079 = vrot.slane %v3078, 1
    %v3080 = vmax.f32 %v3078, %v3079
    %v3082 = vlaneseq
    %v3083 = vshrl.u32 %v3082, 7
    %v3084 = vsub.s32 0, %v3083
    %v3085 = vrot.slane %v59, %v3084
    %v3086 = vlaneseq
    %v3087 = vshrl.u32 %v3086, 7
    %v3088 = vsub.s32 1, %v3087
    %v3089 = vrot.slane %v59, %v3088
    %v3092 = vadd.f32 %v3072, %v3085
    %v3093 = vadd.f32 %v3080, %v3089
    %v3094 = vmax.f32 %v3092, 0.0
    %v3095 = vmax.f32 %v3093, 0.0
    %s3096 = scalar_lea.vmem %s0, 72
    %v3097 = vld [vmem:[%s3096] sm:$0xff]
    %v3098 = vld [vmem:[%s3096 + $0x8] sm:$0xff]
    %v3099 = vld [vmem:[%s3096 + $0x10] sm:$0xff]
    %v3100 = vld [vmem:[%s3096 + $0x18] sm:$0xff]
    %v3101 = vld [vmem:[%s3096 + $0x20] sm:$0xff]
    %v3102 = vld [vmem:[%s3096 + $0x28] sm:$0xff]
    %v3103 = vld [vmem:[%s3096 + $0x30] sm:$0x11]
    %v3104 = vld [vmem:[%s3096 + $0x38] sm:$0x11]
    %v3105 = vld [vmem:[%s3096 + $0x40] sm:$0x11]
    %v3112 = vunpack.c.l.b16 %v3097
    %v3113 = vunpack.c.h.b16 %v3097
    %v3114 = vunpack.c.l.b16 %v3098
    %v3115 = vunpack.c.h.b16 %v3098
    %v3116 = vunpack.c.l.b16 %v3099
    %v3117 = vunpack.c.h.b16 %v3099
    %v3118 = vunpack.c.l.b16 %v3100
    %v3119 = vunpack.c.h.b16 %v3100
    %v3120 = vunpack.c.l.b16 %v3101
    %v3121 = vunpack.c.h.b16 %v3101
    %v3122 = vunpack.c.l.b16 %v3102
    %v3123 = vunpack.c.h.b16 %v3102
    %v3124 = vpack.c.b16 %v3118, %v3112
    %v3125 = vpack.c.b16 %v3119, %v3113
    %v3126 = vpack.c.b16 %v3120, %v3114
    %v3127 = vpack.c.b16 %v3121, %v3115
    %v3128 = vpack.c.b16 %v3122, %v3116
    %v3129 = vpack.c.b16 %v3123, %v3117
    %v3131 = vshrl.u32 %v3124, 16
    %v3133 = vshll.u32 %v3124, 16
    %v3135 = vrot.slane %v3133, 1
    %v3136 = vor.u32 %v3131, %v3135
    %v3138 = vshrl.u32 %v3125, 16
    %v3140 = vshll.u32 %v3125, 16
    %v3142 = vrot.slane %v3140, 1
    %v3143 = vor.u32 %v3138, %v3142
    %v3145 = vshrl.u32 %v3126, 16
    %v3147 = vshll.u32 %v3126, 16
    %v3149 = vrot.slane %v3147, 1
    %v3150 = vor.u32 %v3145, %v3149
    %v3152 = vshrl.u32 %v3127, 16
    %v3154 = vshll.u32 %v3127, 16
    %v3156 = vrot.slane %v3154, 1
    %v3157 = vor.u32 %v3152, %v3156
    %v3159 = vshrl.u32 %v3128, 16
    %v3161 = vshll.u32 %v3128, 16
    %v3163 = vrot.slane %v3161, 1
    %v3164 = vor.u32 %v3159, %v3163
    %v3166 = vshrl.u32 %v3129, 16
    %v3168 = vshll.u32 %v3129, 16
    %v3170 = vrot.slane %v3168, 1
    %v3171 = vor.u32 %v3166, %v3170
    %3178 = vmatprep.subr.bf16.mxu0 %v637
    %3179 = vmatpush1.bf16.msra.mxu0 %v636
    %3180 = vmatprep.subr.bf16.mxu0 %v635
    %3181 = vmatpush1.bf16.msra.mxu0 %v634
    %3182 = vmatprep.subr.bf16.mxu0 %v633
    %3183 = vmatpush1.bf16.msra.mxu0 %v632
    %3184 = vmatprep.subr.bf16.mxu0 %v631
    %3185 = vmatpush1.bf16.msra.mxu0 %v630
    %3186 = vmatprep.subr.bf16.mxu0 %v629
    %3187 = vmatpush1.bf16.msra.mxu0 %v628
    %3188 = vmatprep.subr.bf16.mxu0 %v627
    %3189 = vmatpush1.bf16.msra.mxu0 %v626
    %3190 = vmatprep.subr.bf16.mxu0 %v625
    %3191 = vmatpush1.bf16.msra.mxu0 %v624
    %3192 = vmatprep.subr.bf16.mxu0 %v623
    %3193 = vmatpush1.bf16.msra.mxu0 %v622
    %3194 = vmatprep.subr.bf16.mxu0 %v653
    %3195 = vmatpush2.bf16.msra.mxu0 %v652
    %3196 = vmatprep.subr.bf16.mxu0 %v651
    %3197 = vmatpush2.bf16.msra.mxu0 %v650
    %3198 = vmatprep.subr.bf16.mxu0 %v649
    %3199 = vmatpush2.bf16.msra.mxu0 %v648
    %3200 = vmatprep.subr.bf16.mxu0 %v647
    %3201 = vmatpush2.bf16.msra.mxu0 %v646
    %3202 = vmatprep.subr.bf16.mxu0 %v645
    %3203 = vmatpush2.bf16.msra.mxu0 %v644
    %3204 = vmatprep.subr.bf16.mxu0 %v643
    %3205 = vmatpush2.bf16.msra.mxu0 %v642
    %3206 = vmatprep.subr.bf16.mxu0 %v641
    %3207 = vmatpush2.bf16.msra.mxu0 %v640
    %3208 = vmatprep.subr.bf16.mxu0 %v639
    %3209 = vmatpush2.bf16.msra.mxu0 %v638
    %3210 = vmatprep.mubr.bf16.mxu0 %v3143
    %3211 = vmatmul.mubr.bf16.gmra.mxu0 %v3136
    %v3212 = vpop.f32.mrf.mxu0
    %v3213 = vadd.f32 0.0, %v3212
    %v3214 = vpop.f32.mrf.mxu0
    %v3215 = vadd.f32 0.0, %v3214
    %v3216 = vpop.f32.mrf.mxu0
    %v3217 = vadd.f32 0.0, %v3216
    %v3218 = vpop.f32.mrf.mxu0
    %v3219 = vadd.f32 0.0, %v3218
    %3220 = vdwg.mxu0
    %3221 = vmatprep.subr.bf16.mxu0 %v669
    %3222 = vmatpush1.bf16.msra.mxu0 %v668
    %3223 = vmatprep.subr.bf16.mxu0 %v667
    %3224 = vmatpush1.bf16.msra.mxu0 %v666
    %3225 = vmatprep.subr.bf16.mxu0 %v665
    %3226 = vmatpush1.bf16.msra.mxu0 %v664
    %3227 = vmatprep.subr.bf16.mxu0 %v663
    %3228 = vmatpush1.bf16.msra.mxu0 %v662
    %3229 = vmatprep.subr.bf16.mxu0 %v661
    %3230 = vmatpush1.bf16.msra.mxu0 %v660
    %3231 = vmatprep.subr.bf16.mxu0 %v659
    %3232 = vmatpush1.bf16.msra.mxu0 %v658
    %3233 = vmatprep.subr.bf16.mxu0 %v657
    %3234 = vmatpush1.bf16.msra.mxu0 %v656
    %3235 = vmatprep.subr.bf16.mxu0 %v655
    %3236 = vmatpush1.bf16.msra.mxu0 %v654
    %3237 = vmatprep.subr.bf16.mxu0 %v685
    %3238 = vmatpush2.bf16.msra.mxu0 %v684
    %3239 = vmatprep.subr.bf16.mxu0 %v683
    %3240 = vmatpush2.bf16.msra.mxu0 %v682
    %3241 = vmatprep.subr.bf16.mxu0 %v681
    %3242 = vmatpush2.bf16.msra.mxu0 %v680
    %3243 = vmatprep.subr.bf16.mxu0 %v679
    %3244 = vmatpush2.bf16.msra.mxu0 %v678
    %3245 = vmatprep.subr.bf16.mxu0 %v677
    %3246 = vmatpush2.bf16.msra.mxu0 %v676
    %3247 = vmatprep.subr.bf16.mxu0 %v675
    %3248 = vmatpush2.bf16.msra.mxu0 %v674
    %3249 = vmatprep.subr.bf16.mxu0 %v673
    %3250 = vmatpush2.bf16.msra.mxu0 %v672
    %3251 = vmatprep.subr.bf16.mxu0 %v671
    %3252 = vmatpush2.bf16.msra.mxu0 %v670
    %3253 = vmatprep.mubr.bf16.mxu0 %v3157
    %3254 = vmatmul.mubr.bf16.gmra.mxu0 %v3150
    %v3255 = vpop.f32.mrf.mxu0
    %v3256 = vadd.f32 %v3213, %v3255
    %v3257 = vpop.f32.mrf.mxu0
    %v3258 = vadd.f32 %v3215, %v3257
    %v3259 = vpop.f32.mrf.mxu0
    %v3260 = vadd.f32 %v3217, %v3259
    %v3261 = vpop.f32.mrf.mxu0
    %v3262 = vadd.f32 %v3219, %v3261
    %3263 = vdwg.mxu0
    %3264 = vmatprep.subr.bf16.mxu0 %v701
    %3265 = vmatpush1.bf16.msra.mxu0 %v700
    %3266 = vmatprep.subr.bf16.mxu0 %v699
    %3267 = vmatpush1.bf16.msra.mxu0 %v698
    %3268 = vmatprep.subr.bf16.mxu0 %v697
    %3269 = vmatpush1.bf16.msra.mxu0 %v696
    %3270 = vmatprep.subr.bf16.mxu0 %v695
    %3271 = vmatpush1.bf16.msra.mxu0 %v694
    %3272 = vmatprep.subr.bf16.mxu0 %v693
    %3273 = vmatpush1.bf16.msra.mxu0 %v692
    %3274 = vmatprep.subr.bf16.mxu0 %v691
    %3275 = vmatpush1.bf16.msra.mxu0 %v690
    %3276 = vmatprep.subr.bf16.mxu0 %v689
    %3277 = vmatpush1.bf16.msra.mxu0 %v688
    %3278 = vmatprep.subr.bf16.mxu0 %v687
    %3279 = vmatpush1.bf16.msra.mxu0 %v686
    %3280 = vmatprep.subr.bf16.mxu0 %v717
    %3281 = vmatpush2.bf16.msra.mxu0 %v716
    %3282 = vmatprep.subr.bf16.mxu0 %v715
    %3283 = vmatpush2.bf16.msra.mxu0 %v714
    %3284 = vmatprep.subr.bf16.mxu0 %v713
    %3285 = vmatpush2.bf16.msra.mxu0 %v712
    %3286 = vmatprep.subr.bf16.mxu0 %v711
    %3287 = vmatpush2.bf16.msra.mxu0 %v710
    %3288 = vmatprep.subr.bf16.mxu0 %v709
    %3289 = vmatpush2.bf16.msra.mxu0 %v708
    %3290 = vmatprep.subr.bf16.mxu0 %v707
    %3291 = vmatpush2.bf16.msra.mxu0 %v706
    %3292 = vmatprep.subr.bf16.mxu0 %v705
    %3293 = vmatpush2.bf16.msra.mxu0 %v704
    %3294 = vmatprep.subr.bf16.mxu0 %v703
    %3295 = vmatpush2.bf16.msra.mxu0 %v702
    %3296 = vmatprep.mubr.bf16.mxu0 %v3171
    %3297 = vmatmul.mubr.bf16.gmra.mxu0 %v3164
    %v3298 = vpop.f32.mrf.mxu0
    %v3299 = vadd.f32 %v3256, %v3298
    %v3300 = vpop.f32.mrf.mxu0
    %v3301 = vadd.f32 %v3258, %v3300
    %v3302 = vpop.f32.mrf.mxu0
    %v3303 = vadd.f32 %v3260, %v3302
    %v3304 = vpop.f32.mrf.mxu0
    %v3305 = vadd.f32 %v3262, %v3304
    %3306 = vdwg.mxu0
    %3313 = vmatprep.subr.bf16.mxu0 %v1252
    %3314 = vmatpush1.bf16.msra.mxu0 %v1251
    %3315 = vmatprep.subr.bf16.mxu0 %v1250
    %3316 = vmatpush1.bf16.msra.mxu0 %v1249
    %3317 = vmatprep.subr.bf16.mxu0 %v1248
    %3318 = vmatpush1.bf16.msra.mxu0 %v1247
    %3319 = vmatprep.subr.bf16.mxu0 %v1246
    %3320 = vmatpush1.bf16.msra.mxu0 %v1245
    %3321 = vmatprep.subr.bf16.mxu0 %v1244
    %3322 = vmatpush1.bf16.msra.mxu0 %v1243
    %3323 = vmatprep.subr.bf16.mxu0 %v1242
    %3324 = vmatpush1.bf16.msra.mxu0 %v1241
    %3325 = vmatprep.subr.bf16.mxu0 %v1240
    %3326 = vmatpush1.bf16.msra.mxu0 %v1239
    %3327 = vmatprep.subr.bf16.mxu0 %v1238
    %3328 = vmatpush1.bf16.msra.mxu0 %v1237
    %3329 = vmatprep.subr.bf16.mxu0 %v1268
    %3330 = vmatpush2.bf16.msra.mxu0 %v1267
    %3331 = vmatprep.subr.bf16.mxu0 %v1266
    %3332 = vmatpush2.bf16.msra.mxu0 %v1265
    %3333 = vmatprep.subr.bf16.mxu0 %v1264
    %3334 = vmatpush2.bf16.msra.mxu0 %v1263
    %3335 = vmatprep.subr.bf16.mxu0 %v1262
    %3336 = vmatpush2.bf16.msra.mxu0 %v1261
    %3337 = vmatprep.subr.bf16.mxu0 %v1260
    %3338 = vmatpush2.bf16.msra.mxu0 %v1259
    %3339 = vmatprep.subr.bf16.mxu0 %v1258
    %3340 = vmatpush2.bf16.msra.mxu0 %v1257
    %3341 = vmatprep.subr.bf16.mxu0 %v1256
    %3342 = vmatpush2.bf16.msra.mxu0 %v1255
    %3343 = vmatprep.subr.bf16.mxu0 %v1254
    %3344 = vmatpush2.bf16.msra.mxu0 %v1253
    %3345 = vmatprep.mubr.bf16.mxu0 %v3125
    %3346 = vmatmul.mubr.bf16.gmra.mxu0 %v3124
    %v3347 = vpop.f32.mrf.mxu0
    %v3348 = vadd.f32 %v3299, %v3347
    %v3349 = vpop.f32.mrf.mxu0
    %v3350 = vadd.f32 %v3301, %v3349
    %v3351 = vpop.f32.mrf.mxu0
    %v3352 = vadd.f32 %v3303, %v3351
    %v3353 = vpop.f32.mrf.mxu0
    %v3354 = vadd.f32 %v3305, %v3353
    %3355 = vdwg.mxu0
    %3356 = vmatprep.subr.bf16.mxu0 %v1284
    %3357 = vmatpush1.bf16.msra.mxu0 %v1283
    %3358 = vmatprep.subr.bf16.mxu0 %v1282
    %3359 = vmatpush1.bf16.msra.mxu0 %v1281
    %3360 = vmatprep.subr.bf16.mxu0 %v1280
    %3361 = vmatpush1.bf16.msra.mxu0 %v1279
    %3362 = vmatprep.subr.bf16.mxu0 %v1278
    %3363 = vmatpush1.bf16.msra.mxu0 %v1277
    %3364 = vmatprep.subr.bf16.mxu0 %v1276
    %3365 = vmatpush1.bf16.msra.mxu0 %v1275
    %3366 = vmatprep.subr.bf16.mxu0 %v1274
    %3367 = vmatpush1.bf16.msra.mxu0 %v1273
    %3368 = vmatprep.subr.bf16.mxu0 %v1272
    %3369 = vmatpush1.bf16.msra.mxu0 %v1271
    %3370 = vmatprep.subr.bf16.mxu0 %v1270
    %3371 = vmatpush1.bf16.msra.mxu0 %v1269
    %3372 = vmatprep.subr.bf16.mxu0 %v1300
    %3373 = vmatpush2.bf16.msra.mxu0 %v1299
    %3374 = vmatprep.subr.bf16.mxu0 %v1298
    %3375 = vmatpush2.bf16.msra.mxu0 %v1297
    %3376 = vmatprep.subr.bf16.mxu0 %v1296
    %3377 = vmatpush2.bf16.msra.mxu0 %v1295
    %3378 = vmatprep.subr.bf16.mxu0 %v1294
    %3379 = vmatpush2.bf16.msra.mxu0 %v1293
    %3380 = vmatprep.subr.bf16.mxu0 %v1292
    %3381 = vmatpush2.bf16.msra.mxu0 %v1291
    %3382 = vmatprep.subr.bf16.mxu0 %v1290
    %3383 = vmatpush2.bf16.msra.mxu0 %v1289
    %3384 = vmatprep.subr.bf16.mxu0 %v1288
    %3385 = vmatpush2.bf16.msra.mxu0 %v1287
    %3386 = vmatprep.subr.bf16.mxu0 %v1286
    %3387 = vmatpush2.bf16.msra.mxu0 %v1285
    %3388 = vmatprep.mubr.bf16.mxu0 %v3127
    %3389 = vmatmul.mubr.bf16.gmra.mxu0 %v3126
    %v3390 = vpop.f32.mrf.mxu0
    %v3391 = vadd.f32 %v3348, %v3390
    %v3392 = vpop.f32.mrf.mxu0
    %v3393 = vadd.f32 %v3350, %v3392
    %v3394 = vpop.f32.mrf.mxu0
    %v3395 = vadd.f32 %v3352, %v3394
    %v3396 = vpop.f32.mrf.mxu0
    %v3397 = vadd.f32 %v3354, %v3396
    %3398 = vdwg.mxu0
    %3399 = vmatprep.subr.bf16.mxu0 %v1316
    %3400 = vmatpush1.bf16.msra.mxu0 %v1315
    %3401 = vmatprep.subr.bf16.mxu0 %v1314
    %3402 = vmatpush1.bf16.msra.mxu0 %v1313
    %3403 = vmatprep.subr.bf16.mxu0 %v1312
    %3404 = vmatpush1.bf16.msra.mxu0 %v1311
    %3405 = vmatprep.subr.bf16.mxu0 %v1310
    %3406 = vmatpush1.bf16.msra.mxu0 %v1309
    %3407 = vmatprep.subr.bf16.mxu0 %v1308
    %3408 = vmatpush1.bf16.msra.mxu0 %v1307
    %3409 = vmatprep.subr.bf16.mxu0 %v1306
    %3410 = vmatpush1.bf16.msra.mxu0 %v1305
    %3411 = vmatprep.subr.bf16.mxu0 %v1304
    %3412 = vmatpush1.bf16.msra.mxu0 %v1303
    %3413 = vmatprep.subr.bf16.mxu0 %v1302
    %3414 = vmatpush1.bf16.msra.mxu0 %v1301
    %3415 = vmatprep.subr.bf16.mxu0 %v1332
    %3416 = vmatpush2.bf16.msra.mxu0 %v1331
    %3417 = vmatprep.subr.bf16.mxu0 %v1330
    %3418 = vmatpush2.bf16.msra.mxu0 %v1329
    %3419 = vmatprep.subr.bf16.mxu0 %v1328
    %3420 = vmatpush2.bf16.msra.mxu0 %v1327
    %3421 = vmatprep.subr.bf16.mxu0 %v1326
    %3422 = vmatpush2.bf16.msra.mxu0 %v1325
    %3423 = vmatprep.subr.bf16.mxu0 %v1324
    %3424 = vmatpush2.bf16.msra.mxu0 %v1323
    %3425 = vmatprep.subr.bf16.mxu0 %v1322
    %3426 = vmatpush2.bf16.msra.mxu0 %v1321
    %3427 = vmatprep.subr.bf16.mxu0 %v1320
    %3428 = vmatpush2.bf16.msra.mxu0 %v1319
    %3429 = vmatprep.subr.bf16.mxu0 %v1318
    %3430 = vmatpush2.bf16.msra.mxu0 %v1317
    %3431 = vmatprep.mubr.bf16.mxu0 %v3129
    %3432 = vmatmul.mubr.bf16.gmra.mxu0 %v3128
    %v3433 = vpop.f32.mrf.mxu0
    %v3434 = vadd.f32 %v3391, %v3433
    %v3435 = vpop.f32.mrf.mxu0
    %v3436 = vadd.f32 %v3393, %v3435
    %v3437 = vpop.f32.mrf.mxu0
    %v3438 = vadd.f32 %v3395, %v3437
    %v3439 = vpop.f32.mrf.mxu0
    %v3440 = vadd.f32 %v3397, %v3439
    %3441 = vdwg.mxu0
    %v3442 = vrot.slane %v3124, 1
    %v3443 = vrot.slane %v3125, 1
    %v3444 = vrot.slane %v3126, 1
    %v3445 = vrot.slane %v3127, 1
    %v3446 = vrot.slane %v3128, 1
    %v3447 = vrot.slane %v3129, 1
    %3454 = vmatprep.subr.bf16.mxu0 %v1970
    %3455 = vmatpush1.bf16.msra.mxu0 %v1969
    %3456 = vmatprep.subr.bf16.mxu0 %v1968
    %3457 = vmatpush1.bf16.msra.mxu0 %v1967
    %3458 = vmatprep.subr.bf16.mxu0 %v1966
    %3459 = vmatpush1.bf16.msra.mxu0 %v1965
    %3460 = vmatprep.subr.bf16.mxu0 %v1964
    %3461 = vmatpush1.bf16.msra.mxu0 %v1963
    %3462 = vmatprep.subr.bf16.mxu0 %v1962
    %3463 = vmatpush1.bf16.msra.mxu0 %v1961
    %3464 = vmatprep.subr.bf16.mxu0 %v1960
    %3465 = vmatpush1.bf16.msra.mxu0 %v1959
    %3466 = vmatprep.subr.bf16.mxu0 %v1958
    %3467 = vmatpush1.bf16.msra.mxu0 %v1957
    %3468 = vmatprep.subr.bf16.mxu0 %v1956
    %3469 = vmatpush1.bf16.msra.mxu0 %v1955
    %3470 = vmatprep.subr.bf16.mxu0 %v1986
    %3471 = vmatpush2.bf16.msra.mxu0 %v1985
    %3472 = vmatprep.subr.bf16.mxu0 %v1984
    %3473 = vmatpush2.bf16.msra.mxu0 %v1983
    %3474 = vmatprep.subr.bf16.mxu0 %v1982
    %3475 = vmatpush2.bf16.msra.mxu0 %v1981
    %3476 = vmatprep.subr.bf16.mxu0 %v1980
    %3477 = vmatpush2.bf16.msra.mxu0 %v1979
    %3478 = vmatprep.subr.bf16.mxu0 %v1978
    %3479 = vmatpush2.bf16.msra.mxu0 %v1977
    %3480 = vmatprep.subr.bf16.mxu0 %v1976
    %3481 = vmatpush2.bf16.msra.mxu0 %v1975
    %3482 = vmatprep.subr.bf16.mxu0 %v1974
    %3483 = vmatpush2.bf16.msra.mxu0 %v1973
    %3484 = vmatprep.subr.bf16.mxu0 %v1972
    %3485 = vmatpush2.bf16.msra.mxu0 %v1971
    %3486 = vmatprep.mubr.bf16.mxu0 %v3443
    %3487 = vmatmul.mubr.bf16.gmra.mxu0 %v3442
    %v3488 = vpop.f32.mrf.mxu0
    %v3489 = vadd.f32 0.0, %v3488
    %v3490 = vpop.f32.mrf.mxu0
    %v3491 = vadd.f32 0.0, %v3490
    %v3492 = vpop.f32.mrf.mxu0
    %v3493 = vadd.f32 0.0, %v3492
    %v3494 = vpop.f32.mrf.mxu0
    %v3495 = vadd.f32 0.0, %v3494
    %3496 = vdwg.mxu0
    %3497 = vmatprep.subr.bf16.mxu0 %v2002
    %3498 = vmatpush1.bf16.msra.mxu0 %v2001
    %3499 = vmatprep.subr.bf16.mxu0 %v2000
    %3500 = vmatpush1.bf16.msra.mxu0 %v1999
    %3501 = vmatprep.subr.bf16.mxu0 %v1998
    %3502 = vmatpush1.bf16.msra.mxu0 %v1997
    %3503 = vmatprep.subr.bf16.mxu0 %v1996
    %3504 = vmatpush1.bf16.msra.mxu0 %v1995
    %3505 = vmatprep.subr.bf16.mxu0 %v1994
    %3506 = vmatpush1.bf16.msra.mxu0 %v1993
    %3507 = vmatprep.subr.bf16.mxu0 %v1992
    %3508 = vmatpush1.bf16.msra.mxu0 %v1991
    %3509 = vmatprep.subr.bf16.mxu0 %v1990
    %3510 = vmatpush1.bf16.msra.mxu0 %v1989
    %3511 = vmatprep.subr.bf16.mxu0 %v1988
    %3512 = vmatpush1.bf16.msra.mxu0 %v1987
    %3513 = vmatprep.subr.bf16.mxu0 %v2018
    %3514 = vmatpush2.bf16.msra.mxu0 %v2017
    %3515 = vmatprep.subr.bf16.mxu0 %v2016
    %3516 = vmatpush2.bf16.msra.mxu0 %v2015
    %3517 = vmatprep.subr.bf16.mxu0 %v2014
    %3518 = vmatpush2.bf16.msra.mxu0 %v2013
    %3519 = vmatprep.subr.bf16.mxu0 %v2012
    %3520 = vmatpush2.bf16.msra.mxu0 %v2011
    %3521 = vmatprep.subr.bf16.mxu0 %v2010
    %3522 = vmatpush2.bf16.msra.mxu0 %v2009
    %3523 = vmatprep.subr.bf16.mxu0 %v2008
    %3524 = vmatpush2.bf16.msra.mxu0 %v2007
    %3525 = vmatprep.subr.bf16.mxu0 %v2006
    %3526 = vmatpush2.bf16.msra.mxu0 %v2005
    %3527 = vmatprep.subr.bf16.mxu0 %v2004
    %3528 = vmatpush2.bf16.msra.mxu0 %v2003
    %3529 = vmatprep.mubr.bf16.mxu0 %v3445
    %3530 = vmatmul.mubr.bf16.gmra.mxu0 %v3444
    %v3531 = vpop.f32.mrf.mxu0
    %v3532 = vadd.f32 %v3489, %v3531
    %v3533 = vpop.f32.mrf.mxu0
    %v3534 = vadd.f32 %v3491, %v3533
    %v3535 = vpop.f32.mrf.mxu0
    %v3536 = vadd.f32 %v3493, %v3535
    %v3537 = vpop.f32.mrf.mxu0
    %v3538 = vadd.f32 %v3495, %v3537
    %3539 = vdwg.mxu0
    %3540 = vmatprep.subr.bf16.mxu0 %v2034
    %3541 = vmatpush1.bf16.msra.mxu0 %v2033
    %3542 = vmatprep.subr.bf16.mxu0 %v2032
    %3543 = vmatpush1.bf16.msra.mxu0 %v2031
    %3544 = vmatprep.subr.bf16.mxu0 %v2030
    %3545 = vmatpush1.bf16.msra.mxu0 %v2029
    %3546 = vmatprep.subr.bf16.mxu0 %v2028
    %3547 = vmatpush1.bf16.msra.mxu0 %v2027
    %3548 = vmatprep.subr.bf16.mxu0 %v2026
    %3549 = vmatpush1.bf16.msra.mxu0 %v2025
    %3550 = vmatprep.subr.bf16.mxu0 %v2024
    %3551 = vmatpush1.bf16.msra.mxu0 %v2023
    %3552 = vmatprep.subr.bf16.mxu0 %v2022
    %3553 = vmatpush1.bf16.msra.mxu0 %v2021
    %3554 = vmatprep.subr.bf16.mxu0 %v2020
    %3555 = vmatpush1.bf16.msra.mxu0 %v2019
    %3556 = vmatprep.subr.bf16.mxu0 %v2050
    %3557 = vmatpush2.bf16.msra.mxu0 %v2049
    %3558 = vmatprep.subr.bf16.mxu0 %v2048
    %3559 = vmatpush2.bf16.msra.mxu0 %v2047
    %3560 = vmatprep.subr.bf16.mxu0 %v2046
    %3561 = vmatpush2.bf16.msra.mxu0 %v2045
    %3562 = vmatprep.subr.bf16.mxu0 %v2044
    %3563 = vmatpush2.bf16.msra.mxu0 %v2043
    %3564 = vmatprep.subr.bf16.mxu0 %v2042
    %3565 = vmatpush2.bf16.msra.mxu0 %v2041
    %3566 = vmatprep.subr.bf16.mxu0 %v2040
    %3567 = vmatpush2.bf16.msra.mxu0 %v2039
    %3568 = vmatprep.subr.bf16.mxu0 %v2038
    %3569 = vmatpush2.bf16.msra.mxu0 %v2037
    %3570 = vmatprep.subr.bf16.mxu0 %v2036
    %3571 = vmatpush2.bf16.msra.mxu0 %v2035
    %3572 = vmatprep.mubr.bf16.mxu0 %v3447
    %3573 = vmatmul.mubr.bf16.gmra.mxu0 %v3446
    %v3574 = vpop.f32.mrf.mxu0
    %v3575 = vadd.f32 %v3532, %v3574
    %v3576 = vpop.f32.mrf.mxu0
    %v3577 = vadd.f32 %v3534, %v3576
    %v3578 = vpop.f32.mrf.mxu0
    %v3579 = vadd.f32 %v3536, %v3578
    %v3580 = vpop.f32.mrf.mxu0
    %v3581 = vadd.f32 %v3538, %v3580
    %3582 = vdwg.mxu0
    %v3583 = vadd.f32 %v3434, %v3575
    %v3584 = vadd.f32 %v3436, %v3577
    %v3585 = vadd.f32 %v3438, %v3579
    %v3586 = vadd.f32 %v3440, %v3581
    %v3590 = vunpack.c.l.b16 %v3103
    %v3591 = vunpack.c.h.b16 %v3103
    %v3592 = vunpack.c.l.b16 %v3104
    %v3593 = vunpack.c.h.b16 %v3104
    %v3594 = vunpack.c.l.b16 %v3105
    %v3595 = vunpack.c.h.b16 %v3105
    %v3596 = vpack.c.b16 %v3590, %v3590
    %v3597 = vpack.c.b16 %v3591, %v3591
    %v3598 = vpack.c.b16 %v3592, %v3592
    %v3599 = vpack.c.b16 %v3593, %v3593
    %v3600 = vpack.c.b16 %v3594, %v3594
    %v3601 = vpack.c.b16 %v3595, %v3595
    %v3602 = vrot.slane %v3131, 1
    %v3603 = vrot.slane %v3133, 2
    %v3604 = vor.u32 %v3602, %v3603
    %v3606 = vshll.u32 %v3596, 16
    %v3608 = vrot.slane %v3606, 2
    %v3609 = vsel %vm2392, %v3604, %v3608
    %v3610 = vrot.slane %v3138, 1
    %v3611 = vrot.slane %v3140, 2
    %v3612 = vor.u32 %v3610, %v3611
    %v3614 = vshll.u32 %v3597, 16
    %v3616 = vrot.slane %v3614, 2
    %v3617 = vsel %vm2392, %v3612, %v3616
    %v3618 = vrot.slane %v3145, 1
    %v3619 = vrot.slane %v3147, 2
    %v3620 = vor.u32 %v3618, %v3619
    %v3622 = vshll.u32 %v3598, 16
    %v3624 = vrot.slane %v3622, 2
    %v3625 = vsel %vm2392, %v3620, %v3624
    %v3626 = vrot.slane %v3152, 1
    %v3627 = vrot.slane %v3154, 2
    %v3628 = vor.u32 %v3626, %v3627
    %v3630 = vshll.u32 %v3599, 16
    %v3632 = vrot.slane %v3630, 2
    %v3633 = vsel %vm2392, %v3628, %v3632
    %v3634 = vrot.slane %v3159, 1
    %v3635 = vrot.slane %v3161, 2
    %v3636 = vor.u32 %v3634, %v3635
    %v3638 = vshll.u32 %v3600, 16
    %v3640 = vrot.slane %v3638, 2
    %v3641 = vsel %vm2392, %v3636, %v3640
    %v3642 = vrot.slane %v3166, 1
    %v3643 = vrot.slane %v3168, 2
    %v3644 = vor.u32 %v3642, %v3643
    %v3646 = vshll.u32 %v3601, 16
    %v3648 = vrot.slane %v3646, 2
    %v3649 = vsel %vm2392, %v3644, %v3648
    %3656 = vmatprep.subr.bf16.mxu0 %v2750
    %3657 = vmatpush1.bf16.msra.mxu0 %v2749
    %3658 = vmatprep.subr.bf16.mxu0 %v2748
    %3659 = vmatpush1.bf16.msra.mxu0 %v2747
    %3660 = vmatprep.subr.bf16.mxu0 %v2746
    %3661 = vmatpush1.bf16.msra.mxu0 %v2745
    %3662 = vmatprep.subr.bf16.mxu0 %v2744
    %3663 = vmatpush1.bf16.msra.mxu0 %v2743
    %3664 = vmatprep.subr.bf16.mxu0 %v2742
    %3665 = vmatpush1.bf16.msra.mxu0 %v2741
    %3666 = vmatprep.subr.bf16.mxu0 %v2740
    %3667 = vmatpush1.bf16.msra.mxu0 %v2739
    %3668 = vmatprep.subr.bf16.mxu0 %v2738
    %3669 = vmatpush1.bf16.msra.mxu0 %v2737
    %3670 = vmatprep.subr.bf16.mxu0 %v2736
    %3671 = vmatpush1.bf16.msra.mxu0 %v2735
    %3672 = vmatprep.subr.bf16.mxu0 %v2766
    %3673 = vmatpush2.bf16.msra.mxu0 %v2765
    %3674 = vmatprep.subr.bf16.mxu0 %v2764
    %3675 = vmatpush2.bf16.msra.mxu0 %v2763
    %3676 = vmatprep.subr.bf16.mxu0 %v2762
    %3677 = vmatpush2.bf16.msra.mxu0 %v2761
    %3678 = vmatprep.subr.bf16.mxu0 %v2760
    %3679 = vmatpush2.bf16.msra.mxu0 %v2759
    %3680 = vmatprep.subr.bf16.mxu0 %v2758
    %3681 = vmatpush2.bf16.msra.mxu0 %v2757
    %3682 = vmatprep.subr.bf16.mxu0 %v2756
    %3683 = vmatpush2.bf16.msra.mxu0 %v2755
    %3684 = vmatprep.subr.bf16.mxu0 %v2754
    %3685 = vmatpush2.bf16.msra.mxu0 %v2753
    %3686 = vmatprep.subr.bf16.mxu0 %v2752
    %3687 = vmatpush2.bf16.msra.mxu0 %v2751
    %3688 = vmatprep.mubr.bf16.mxu0 %v3617
    %3689 = vmatmul.mubr.bf16.gmra.mxu0 %v3609
    %v3690 = vpop.f32.mrf.mxu0
    %v3691 = vadd.f32 0.0, %v3690
    %v3692 = vpop.f32.mrf.mxu0
    %v3693 = vadd.f32 0.0, %v3692
    %v3694 = vpop.f32.mrf.mxu0
    %v3695 = vadd.f32 0.0, %v3694
    %v3696 = vpop.f32.mrf.mxu0
    %v3697 = vadd.f32 0.0, %v3696
    %3698 = vdwg.mxu0
    %3699 = vmatprep.subr.bf16.mxu0 %v2782
    %3700 = vmatpush1.bf16.msra.mxu0 %v2781
    %3701 = vmatprep.subr.bf16.mxu0 %v2780
    %3702 = vmatpush1.bf16.msra.mxu0 %v2779
    %3703 = vmatprep.subr.bf16.mxu0 %v2778
    %3704 = vmatpush1.bf16.msra.mxu0 %v2777
    %3705 = vmatprep.subr.bf16.mxu0 %v2776
    %3706 = vmatpush1.bf16.msra.mxu0 %v2775
    %3707 = vmatprep.subr.bf16.mxu0 %v2774
    %3708 = vmatpush1.bf16.msra.mxu0 %v2773
    %3709 = vmatprep.subr.bf16.mxu0 %v2772
    %3710 = vmatpush1.bf16.msra.mxu0 %v2771
    %3711 = vmatprep.subr.bf16.mxu0 %v2770
    %3712 = vmatpush1.bf16.msra.mxu0 %v2769
    %3713 = vmatprep.subr.bf16.mxu0 %v2768
    %3714 = vmatpush1.bf16.msra.mxu0 %v2767
    %3715 = vmatprep.subr.bf16.mxu0 %v2798
    %3716 = vmatpush2.bf16.msra.mxu0 %v2797
    %3717 = vmatprep.subr.bf16.mxu0 %v2796
    %3718 = vmatpush2.bf16.msra.mxu0 %v2795
    %3719 = vmatprep.subr.bf16.mxu0 %v2794
    %3720 = vmatpush2.bf16.msra.mxu0 %v2793
    %3721 = vmatprep.subr.bf16.mxu0 %v2792
    %3722 = vmatpush2.bf16.msra.mxu0 %v2791
    %3723 = vmatprep.subr.bf16.mxu0 %v2790
    %3724 = vmatpush2.bf16.msra.mxu0 %v2789
    %3725 = vmatprep.subr.bf16.mxu0 %v2788
    %3726 = vmatpush2.bf16.msra.mxu0 %v2787
    %3727 = vmatprep.subr.bf16.mxu0 %v2786
    %3728 = vmatpush2.bf16.msra.mxu0 %v2785
    %3729 = vmatprep.subr.bf16.mxu0 %v2784
    %3730 = vmatpush2.bf16.msra.mxu0 %v2783
    %3731 = vmatprep.mubr.bf16.mxu0 %v3633
    %3732 = vmatmul.mubr.bf16.gmra.mxu0 %v3625
    %v3733 = vpop.f32.mrf.mxu0
    %v3734 = vadd.f32 %v3691, %v3733
    %v3735 = vpop.f32.mrf.mxu0
    %v3736 = vadd.f32 %v3693, %v3735
    %v3737 = vpop.f32.mrf.mxu0
    %v3738 = vadd.f32 %v3695, %v3737
    %v3739 = vpop.f32.mrf.mxu0
    %v3740 = vadd.f32 %v3697, %v3739
    %3741 = vdwg.mxu0
    %3742 = vmatprep.subr.bf16.mxu0 %v2814
    %3743 = vmatpush1.bf16.msra.mxu0 %v2813
    %3744 = vmatprep.subr.bf16.mxu0 %v2812
    %3745 = vmatpush1.bf16.msra.mxu0 %v2811
    %3746 = vmatprep.subr.bf16.mxu0 %v2810
    %3747 = vmatpush1.bf16.msra.mxu0 %v2809
    %3748 = vmatprep.subr.bf16.mxu0 %v2808
    %3749 = vmatpush1.bf16.msra.mxu0 %v2807
    %3750 = vmatprep.subr.bf16.mxu0 %v2806
    %3751 = vmatpush1.bf16.msra.mxu0 %v2805
    %3752 = vmatprep.subr.bf16.mxu0 %v2804
    %3753 = vmatpush1.bf16.msra.mxu0 %v2803
    %3754 = vmatprep.subr.bf16.mxu0 %v2802
    %3755 = vmatpush1.bf16.msra.mxu0 %v2801
    %3756 = vmatprep.subr.bf16.mxu0 %v2800
    %3757 = vmatpush1.bf16.msra.mxu0 %v2799
    %3758 = vmatprep.subr.bf16.mxu0 %v2830
    %3759 = vmatpush2.bf16.msra.mxu0 %v2829
    %3760 = vmatprep.subr.bf16.mxu0 %v2828
    %3761 = vmatpush2.bf16.msra.mxu0 %v2827
    %3762 = vmatprep.subr.bf16.mxu0 %v2826
    %3763 = vmatpush2.bf16.msra.mxu0 %v2825
    %3764 = vmatprep.subr.bf16.mxu0 %v2824
    %3765 = vmatpush2.bf16.msra.mxu0 %v2823
    %3766 = vmatprep.subr.bf16.mxu0 %v2822
    %3767 = vmatpush2.bf16.msra.mxu0 %v2821
    %3768 = vmatprep.subr.bf16.mxu0 %v2820
    %3769 = vmatpush2.bf16.msra.mxu0 %v2819
    %3770 = vmatprep.subr.bf16.mxu0 %v2818
    %3771 = vmatpush2.bf16.msra.mxu0 %v2817
    %3772 = vmatprep.subr.bf16.mxu0 %v2816
    %3773 = vmatpush2.bf16.msra.mxu0 %v2815
    %3774 = vmatprep.mubr.bf16.mxu0 %v3649
    %3775 = vmatmul.mubr.bf16.gmra.mxu0 %v3641
    %v3776 = vpop.f32.mrf.mxu0
    %v3777 = vadd.f32 %v3734, %v3776
    %v3778 = vpop.f32.mrf.mxu0
    %v3779 = vadd.f32 %v3736, %v3778
    %v3780 = vpop.f32.mrf.mxu0
    %v3781 = vadd.f32 %v3738, %v3780
    %v3782 = vpop.f32.mrf.mxu0
    %v3783 = vadd.f32 %v3740, %v3782
    %3784 = vdwg.mxu0
    %v3785 = vadd.f32 %v3583, %v3777
    %v3786 = vadd.f32 %v3584, %v3779
    %v3787 = vadd.f32 %v3585, %v3781
    %v3788 = vadd.f32 %v3586, %v3783
    %v3789 = vsel %vm55, %v3785, -inf
    %v3790 = vsel %vm56, %v3786, -inf
    %v3791 = vsel %vm57, %v3787, -inf
    %v3792 = vsel %vm58, %v3788, -inf
    %v3793 = vsel %vm3064, %v3791, -inf
    %v3794 = vmax.f32 %v3789, %v3793
    %v3795 = vrot.slane %v3794, 4
    %v3796 = vmax.f32 %v3794, %v3795
    %v3797 = vrot.slane %v3796, 2
    %v3798 = vmax.f32 %v3796, %v3797
    %v3799 = vrot.slane %v3798, 1
    %v3800 = vmax.f32 %v3798, %v3799
    %v3801 = vsel %vm3064, %v3792, -inf
    %v3802 = vmax.f32 %v3790, %v3801
    %v3803 = vrot.slane %v3802, 4
    %v3804 = vmax.f32 %v3802, %v3803
    %v3805 = vrot.slane %v3804, 2
    %v3806 = vmax.f32 %v3804, %v3805
    %v3807 = vrot.slane %v3806, 1
    %v3808 = vmax.f32 %v3806, %v3807
    %v3809 = vadd.f32 %v3800, %v3085
    %v3810 = vadd.f32 %v3808, %v3089
    %v3811 = vmax.f32 %v3809, 0.0
    %v3812 = vmax.f32 %v3810, 0.0
    %s3813 = scalar_lea.vmem %s0, 144
    %v3814 = vld [vmem:[%s3813] sm:$0xff]
    %v3815 = vld [vmem:[%s3813 + $0x8] sm:$0xff]
    %v3816 = vld [vmem:[%s3813 + $0x10] sm:$0xff]
    %v3817 = vld [vmem:[%s3813 + $0x18] sm:$0xff]
    %v3818 = vld [vmem:[%s3813 + $0x20] sm:$0xff]
    %v3819 = vld [vmem:[%s3813 + $0x28] sm:$0xff]
    %v3820 = vld [vmem:[%s3813 + $0x30] sm:$0x11]
    %v3821 = vld [vmem:[%s3813 + $0x38] sm:$0x11]
    %v3822 = vld [vmem:[%s3813 + $0x40] sm:$0x11]
    %v3829 = vunpack.c.l.b16 %v3814
    %v3830 = vunpack.c.h.b16 %v3814
    %v3831 = vunpack.c.l.b16 %v3815
    %v3832 = vunpack.c.h.b16 %v3815
    %v3833 = vunpack.c.l.b16 %v3816
    %v3834 = vunpack.c.h.b16 %v3816
    %v3835 = vunpack.c.l.b16 %v3817
    %v3836 = vunpack.c.h.b16 %v3817
    %v3837 = vunpack.c.l.b16 %v3818
    %v3838 = vunpack.c.h.b16 %v3818
    %v3839 = vunpack.c.l.b16 %v3819
    %v3840 = vunpack.c.h.b16 %v3819
    %v3841 = vpack.c.b16 %v3835, %v3829
    %v3842 = vpack.c.b16 %v3836, %v3830
    %v3843 = vpack.c.b16 %v3837, %v3831
    %v3844 = vpack.c.b16 %v3838, %v3832
    %v3845 = vpack.c.b16 %v3839, %v3833
    %v3846 = vpack.c.b16 %v3840, %v3834
    %v3848 = vshrl.u32 %v3841, 16
    %v3850 = vshll.u32 %v3841, 16
    %v3852 = vrot.slane %v3850, 1
    %v3853 = vor.u32 %v3848, %v3852
    %v3855 = vshrl.u32 %v3842, 16
    %v3857 = vshll.u32 %v3842, 16
    %v3859 = vrot.slane %v3857, 1
    %v3860 = vor.u32 %v3855, %v3859
    %v3862 = vshrl.u32 %v3843, 16
    %v3864 = vshll.u32 %v3843, 16
    %v3866 = vrot.slane %v3864, 1
    %v3867 = vor.u32 %v3862, %v3866
    %v3869 = vshrl.u32 %v3844, 16
    %v3871 = vshll.u32 %v3844, 16
    %v3873 = vrot.slane %v3871, 1
    %v3874 = vor.u32 %v3869, %v3873
    %v3876 = vshrl.u32 %v3845, 16
    %v3878 = vshll.u32 %v3845, 16
    %v3880 = vrot.slane %v3878, 1
    %v3881 = vor.u32 %v3876, %v3880
    %v3883 = vshrl.u32 %v3846, 16
    %v3885 = vshll.u32 %v3846, 16
    %v3887 = vrot.slane %v3885, 1
    %v3888 = vor.u32 %v3883, %v3887
    %3895 = vmatprep.subr.bf16.mxu0 %v637
    %3896 = vmatpush1.bf16.msra.mxu0 %v636
    %3897 = vmatprep.subr.bf16.mxu0 %v635
    %3898 = vmatpush1.bf16.msra.mxu0 %v634
    %3899 = vmatprep.subr.bf16.mxu0 %v633
    %3900 = vmatpush1.bf16.msra.mxu0 %v632
    %3901 = vmatprep.subr.bf16.mxu0 %v631
    %3902 = vmatpush1.bf16.msra.mxu0 %v630
    %3903 = vmatprep.subr.bf16.mxu0 %v629
    %3904 = vmatpush1.bf16.msra.mxu0 %v628
    %3905 = vmatprep.subr.bf16.mxu0 %v627
    %3906 = vmatpush1.bf16.msra.mxu0 %v626
    %3907 = vmatprep.subr.bf16.mxu0 %v625
    %3908 = vmatpush1.bf16.msra.mxu0 %v624
    %3909 = vmatprep.subr.bf16.mxu0 %v623
    %3910 = vmatpush1.bf16.msra.mxu0 %v622
    %3911 = vmatprep.subr.bf16.mxu0 %v653
    %3912 = vmatpush2.bf16.msra.mxu0 %v652
    %3913 = vmatprep.subr.bf16.mxu0 %v651
    %3914 = vmatpush2.bf16.msra.mxu0 %v650
    %3915 = vmatprep.subr.bf16.mxu0 %v649
    %3916 = vmatpush2.bf16.msra.mxu0 %v648
    %3917 = vmatprep.subr.bf16.mxu0 %v647
    %3918 = vmatpush2.bf16.msra.mxu0 %v646
    %3919 = vmatprep.subr.bf16.mxu0 %v645
    %3920 = vmatpush2.bf16.msra.mxu0 %v644
    %3921 = vmatprep.subr.bf16.mxu0 %v643
    %3922 = vmatpush2.bf16.msra.mxu0 %v642
    %3923 = vmatprep.subr.bf16.mxu0 %v641
    %3924 = vmatpush2.bf16.msra.mxu0 %v640
    %3925 = vmatprep.subr.bf16.mxu0 %v639
    %3926 = vmatpush2.bf16.msra.mxu0 %v638
    %3927 = vmatprep.mubr.bf16.mxu0 %v3860
    %3928 = vmatmul.mubr.bf16.gmra.mxu0 %v3853
    %v3929 = vpop.f32.mrf.mxu0
    %v3930 = vadd.f32 0.0, %v3929
    %v3931 = vpop.f32.mrf.mxu0
    %v3932 = vadd.f32 0.0, %v3931
    %v3933 = vpop.f32.mrf.mxu0
    %v3934 = vadd.f32 0.0, %v3933
    %v3935 = vpop.f32.mrf.mxu0
    %v3936 = vadd.f32 0.0, %v3935
    %3937 = vdwg.mxu0
    %3938 = vmatprep.subr.bf16.mxu0 %v669
    %3939 = vmatpush1.bf16.msra.mxu0 %v668
    %3940 = vmatprep.subr.bf16.mxu0 %v667
    %3941 = vmatpush1.bf16.msra.mxu0 %v666
    %3942 = vmatprep.subr.bf16.mxu0 %v665
    %3943 = vmatpush1.bf16.msra.mxu0 %v664
    %3944 = vmatprep.subr.bf16.mxu0 %v663
    %3945 = vmatpush1.bf16.msra.mxu0 %v662
    %3946 = vmatprep.subr.bf16.mxu0 %v661
    %3947 = vmatpush1.bf16.msra.mxu0 %v660
    %3948 = vmatprep.subr.bf16.mxu0 %v659
    %3949 = vmatpush1.bf16.msra.mxu0 %v658
    %3950 = vmatprep.subr.bf16.mxu0 %v657
    %3951 = vmatpush1.bf16.msra.mxu0 %v656
    %3952 = vmatprep.subr.bf16.mxu0 %v655
    %3953 = vmatpush1.bf16.msra.mxu0 %v654
    %3954 = vmatprep.subr.bf16.mxu0 %v685
    %3955 = vmatpush2.bf16.msra.mxu0 %v684
    %3956 = vmatprep.subr.bf16.mxu0 %v683
    %3957 = vmatpush2.bf16.msra.mxu0 %v682
    %3958 = vmatprep.subr.bf16.mxu0 %v681
    %3959 = vmatpush2.bf16.msra.mxu0 %v680
    %3960 = vmatprep.subr.bf16.mxu0 %v679
    %3961 = vmatpush2.bf16.msra.mxu0 %v678
    %3962 = vmatprep.subr.bf16.mxu0 %v677
    %3963 = vmatpush2.bf16.msra.mxu0 %v676
    %3964 = vmatprep.subr.bf16.mxu0 %v675
    %3965 = vmatpush2.bf16.msra.mxu0 %v674
    %3966 = vmatprep.subr.bf16.mxu0 %v673
    %3967 = vmatpush2.bf16.msra.mxu0 %v672
    %3968 = vmatprep.subr.bf16.mxu0 %v671
    %3969 = vmatpush2.bf16.msra.mxu0 %v670
    %3970 = vmatprep.mubr.bf16.mxu0 %v3874
    %3971 = vmatmul.mubr.bf16.gmra.mxu0 %v3867
    %v3972 = vpop.f32.mrf.mxu0
    %v3973 = vadd.f32 %v3930, %v3972
    %v3974 = vpop.f32.mrf.mxu0
    %v3975 = vadd.f32 %v3932, %v3974
    %v3976 = vpop.f32.mrf.mxu0
    %v3977 = vadd.f32 %v3934, %v3976
    %v3978 = vpop.f32.mrf.mxu0
    %v3979 = vadd.f32 %v3936, %v3978
    %3980 = vdwg.mxu0
    %3981 = vmatprep.subr.bf16.mxu0 %v701
    %3982 = vmatpush1.bf16.msra.mxu0 %v700
    %3983 = vmatprep.subr.bf16.mxu0 %v699
    %3984 = vmatpush1.bf16.msra.mxu0 %v698
    %3985 = vmatprep.subr.bf16.mxu0 %v697
    %3986 = vmatpush1.bf16.msra.mxu0 %v696
    %3987 = vmatprep.subr.bf16.mxu0 %v695
    %3988 = vmatpush1.bf16.msra.mxu0 %v694
    %3989 = vmatprep.subr.bf16.mxu0 %v693
    %3990 = vmatpush1.bf16.msra.mxu0 %v692
    %3991 = vmatprep.subr.bf16.mxu0 %v691
    %3992 = vmatpush1.bf16.msra.mxu0 %v690
    %3993 = vmatprep.subr.bf16.mxu0 %v689
    %3994 = vmatpush1.bf16.msra.mxu0 %v688
    %3995 = vmatprep.subr.bf16.mxu0 %v687
    %3996 = vmatpush1.bf16.msra.mxu0 %v686
    %3997 = vmatprep.subr.bf16.mxu0 %v717
    %3998 = vmatpush2.bf16.msra.mxu0 %v716
    %3999 = vmatprep.subr.bf16.mxu0 %v715
    %4000 = vmatpush2.bf16.msra.mxu0 %v714
    %4001 = vmatprep.subr.bf16.mxu0 %v713
    %4002 = vmatpush2.bf16.msra.mxu0 %v712
    %4003 = vmatprep.subr.bf16.mxu0 %v711
    %4004 = vmatpush2.bf16.msra.mxu0 %v710
    %4005 = vmatprep.subr.bf16.mxu0 %v709
    %4006 = vmatpush2.bf16.msra.mxu0 %v708
    %4007 = vmatprep.subr.bf16.mxu0 %v707
    %4008 = vmatpush2.bf16.msra.mxu0 %v706
    %4009 = vmatprep.subr.bf16.mxu0 %v705
    %4010 = vmatpush2.bf16.msra.mxu0 %v704
    %4011 = vmatprep.subr.bf16.mxu0 %v703
    %4012 = vmatpush2.bf16.msra.mxu0 %v702
    %4013 = vmatprep.mubr.bf16.mxu0 %v3888
    %4014 = vmatmul.mubr.bf16.gmra.mxu0 %v3881
    %v4015 = vpop.f32.mrf.mxu0
    %v4016 = vadd.f32 %v3973, %v4015
    %v4017 = vpop.f32.mrf.mxu0
    %v4018 = vadd.f32 %v3975, %v4017
    %v4019 = vpop.f32.mrf.mxu0
    %v4020 = vadd.f32 %v3977, %v4019
    %v4021 = vpop.f32.mrf.mxu0
    %v4022 = vadd.f32 %v3979, %v4021
    %4023 = vdwg.mxu0
    %4030 = vmatprep.subr.bf16.mxu0 %v1252
    %4031 = vmatpush1.bf16.msra.mxu0 %v1251
    %4032 = vmatprep.subr.bf16.mxu0 %v1250
    %4033 = vmatpush1.bf16.msra.mxu0 %v1249
    %4034 = vmatprep.subr.bf16.mxu0 %v1248
    %4035 = vmatpush1.bf16.msra.mxu0 %v1247
    %4036 = vmatprep.subr.bf16.mxu0 %v1246
    %4037 = vmatpush1.bf16.msra.mxu0 %v1245
    %4038 = vmatprep.subr.bf16.mxu0 %v1244
    %4039 = vmatpush1.bf16.msra.mxu0 %v1243
    %4040 = vmatprep.subr.bf16.mxu0 %v1242
    %4041 = vmatpush1.bf16.msra.mxu0 %v1241
    %4042 = vmatprep.subr.bf16.mxu0 %v1240
    %4043 = vmatpush1.bf16.msra.mxu0 %v1239
    %4044 = vmatprep.subr.bf16.mxu0 %v1238
    %4045 = vmatpush1.bf16.msra.mxu0 %v1237
    %4046 = vmatprep.subr.bf16.mxu0 %v1268
    %4047 = vmatpush2.bf16.msra.mxu0 %v1267
    %4048 = vmatprep.subr.bf16.mxu0 %v1266
    %4049 = vmatpush2.bf16.msra.mxu0 %v1265
    %4050 = vmatprep.subr.bf16.mxu0 %v1264
    %4051 = vmatpush2.bf16.msra.mxu0 %v1263
    %4052 = vmatprep.subr.bf16.mxu0 %v1262
    %4053 = vmatpush2.bf16.msra.mxu0 %v1261
    %4054 = vmatprep.subr.bf16.mxu0 %v1260
    %4055 = vmatpush2.bf16.msra.mxu0 %v1259
    %4056 = vmatprep.subr.bf16.mxu0 %v1258
    %4057 = vmatpush2.bf16.msra.mxu0 %v1257
    %4058 = vmatprep.subr.bf16.mxu0 %v1256
    %4059 = vmatpush2.bf16.msra.mxu0 %v1255
    %4060 = vmatprep.subr.bf16.mxu0 %v1254
    %4061 = vmatpush2.bf16.msra.mxu0 %v1253
    %4062 = vmatprep.mubr.bf16.mxu0 %v3842
    %4063 = vmatmul.mubr.bf16.gmra.mxu0 %v3841
    %v4064 = vpop.f32.mrf.mxu0
    %v4065 = vadd.f32 %v4016, %v4064
    %v4066 = vpop.f32.mrf.mxu0
    %v4067 = vadd.f32 %v4018, %v4066
    %v4068 = vpop.f32.mrf.mxu0
    %v4069 = vadd.f32 %v4020, %v4068
    %v4070 = vpop.f32.mrf.mxu0
    %v4071 = vadd.f32 %v4022, %v4070
    %4072 = vdwg.mxu0
    %4073 = vmatprep.subr.bf16.mxu0 %v1284
    %4074 = vmatpush1.bf16.msra.mxu0 %v1283
    %4075 = vmatprep.subr.bf16.mxu0 %v1282
    %4076 = vmatpush1.bf16.msra.mxu0 %v1281
    %4077 = vmatprep.subr.bf16.mxu0 %v1280
    %4078 = vmatpush1.bf16.msra.mxu0 %v1279
    %4079 = vmatprep.subr.bf16.mxu0 %v1278
    %4080 = vmatpush1.bf16.msra.mxu0 %v1277
    %4081 = vmatprep.subr.bf16.mxu0 %v1276
    %4082 = vmatpush1.bf16.msra.mxu0 %v1275
    %4083 = vmatprep.subr.bf16.mxu0 %v1274
    %4084 = vmatpush1.bf16.msra.mxu0 %v1273
    %4085 = vmatprep.subr.bf16.mxu0 %v1272
    %4086 = vmatpush1.bf16.msra.mxu0 %v1271
    %4087 = vmatprep.subr.bf16.mxu0 %v1270
    %4088 = vmatpush1.bf16.msra.mxu0 %v1269
    %4089 = vmatprep.subr.bf16.mxu0 %v1300
    %4090 = vmatpush2.bf16.msra.mxu0 %v1299
    %4091 = vmatprep.subr.bf16.mxu0 %v1298
    %4092 = vmatpush2.bf16.msra.mxu0 %v1297
    %4093 = vmatprep.subr.bf16.mxu0 %v1296
    %4094 = vmatpush2.bf16.msra.mxu0 %v1295
    %4095 = vmatprep.subr.bf16.mxu0 %v1294
    %4096 = vmatpush2.bf16.msra.mxu0 %v1293
    %4097 = vmatprep.subr.bf16.mxu0 %v1292
    %4098 = vmatpush2.bf16.msra.mxu0 %v1291
    %4099 = vmatprep.subr.bf16.mxu0 %v1290
    %4100 = vmatpush2.bf16.msra.mxu0 %v1289
    %4101 = vmatprep.subr.bf16.mxu0 %v1288
    %4102 = vmatpush2.bf16.msra.mxu0 %v1287
    %4103 = vmatprep.subr.bf16.mxu0 %v1286
    %4104 = vmatpush2.bf16.msra.mxu0 %v1285
    %4105 = vmatprep.mubr.bf16.mxu0 %v3844
    %4106 = vmatmul.mubr.bf16.gmra.mxu0 %v3843
    %v4107 = vpop.f32.mrf.mxu0
    %v4108 = vadd.f32 %v4065, %v4107
    %v4109 = vpop.f32.mrf.mxu0
    %v4110 = vadd.f32 %v4067, %v4109
    %v4111 = vpop.f32.mrf.mxu0
    %v4112 = vadd.f32 %v4069, %v4111
    %v4113 = vpop.f32.mrf.mxu0
    %v4114 = vadd.f32 %v4071, %v4113
    %4115 = vdwg.mxu0
    %4116 = vmatprep.subr.bf16.mxu0 %v1316
    %4117 = vmatpush1.bf16.msra.mxu0 %v1315
    %4118 = vmatprep.subr.bf16.mxu0 %v1314
    %4119 = vmatpush1.bf16.msra.mxu0 %v1313
    %4120 = vmatprep.subr.bf16.mxu0 %v1312
    %4121 = vmatpush1.bf16.msra.mxu0 %v1311
    %4122 = vmatprep.subr.bf16.mxu0 %v1310
    %4123 = vmatpush1.bf16.msra.mxu0 %v1309
    %4124 = vmatprep.subr.bf16.mxu0 %v1308
    %4125 = vmatpush1.bf16.msra.mxu0 %v1307
    %4126 = vmatprep.subr.bf16.mxu0 %v1306
    %4127 = vmatpush1.bf16.msra.mxu0 %v1305
    %4128 = vmatprep.subr.bf16.mxu0 %v1304
    %4129 = vmatpush1.bf16.msra.mxu0 %v1303
    %4130 = vmatprep.subr.bf16.mxu0 %v1302
    %4131 = vmatpush1.bf16.msra.mxu0 %v1301
    %4132 = vmatprep.subr.bf16.mxu0 %v1332
    %4133 = vmatpush2.bf16.msra.mxu0 %v1331
    %4134 = vmatprep.subr.bf16.mxu0 %v1330
    %4135 = vmatpush2.bf16.msra.mxu0 %v1329
    %4136 = vmatprep.subr.bf16.mxu0 %v1328
    %4137 = vmatpush2.bf16.msra.mxu0 %v1327
    %4138 = vmatprep.subr.bf16.mxu0 %v1326
    %4139 = vmatpush2.bf16.msra.mxu0 %v1325
    %4140 = vmatprep.subr.bf16.mxu0 %v1324
    %4141 = vmatpush2.bf16.msra.mxu0 %v1323
    %4142 = vmatprep.subr.bf16.mxu0 %v1322
    %4143 = vmatpush2.bf16.msra.mxu0 %v1321
    %4144 = vmatprep.subr.bf16.mxu0 %v1320
    %4145 = vmatpush2.bf16.msra.mxu0 %v1319
    %4146 = vmatprep.subr.bf16.mxu0 %v1318
    %4147 = vmatpush2.bf16.msra.mxu0 %v1317
    %4148 = vmatprep.mubr.bf16.mxu0 %v3846
    %4149 = vmatmul.mubr.bf16.gmra.mxu0 %v3845
    %v4150 = vpop.f32.mrf.mxu0
    %v4151 = vadd.f32 %v4108, %v4150
    %v4152 = vpop.f32.mrf.mxu0
    %v4153 = vadd.f32 %v4110, %v4152
    %v4154 = vpop.f32.mrf.mxu0
    %v4155 = vadd.f32 %v4112, %v4154
    %v4156 = vpop.f32.mrf.mxu0
    %v4157 = vadd.f32 %v4114, %v4156
    %4158 = vdwg.mxu0
    %v4159 = vrot.slane %v3841, 1
    %v4160 = vrot.slane %v3842, 1
    %v4161 = vrot.slane %v3843, 1
    %v4162 = vrot.slane %v3844, 1
    %v4163 = vrot.slane %v3845, 1
    %v4164 = vrot.slane %v3846, 1
    %4171 = vmatprep.subr.bf16.mxu0 %v1970
    %4172 = vmatpush1.bf16.msra.mxu0 %v1969
    %4173 = vmatprep.subr.bf16.mxu0 %v1968
    %4174 = vmatpush1.bf16.msra.mxu0 %v1967
    %4175 = vmatprep.subr.bf16.mxu0 %v1966
    %4176 = vmatpush1.bf16.msra.mxu0 %v1965
    %4177 = vmatprep.subr.bf16.mxu0 %v1964
    %4178 = vmatpush1.bf16.msra.mxu0 %v1963
    %4179 = vmatprep.subr.bf16.mxu0 %v1962
    %4180 = vmatpush1.bf16.msra.mxu0 %v1961
    %4181 = vmatprep.subr.bf16.mxu0 %v1960
    %4182 = vmatpush1.bf16.msra.mxu0 %v1959
    %4183 = vmatprep.subr.bf16.mxu0 %v1958
    %4184 = vmatpush1.bf16.msra.mxu0 %v1957
    %4185 = vmatprep.subr.bf16.mxu0 %v1956
    %4186 = vmatpush1.bf16.msra.mxu0 %v1955
    %4187 = vmatprep.subr.bf16.mxu0 %v1986
    %4188 = vmatpush2.bf16.msra.mxu0 %v1985
    %4189 = vmatprep.subr.bf16.mxu0 %v1984
    %4190 = vmatpush2.bf16.msra.mxu0 %v1983
    %4191 = vmatprep.subr.bf16.mxu0 %v1982
    %4192 = vmatpush2.bf16.msra.mxu0 %v1981
    %4193 = vmatprep.subr.bf16.mxu0 %v1980
    %4194 = vmatpush2.bf16.msra.mxu0 %v1979
    %4195 = vmatprep.subr.bf16.mxu0 %v1978
    %4196 = vmatpush2.bf16.msra.mxu0 %v1977
    %4197 = vmatprep.subr.bf16.mxu0 %v1976
    %4198 = vmatpush2.bf16.msra.mxu0 %v1975
    %4199 = vmatprep.subr.bf16.mxu0 %v1974
    %4200 = vmatpush2.bf16.msra.mxu0 %v1973
    %4201 = vmatprep.subr.bf16.mxu0 %v1972
    %4202 = vmatpush2.bf16.msra.mxu0 %v1971
    %4203 = vmatprep.mubr.bf16.mxu0 %v4160
    %4204 = vmatmul.mubr.bf16.gmra.mxu0 %v4159
    %v4205 = vpop.f32.mrf.mxu0
    %v4206 = vadd.f32 0.0, %v4205
    %v4207 = vpop.f32.mrf.mxu0
    %v4208 = vadd.f32 0.0, %v4207
    %v4209 = vpop.f32.mrf.mxu0
    %v4210 = vadd.f32 0.0, %v4209
    %v4211 = vpop.f32.mrf.mxu0
    %v4212 = vadd.f32 0.0, %v4211
    %4213 = vdwg.mxu0
    %4214 = vmatprep.subr.bf16.mxu0 %v2002
    %4215 = vmatpush1.bf16.msra.mxu0 %v2001
    %4216 = vmatprep.subr.bf16.mxu0 %v2000
    %4217 = vmatpush1.bf16.msra.mxu0 %v1999
    %4218 = vmatprep.subr.bf16.mxu0 %v1998
    %4219 = vmatpush1.bf16.msra.mxu0 %v1997
    %4220 = vmatprep.subr.bf16.mxu0 %v1996
    %4221 = vmatpush1.bf16.msra.mxu0 %v1995
    %4222 = vmatprep.subr.bf16.mxu0 %v1994
    %4223 = vmatpush1.bf16.msra.mxu0 %v1993
    %4224 = vmatprep.subr.bf16.mxu0 %v1992
    %4225 = vmatpush1.bf16.msra.mxu0 %v1991
    %4226 = vmatprep.subr.bf16.mxu0 %v1990
    %4227 = vmatpush1.bf16.msra.mxu0 %v1989
    %4228 = vmatprep.subr.bf16.mxu0 %v1988
    %4229 = vmatpush1.bf16.msra.mxu0 %v1987
    %4230 = vmatprep.subr.bf16.mxu0 %v2018
    %4231 = vmatpush2.bf16.msra.mxu0 %v2017
    %4232 = vmatprep.subr.bf16.mxu0 %v2016
    %4233 = vmatpush2.bf16.msra.mxu0 %v2015
    %4234 = vmatprep.subr.bf16.mxu0 %v2014
    %4235 = vmatpush2.bf16.msra.mxu0 %v2013
    %4236 = vmatprep.subr.bf16.mxu0 %v2012
    %4237 = vmatpush2.bf16.msra.mxu0 %v2011
    %4238 = vmatprep.subr.bf16.mxu0 %v2010
    %4239 = vmatpush2.bf16.msra.mxu0 %v2009
    %4240 = vmatprep.subr.bf16.mxu0 %v2008
    %4241 = vmatpush2.bf16.msra.mxu0 %v2007
    %4242 = vmatprep.subr.bf16.mxu0 %v2006
    %4243 = vmatpush2.bf16.msra.mxu0 %v2005
    %4244 = vmatprep.subr.bf16.mxu0 %v2004
    %4245 = vmatpush2.bf16.msra.mxu0 %v2003
    %4246 = vmatprep.mubr.bf16.mxu0 %v4162
    %4247 = vmatmul.mubr.bf16.gmra.mxu0 %v4161
    %v4248 = vpop.f32.mrf.mxu0
    %v4249 = vadd.f32 %v4206, %v4248
    %v4250 = vpop.f32.mrf.mxu0
    %v4251 = vadd.f32 %v4208, %v4250
    %v4252 = vpop.f32.mrf.mxu0
    %v4253 = vadd.f32 %v4210, %v4252
    %v4254 = vpop.f32.mrf.mxu0
    %v4255 = vadd.f32 %v4212, %v4254
    %4256 = vdwg.mxu0
    %4257 = vmatprep.subr.bf16.mxu0 %v2034
    %4258 = vmatpush1.bf16.msra.mxu0 %v2033
    %4259 = vmatprep.subr.bf16.mxu0 %v2032
    %4260 = vmatpush1.bf16.msra.mxu0 %v2031
    %4261 = vmatprep.subr.bf16.mxu0 %v2030
    %4262 = vmatpush1.bf16.msra.mxu0 %v2029
    %4263 = vmatprep.subr.bf16.mxu0 %v2028
    %4264 = vmatpush1.bf16.msra.mxu0 %v2027
    %4265 = vmatprep.subr.bf16.mxu0 %v2026
    %4266 = vmatpush1.bf16.msra.mxu0 %v2025
    %4267 = vmatprep.subr.bf16.mxu0 %v2024
    %4268 = vmatpush1.bf16.msra.mxu0 %v2023
    %4269 = vmatprep.subr.bf16.mxu0 %v2022
    %4270 = vmatpush1.bf16.msra.mxu0 %v2021
    %4271 = vmatprep.subr.bf16.mxu0 %v2020
    %4272 = vmatpush1.bf16.msra.mxu0 %v2019
    %4273 = vmatprep.subr.bf16.mxu0 %v2050
    %4274 = vmatpush2.bf16.msra.mxu0 %v2049
    %4275 = vmatprep.subr.bf16.mxu0 %v2048
    %4276 = vmatpush2.bf16.msra.mxu0 %v2047
    %4277 = vmatprep.subr.bf16.mxu0 %v2046
    %4278 = vmatpush2.bf16.msra.mxu0 %v2045
    %4279 = vmatprep.subr.bf16.mxu0 %v2044
    %4280 = vmatpush2.bf16.msra.mxu0 %v2043
    %4281 = vmatprep.subr.bf16.mxu0 %v2042
    %4282 = vmatpush2.bf16.msra.mxu0 %v2041
    %4283 = vmatprep.subr.bf16.mxu0 %v2040
    %4284 = vmatpush2.bf16.msra.mxu0 %v2039
    %4285 = vmatprep.subr.bf16.mxu0 %v2038
    %4286 = vmatpush2.bf16.msra.mxu0 %v2037
    %4287 = vmatprep.subr.bf16.mxu0 %v2036
    %4288 = vmatpush2.bf16.msra.mxu0 %v2035
    %4289 = vmatprep.mubr.bf16.mxu0 %v4164
    %4290 = vmatmul.mubr.bf16.gmra.mxu0 %v4163
    %v4291 = vpop.f32.mrf.mxu0
    %v4292 = vadd.f32 %v4249, %v4291
    %v4293 = vpop.f32.mrf.mxu0
    %v4294 = vadd.f32 %v4251, %v4293
    %v4295 = vpop.f32.mrf.mxu0
    %v4296 = vadd.f32 %v4253, %v4295
    %v4297 = vpop.f32.mrf.mxu0
    %v4298 = vadd.f32 %v4255, %v4297
    %4299 = vdwg.mxu0
    %v4300 = vadd.f32 %v4151, %v4292
    %v4301 = vadd.f32 %v4153, %v4294
    %v4302 = vadd.f32 %v4155, %v4296
    %v4303 = vadd.f32 %v4157, %v4298
    %v4307 = vunpack.c.l.b16 %v3820
    %v4308 = vunpack.c.h.b16 %v3820
    %v4309 = vunpack.c.l.b16 %v3821
    %v4310 = vunpack.c.h.b16 %v3821
    %v4311 = vunpack.c.l.b16 %v3822
    %v4312 = vunpack.c.h.b16 %v3822
    %v4313 = vpack.c.b16 %v4307, %v4307
    %v4314 = vpack.c.b16 %v4308, %v4308
    %v4315 = vpack.c.b16 %v4309, %v4309
    %v4316 = vpack.c.b16 %v4310, %v4310
    %v4317 = vpack.c.b16 %v4311, %v4311
    %v4318 = vpack.c.b16 %v4312, %v4312
    %v4319 = vrot.slane %v3848, 1
    %v4320 = vrot.slane %v3850, 2
    %v4321 = vor.u32 %v4319, %v4320
    %v4323 = vshll.u32 %v4313, 16
    %v4325 = vrot.slane %v4323, 2
    %v4326 = vsel %vm2392, %v4321, %v4325
    %v4327 = vrot.slane %v3855, 1
    %v4328 = vrot.slane %v3857, 2
    %v4329 = vor.u32 %v4327, %v4328
    %v4331 = vshll.u32 %v4314, 16
    %v4333 = vrot.slane %v4331, 2
    %v4334 = vsel %vm2392, %v4329, %v4333
    %v4335 = vrot.slane %v3862, 1
    %v4336 = vrot.slane %v3864, 2
    %v4337 = vor.u32 %v4335, %v4336
    %v4339 = vshll.u32 %v4315, 16
    %v4341 = vrot.slane %v4339, 2
    %v4342 = vsel %vm2392, %v4337, %v4341
    %v4343 = vrot.slane %v3869, 1
    %v4344 = vrot.slane %v3871, 2
    %v4345 = vor.u32 %v4343, %v4344
    %v4347 = vshll.u32 %v4316, 16
    %v4349 = vrot.slane %v4347, 2
    %v4350 = vsel %vm2392, %v4345, %v4349
    %v4351 = vrot.slane %v3876, 1
    %v4352 = vrot.slane %v3878, 2
    %v4353 = vor.u32 %v4351, %v4352
    %v4355 = vshll.u32 %v4317, 16
    %v4357 = vrot.slane %v4355, 2
    %v4358 = vsel %vm2392, %v4353, %v4357
    %v4359 = vrot.slane %v3883, 1
    %v4360 = vrot.slane %v3885, 2
    %v4361 = vor.u32 %v4359, %v4360
    %v4363 = vshll.u32 %v4318, 16
    %v4365 = vrot.slane %v4363, 2
    %v4366 = vsel %vm2392, %v4361, %v4365
    %4373 = vmatprep.subr.bf16.mxu0 %v2750
    %4374 = vmatpush1.bf16.msra.mxu0 %v2749
    %4375 = vmatprep.subr.bf16.mxu0 %v2748
    %4376 = vmatpush1.bf16.msra.mxu0 %v2747
    %4377 = vmatprep.subr.bf16.mxu0 %v2746
    %4378 = vmatpush1.bf16.msra.mxu0 %v2745
    %4379 = vmatprep.subr.bf16.mxu0 %v2744
    %4380 = vmatpush1.bf16.msra.mxu0 %v2743
    %4381 = vmatprep.subr.bf16.mxu0 %v2742
    %4382 = vmatpush1.bf16.msra.mxu0 %v2741
    %4383 = vmatprep.subr.bf16.mxu0 %v2740
    %4384 = vmatpush1.bf16.msra.mxu0 %v2739
    %4385 = vmatprep.subr.bf16.mxu0 %v2738
    %4386 = vmatpush1.bf16.msra.mxu0 %v2737
    %4387 = vmatprep.subr.bf16.mxu0 %v2736
    %4388 = vmatpush1.bf16.msra.mxu0 %v2735
    %4389 = vmatprep.subr.bf16.mxu0 %v2766
    %4390 = vmatpush2.bf16.msra.mxu0 %v2765
    %4391 = vmatprep.subr.bf16.mxu0 %v2764
    %4392 = vmatpush2.bf16.msra.mxu0 %v2763
    %4393 = vmatprep.subr.bf16.mxu0 %v2762
    %4394 = vmatpush2.bf16.msra.mxu0 %v2761
    %4395 = vmatprep.subr.bf16.mxu0 %v2760
    %4396 = vmatpush2.bf16.msra.mxu0 %v2759
    %4397 = vmatprep.subr.bf16.mxu0 %v2758
    %4398 = vmatpush2.bf16.msra.mxu0 %v2757
    %4399 = vmatprep.subr.bf16.mxu0 %v2756
    %4400 = vmatpush2.bf16.msra.mxu0 %v2755
    %4401 = vmatprep.subr.bf16.mxu0 %v2754
    %4402 = vmatpush2.bf16.msra.mxu0 %v2753
    %4403 = vmatprep.subr.bf16.mxu0 %v2752
    %4404 = vmatpush2.bf16.msra.mxu0 %v2751
    %4405 = vmatprep.mubr.bf16.mxu0 %v4334
    %4406 = vmatmul.mubr.bf16.gmra.mxu0 %v4326
    %v4407 = vpop.f32.mrf.mxu0
    %v4408 = vadd.f32 0.0, %v4407
    %v4409 = vpop.f32.mrf.mxu0
    %v4410 = vadd.f32 0.0, %v4409
    %v4411 = vpop.f32.mrf.mxu0
    %v4412 = vadd.f32 0.0, %v4411
    %v4413 = vpop.f32.mrf.mxu0
    %v4414 = vadd.f32 0.0, %v4413
    %4415 = vdwg.mxu0
    %4416 = vmatprep.subr.bf16.mxu0 %v2782
    %4417 = vmatpush1.bf16.msra.mxu0 %v2781
    %4418 = vmatprep.subr.bf16.mxu0 %v2780
    %4419 = vmatpush1.bf16.msra.mxu0 %v2779
    %4420 = vmatprep.subr.bf16.mxu0 %v2778
    %4421 = vmatpush1.bf16.msra.mxu0 %v2777
    %4422 = vmatprep.subr.bf16.mxu0 %v2776
    %4423 = vmatpush1.bf16.msra.mxu0 %v2775
    %4424 = vmatprep.subr.bf16.mxu0 %v2774
    %4425 = vmatpush1.bf16.msra.mxu0 %v2773
    %4426 = vmatprep.subr.bf16.mxu0 %v2772
    %4427 = vmatpush1.bf16.msra.mxu0 %v2771
    %4428 = vmatprep.subr.bf16.mxu0 %v2770
    %4429 = vmatpush1.bf16.msra.mxu0 %v2769
    %4430 = vmatprep.subr.bf16.mxu0 %v2768
    %4431 = vmatpush1.bf16.msra.mxu0 %v2767
    %4432 = vmatprep.subr.bf16.mxu0 %v2798
    %4433 = vmatpush2.bf16.msra.mxu0 %v2797
    %4434 = vmatprep.subr.bf16.mxu0 %v2796
    %4435 = vmatpush2.bf16.msra.mxu0 %v2795
    %4436 = vmatprep.subr.bf16.mxu0 %v2794
    %4437 = vmatpush2.bf16.msra.mxu0 %v2793
    %4438 = vmatprep.subr.bf16.mxu0 %v2792
    %4439 = vmatpush2.bf16.msra.mxu0 %v2791
    %4440 = vmatprep.subr.bf16.mxu0 %v2790
    %4441 = vmatpush2.bf16.msra.mxu0 %v2789
    %4442 = vmatprep.subr.bf16.mxu0 %v2788
    %4443 = vmatpush2.bf16.msra.mxu0 %v2787
    %4444 = vmatprep.subr.bf16.mxu0 %v2786
    %4445 = vmatpush2.bf16.msra.mxu0 %v2785
    %4446 = vmatprep.subr.bf16.mxu0 %v2784
    %4447 = vmatpush2.bf16.msra.mxu0 %v2783
    %4448 = vmatprep.mubr.bf16.mxu0 %v4350
    %4449 = vmatmul.mubr.bf16.gmra.mxu0 %v4342
    %v4450 = vpop.f32.mrf.mxu0
    %v4451 = vadd.f32 %v4408, %v4450
    %v4452 = vpop.f32.mrf.mxu0
    %v4453 = vadd.f32 %v4410, %v4452
    %v4454 = vpop.f32.mrf.mxu0
    %v4455 = vadd.f32 %v4412, %v4454
    %v4456 = vpop.f32.mrf.mxu0
    %v4457 = vadd.f32 %v4414, %v4456
    %4458 = vdwg.mxu0
    %4459 = vmatprep.subr.bf16.mxu0 %v2814
    %4460 = vmatpush1.bf16.msra.mxu0 %v2813
    %4461 = vmatprep.subr.bf16.mxu0 %v2812
    %4462 = vmatpush1.bf16.msra.mxu0 %v2811
    %4463 = vmatprep.subr.bf16.mxu0 %v2810
    %4464 = vmatpush1.bf16.msra.mxu0 %v2809
    %4465 = vmatprep.subr.bf16.mxu0 %v2808
    %4466 = vmatpush1.bf16.msra.mxu0 %v2807
    %4467 = vmatprep.subr.bf16.mxu0 %v2806
    %4468 = vmatpush1.bf16.msra.mxu0 %v2805
    %4469 = vmatprep.subr.bf16.mxu0 %v2804
    %4470 = vmatpush1.bf16.msra.mxu0 %v2803
    %4471 = vmatprep.subr.bf16.mxu0 %v2802
    %4472 = vmatpush1.bf16.msra.mxu0 %v2801
    %4473 = vmatprep.subr.bf16.mxu0 %v2800
    %4474 = vmatpush1.bf16.msra.mxu0 %v2799
    %4475 = vmatprep.subr.bf16.mxu0 %v2830
    %4476 = vmatpush2.bf16.msra.mxu0 %v2829
    %4477 = vmatprep.subr.bf16.mxu0 %v2828
    %4478 = vmatpush2.bf16.msra.mxu0 %v2827
    %4479 = vmatprep.subr.bf16.mxu0 %v2826
    %4480 = vmatpush2.bf16.msra.mxu0 %v2825
    %4481 = vmatprep.subr.bf16.mxu0 %v2824
    %4482 = vmatpush2.bf16.msra.mxu0 %v2823
    %4483 = vmatprep.subr.bf16.mxu0 %v2822
    %4484 = vmatpush2.bf16.msra.mxu0 %v2821
    %4485 = vmatprep.subr.bf16.mxu0 %v2820
    %4486 = vmatpush2.bf16.msra.mxu0 %v2819
    %4487 = vmatprep.subr.bf16.mxu0 %v2818
    %4488 = vmatpush2.bf16.msra.mxu0 %v2817
    %4489 = vmatprep.subr.bf16.mxu0 %v2816
    %4490 = vmatpush2.bf16.msra.mxu0 %v2815
    %4491 = vmatprep.mubr.bf16.mxu0 %v4366
    %4492 = vmatmul.mubr.bf16.gmra.mxu0 %v4358
    %v4493 = vpop.f32.mrf.mxu0
    %v4494 = vadd.f32 %v4451, %v4493
    %v4495 = vpop.f32.mrf.mxu0
    %v4496 = vadd.f32 %v4453, %v4495
    %v4497 = vpop.f32.mrf.mxu0
    %v4498 = vadd.f32 %v4455, %v4497
    %v4499 = vpop.f32.mrf.mxu0
    %v4500 = vadd.f32 %v4457, %v4499
    %4501 = vdwg.mxu0
    %v4502 = vadd.f32 %v4300, %v4494
    %v4503 = vadd.f32 %v4301, %v4496
    %v4504 = vadd.f32 %v4302, %v4498
    %v4505 = vadd.f32 %v4303, %v4500
    %v4506 = vsel %vm55, %v4502, -inf
    %v4507 = vsel %vm56, %v4503, -inf
    %v4508 = vsel %vm57, %v4504, -inf
    %v4509 = vsel %vm58, %v4505, -inf
    %v4510 = vsel %vm3064, %v4508, -inf
    %v4511 = vmax.f32 %v4506, %v4510
    %v4512 = vrot.slane %v4511, 4
    %v4513 = vmax.f32 %v4511, %v4512
    %v4514 = vrot.slane %v4513, 2
    %v4515 = vmax.f32 %v4513, %v4514
    %v4516 = vrot.slane %v4515, 1
    %v4517 = vmax.f32 %v4515, %v4516
    %v4518 = vsel %vm3064, %v4509, -inf
    %v4519 = vmax.f32 %v4507, %v4518
    %v4520 = vrot.slane %v4519, 4
    %v4521 = vmax.f32 %v4519, %v4520
    %v4522 = vrot.slane %v4521, 2
    %v4523 = vmax.f32 %v4521, %v4522
    %v4524 = vrot.slane %v4523, 1
    %v4525 = vmax.f32 %v4523, %v4524
    %v4526 = vadd.f32 %v4517, %v3085
    %v4527 = vadd.f32 %v4525, %v3089
    %v4528 = vmax.f32 %v4526, 0.0
    %v4529 = vmax.f32 %v4527, 0.0
    %s4530 = scalar_lea.vmem %s0, 216
    %v4531 = vld [vmem:[%s4530] sm:$0xff]
    %v4532 = vld [vmem:[%s4530 + $0x8] sm:$0xff]
    %v4533 = vld [vmem:[%s4530 + $0x10] sm:$0xff]
    %v4534 = vld [vmem:[%s4530 + $0x18] sm:$0xff]
    %v4535 = vld [vmem:[%s4530 + $0x20] sm:$0xff]
    %v4536 = vld [vmem:[%s4530 + $0x28] sm:$0xff]
    %v4537 = vld [vmem:[%s4530 + $0x30] sm:$0x11]
    %v4538 = vld [vmem:[%s4530 + $0x38] sm:$0x11]
    %v4539 = vld [vmem:[%s4530 + $0x40] sm:$0x11]
    %v4546 = vunpack.c.l.b16 %v4531
    %v4547 = vunpack.c.h.b16 %v4531
    %v4548 = vunpack.c.l.b16 %v4532
    %v4549 = vunpack.c.h.b16 %v4532
    %v4550 = vunpack.c.l.b16 %v4533
    %v4551 = vunpack.c.h.b16 %v4533
    %v4552 = vunpack.c.l.b16 %v4534
    %v4553 = vunpack.c.h.b16 %v4534
    %v4554 = vunpack.c.l.b16 %v4535
    %v4555 = vunpack.c.h.b16 %v4535
    %v4556 = vunpack.c.l.b16 %v4536
    %v4557 = vunpack.c.h.b16 %v4536
    %v4558 = vpack.c.b16 %v4552, %v4546
    %v4559 = vpack.c.b16 %v4553, %v4547
    %v4560 = vpack.c.b16 %v4554, %v4548
    %v4561 = vpack.c.b16 %v4555, %v4549
    %v4562 = vpack.c.b16 %v4556, %v4550
    %v4563 = vpack.c.b16 %v4557, %v4551
    %v4565 = vshrl.u32 %v4558, 16
    %v4567 = vshll.u32 %v4558, 16
    %v4569 = vrot.slane %v4567, 1
    %v4570 = vor.u32 %v4565, %v4569
    %v4572 = vshrl.u32 %v4559, 16
    %v4574 = vshll.u32 %v4559, 16
    %v4576 = vrot.slane %v4574, 1
    %v4577 = vor.u32 %v4572, %v4576
    %v4579 = vshrl.u32 %v4560, 16
    %v4581 = vshll.u32 %v4560, 16
    %v4583 = vrot.slane %v4581, 1
    %v4584 = vor.u32 %v4579, %v4583
    %v4586 = vshrl.u32 %v4561, 16
    %v4588 = vshll.u32 %v4561, 16
    %v4590 = vrot.slane %v4588, 1
    %v4591 = vor.u32 %v4586, %v4590
    %v4593 = vshrl.u32 %v4562, 16
    %v4595 = vshll.u32 %v4562, 16
    %v4597 = vrot.slane %v4595, 1
    %v4598 = vor.u32 %v4593, %v4597
    %v4600 = vshrl.u32 %v4563, 16
    %v4602 = vshll.u32 %v4563, 16
    %v4604 = vrot.slane %v4602, 1
    %v4605 = vor.u32 %v4600, %v4604
    %4612 = vmatprep.subr.bf16.mxu0 %v637
    %4613 = vmatpush1.bf16.msra.mxu0 %v636
    %4614 = vmatprep.subr.bf16.mxu0 %v635
    %4615 = vmatpush1.bf16.msra.mxu0 %v634
    %4616 = vmatprep.subr.bf16.mxu0 %v633
    %4617 = vmatpush1.bf16.msra.mxu0 %v632
    %4618 = vmatprep.subr.bf16.mxu0 %v631
    %4619 = vmatpush1.bf16.msra.mxu0 %v630
    %4620 = vmatprep.subr.bf16.mxu0 %v629
    %4621 = vmatpush1.bf16.msra.mxu0 %v628
    %4622 = vmatprep.subr.bf16.mxu0 %v627
    %4623 = vmatpush1.bf16.msra.mxu0 %v626
    %4624 = vmatprep.subr.bf16.mxu0 %v625
    %4625 = vmatpush1.bf16.msra.mxu0 %v624
    %4626 = vmatprep.subr.bf16.mxu0 %v623
    %4627 = vmatpush1.bf16.msra.mxu0 %v622
    %4628 = vmatprep.subr.bf16.mxu0 %v653
    %4629 = vmatpush2.bf16.msra.mxu0 %v652
    %4630 = vmatprep.subr.bf16.mxu0 %v651
    %4631 = vmatpush2.bf16.msra.mxu0 %v650
    %4632 = vmatprep.subr.bf16.mxu0 %v649
    %4633 = vmatpush2.bf16.msra.mxu0 %v648
    %4634 = vmatprep.subr.bf16.mxu0 %v647
    %4635 = vmatpush2.bf16.msra.mxu0 %v646
    %4636 = vmatprep.subr.bf16.mxu0 %v645
    %4637 = vmatpush2.bf16.msra.mxu0 %v644
    %4638 = vmatprep.subr.bf16.mxu0 %v643
    %4639 = vmatpush2.bf16.msra.mxu0 %v642
    %4640 = vmatprep.subr.bf16.mxu0 %v641
    %4641 = vmatpush2.bf16.msra.mxu0 %v640
    %4642 = vmatprep.subr.bf16.mxu0 %v639
    %4643 = vmatpush2.bf16.msra.mxu0 %v638
    %4644 = vmatprep.mubr.bf16.mxu0 %v4577
    %4645 = vmatmul.mubr.bf16.gmra.mxu0 %v4570
    %v4646 = vpop.f32.mrf.mxu0
    %v4647 = vadd.f32 0.0, %v4646
    %v4648 = vpop.f32.mrf.mxu0
    %v4649 = vadd.f32 0.0, %v4648
    %v4650 = vpop.f32.mrf.mxu0
    %v4651 = vadd.f32 0.0, %v4650
    %v4652 = vpop.f32.mrf.mxu0
    %v4653 = vadd.f32 0.0, %v4652
    %4654 = vdwg.mxu0
    %4655 = vmatprep.subr.bf16.mxu0 %v669
    %4656 = vmatpush1.bf16.msra.mxu0 %v668
    %4657 = vmatprep.subr.bf16.mxu0 %v667
    %4658 = vmatpush1.bf16.msra.mxu0 %v666
    %4659 = vmatprep.subr.bf16.mxu0 %v665
    %4660 = vmatpush1.bf16.msra.mxu0 %v664
    %4661 = vmatprep.subr.bf16.mxu0 %v663
    %4662 = vmatpush1.bf16.msra.mxu0 %v662
    %4663 = vmatprep.subr.bf16.mxu0 %v661
    %4664 = vmatpush1.bf16.msra.mxu0 %v660
    %4665 = vmatprep.subr.bf16.mxu0 %v659
    %4666 = vmatpush1.bf16.msra.mxu0 %v658
    %4667 = vmatprep.subr.bf16.mxu0 %v657
    %4668 = vmatpush1.bf16.msra.mxu0 %v656
    %4669 = vmatprep.subr.bf16.mxu0 %v655
    %4670 = vmatpush1.bf16.msra.mxu0 %v654
    %4671 = vmatprep.subr.bf16.mxu0 %v685
    %4672 = vmatpush2.bf16.msra.mxu0 %v684
    %4673 = vmatprep.subr.bf16.mxu0 %v683
    %4674 = vmatpush2.bf16.msra.mxu0 %v682
    %4675 = vmatprep.subr.bf16.mxu0 %v681
    %4676 = vmatpush2.bf16.msra.mxu0 %v680
    %4677 = vmatprep.subr.bf16.mxu0 %v679
    %4678 = vmatpush2.bf16.msra.mxu0 %v678
    %4679 = vmatprep.subr.bf16.mxu0 %v677
    %4680 = vmatpush2.bf16.msra.mxu0 %v676
    %4681 = vmatprep.subr.bf16.mxu0 %v675
    %4682 = vmatpush2.bf16.msra.mxu0 %v674
    %4683 = vmatprep.subr.bf16.mxu0 %v673
    %4684 = vmatpush2.bf16.msra.mxu0 %v672
    %4685 = vmatprep.subr.bf16.mxu0 %v671
    %4686 = vmatpush2.bf16.msra.mxu0 %v670
    %4687 = vmatprep.mubr.bf16.mxu0 %v4591
    %4688 = vmatmul.mubr.bf16.gmra.mxu0 %v4584
    %v4689 = vpop.f32.mrf.mxu0
    %v4690 = vadd.f32 %v4647, %v4689
    %v4691 = vpop.f32.mrf.mxu0
    %v4692 = vadd.f32 %v4649, %v4691
    %v4693 = vpop.f32.mrf.mxu0
    %v4694 = vadd.f32 %v4651, %v4693
    %v4695 = vpop.f32.mrf.mxu0
    %v4696 = vadd.f32 %v4653, %v4695
    %4697 = vdwg.mxu0
    %4698 = vmatprep.subr.bf16.mxu0 %v701
    %4699 = vmatpush1.bf16.msra.mxu0 %v700
    %4700 = vmatprep.subr.bf16.mxu0 %v699
    %4701 = vmatpush1.bf16.msra.mxu0 %v698
    %4702 = vmatprep.subr.bf16.mxu0 %v697
    %4703 = vmatpush1.bf16.msra.mxu0 %v696
    %4704 = vmatprep.subr.bf16.mxu0 %v695
    %4705 = vmatpush1.bf16.msra.mxu0 %v694
    %4706 = vmatprep.subr.bf16.mxu0 %v693
    %4707 = vmatpush1.bf16.msra.mxu0 %v692
    %4708 = vmatprep.subr.bf16.mxu0 %v691
    %4709 = vmatpush1.bf16.msra.mxu0 %v690
    %4710 = vmatprep.subr.bf16.mxu0 %v689
    %4711 = vmatpush1.bf16.msra.mxu0 %v688
    %4712 = vmatprep.subr.bf16.mxu0 %v687
    %4713 = vmatpush1.bf16.msra.mxu0 %v686
    %4714 = vmatprep.subr.bf16.mxu0 %v717
    %4715 = vmatpush2.bf16.msra.mxu0 %v716
    %4716 = vmatprep.subr.bf16.mxu0 %v715
    %4717 = vmatpush2.bf16.msra.mxu0 %v714
    %4718 = vmatprep.subr.bf16.mxu0 %v713
    %4719 = vmatpush2.bf16.msra.mxu0 %v712
    %4720 = vmatprep.subr.bf16.mxu0 %v711
    %4721 = vmatpush2.bf16.msra.mxu0 %v710
    %4722 = vmatprep.subr.bf16.mxu0 %v709
    %4723 = vmatpush2.bf16.msra.mxu0 %v708
    %4724 = vmatprep.subr.bf16.mxu0 %v707
    %4725 = vmatpush2.bf16.msra.mxu0 %v706
    %4726 = vmatprep.subr.bf16.mxu0 %v705
    %4727 = vmatpush2.bf16.msra.mxu0 %v704
    %4728 = vmatprep.subr.bf16.mxu0 %v703
    %4729 = vmatpush2.bf16.msra.mxu0 %v702
    %4730 = vmatprep.mubr.bf16.mxu0 %v4605
    %4731 = vmatmul.mubr.bf16.gmra.mxu0 %v4598
    %v4732 = vpop.f32.mrf.mxu0
    %v4733 = vadd.f32 %v4690, %v4732
    %v4734 = vpop.f32.mrf.mxu0
    %v4735 = vadd.f32 %v4692, %v4734
    %v4736 = vpop.f32.mrf.mxu0
    %v4737 = vadd.f32 %v4694, %v4736
    %v4738 = vpop.f32.mrf.mxu0
    %v4739 = vadd.f32 %v4696, %v4738
    %4740 = vdwg.mxu0
    %4747 = vmatprep.subr.bf16.mxu0 %v1252
    %4748 = vmatpush1.bf16.msra.mxu0 %v1251
    %4749 = vmatprep.subr.bf16.mxu0 %v1250
    %4750 = vmatpush1.bf16.msra.mxu0 %v1249
    %4751 = vmatprep.subr.bf16.mxu0 %v1248
    %4752 = vmatpush1.bf16.msra.mxu0 %v1247
    %4753 = vmatprep.subr.bf16.mxu0 %v1246
    %4754 = vmatpush1.bf16.msra.mxu0 %v1245
    %4755 = vmatprep.subr.bf16.mxu0 %v1244
    %4756 = vmatpush1.bf16.msra.mxu0 %v1243
    %4757 = vmatprep.subr.bf16.mxu0 %v1242
    %4758 = vmatpush1.bf16.msra.mxu0 %v1241
    %4759 = vmatprep.subr.bf16.mxu0 %v1240
    %4760 = vmatpush1.bf16.msra.mxu0 %v1239
    %4761 = vmatprep.subr.bf16.mxu0 %v1238
    %4762 = vmatpush1.bf16.msra.mxu0 %v1237
    %4763 = vmatprep.subr.bf16.mxu0 %v1268
    %4764 = vmatpush2.bf16.msra.mxu0 %v1267
    %4765 = vmatprep.subr.bf16.mxu0 %v1266
    %4766 = vmatpush2.bf16.msra.mxu0 %v1265
    %4767 = vmatprep.subr.bf16.mxu0 %v1264
    %4768 = vmatpush2.bf16.msra.mxu0 %v1263
    %4769 = vmatprep.subr.bf16.mxu0 %v1262
    %4770 = vmatpush2.bf16.msra.mxu0 %v1261
    %4771 = vmatprep.subr.bf16.mxu0 %v1260
    %4772 = vmatpush2.bf16.msra.mxu0 %v1259
    %4773 = vmatprep.subr.bf16.mxu0 %v1258
    %4774 = vmatpush2.bf16.msra.mxu0 %v1257
    %4775 = vmatprep.subr.bf16.mxu0 %v1256
    %4776 = vmatpush2.bf16.msra.mxu0 %v1255
    %4777 = vmatprep.subr.bf16.mxu0 %v1254
    %4778 = vmatpush2.bf16.msra.mxu0 %v1253
    %4779 = vmatprep.mubr.bf16.mxu0 %v4559
    %4780 = vmatmul.mubr.bf16.gmra.mxu0 %v4558
    %v4781 = vpop.f32.mrf.mxu0
    %v4782 = vadd.f32 %v4733, %v4781
    %v4783 = vpop.f32.mrf.mxu0
    %v4784 = vadd.f32 %v4735, %v4783
    %v4785 = vpop.f32.mrf.mxu0
    %v4786 = vadd.f32 %v4737, %v4785
    %v4787 = vpop.f32.mrf.mxu0
    %v4788 = vadd.f32 %v4739, %v4787
    %4789 = vdwg.mxu0
    %4790 = vmatprep.subr.bf16.mxu0 %v1284
    %4791 = vmatpush1.bf16.msra.mxu0 %v1283
    %4792 = vmatprep.subr.bf16.mxu0 %v1282
    %4793 = vmatpush1.bf16.msra.mxu0 %v1281
    %4794 = vmatprep.subr.bf16.mxu0 %v1280
    %4795 = vmatpush1.bf16.msra.mxu0 %v1279
    %4796 = vmatprep.subr.bf16.mxu0 %v1278
    %4797 = vmatpush1.bf16.msra.mxu0 %v1277
    %4798 = vmatprep.subr.bf16.mxu0 %v1276
    %4799 = vmatpush1.bf16.msra.mxu0 %v1275
    %4800 = vmatprep.subr.bf16.mxu0 %v1274
    %4801 = vmatpush1.bf16.msra.mxu0 %v1273
    %4802 = vmatprep.subr.bf16.mxu0 %v1272
    %4803 = vmatpush1.bf16.msra.mxu0 %v1271
    %4804 = vmatprep.subr.bf16.mxu0 %v1270
    %4805 = vmatpush1.bf16.msra.mxu0 %v1269
    %4806 = vmatprep.subr.bf16.mxu0 %v1300
    %4807 = vmatpush2.bf16.msra.mxu0 %v1299
    %4808 = vmatprep.subr.bf16.mxu0 %v1298
    %4809 = vmatpush2.bf16.msra.mxu0 %v1297
    %4810 = vmatprep.subr.bf16.mxu0 %v1296
    %4811 = vmatpush2.bf16.msra.mxu0 %v1295
    %4812 = vmatprep.subr.bf16.mxu0 %v1294
    %4813 = vmatpush2.bf16.msra.mxu0 %v1293
    %4814 = vmatprep.subr.bf16.mxu0 %v1292
    %4815 = vmatpush2.bf16.msra.mxu0 %v1291
    %4816 = vmatprep.subr.bf16.mxu0 %v1290
    %4817 = vmatpush2.bf16.msra.mxu0 %v1289
    %4818 = vmatprep.subr.bf16.mxu0 %v1288
    %4819 = vmatpush2.bf16.msra.mxu0 %v1287
    %4820 = vmatprep.subr.bf16.mxu0 %v1286
    %4821 = vmatpush2.bf16.msra.mxu0 %v1285
    %4822 = vmatprep.mubr.bf16.mxu0 %v4561
    %4823 = vmatmul.mubr.bf16.gmra.mxu0 %v4560
    %v4824 = vpop.f32.mrf.mxu0
    %v4825 = vadd.f32 %v4782, %v4824
    %v4826 = vpop.f32.mrf.mxu0
    %v4827 = vadd.f32 %v4784, %v4826
    %v4828 = vpop.f32.mrf.mxu0
    %v4829 = vadd.f32 %v4786, %v4828
    %v4830 = vpop.f32.mrf.mxu0
    %v4831 = vadd.f32 %v4788, %v4830
    %4832 = vdwg.mxu0
    %4833 = vmatprep.subr.bf16.mxu0 %v1316
    %4834 = vmatpush1.bf16.msra.mxu0 %v1315
    %4835 = vmatprep.subr.bf16.mxu0 %v1314
    %4836 = vmatpush1.bf16.msra.mxu0 %v1313
    %4837 = vmatprep.subr.bf16.mxu0 %v1312
    %4838 = vmatpush1.bf16.msra.mxu0 %v1311
    %4839 = vmatprep.subr.bf16.mxu0 %v1310
    %4840 = vmatpush1.bf16.msra.mxu0 %v1309
    %4841 = vmatprep.subr.bf16.mxu0 %v1308
    %4842 = vmatpush1.bf16.msra.mxu0 %v1307
    %4843 = vmatprep.subr.bf16.mxu0 %v1306
    %4844 = vmatpush1.bf16.msra.mxu0 %v1305
    %4845 = vmatprep.subr.bf16.mxu0 %v1304
    %4846 = vmatpush1.bf16.msra.mxu0 %v1303
    %4847 = vmatprep.subr.bf16.mxu0 %v1302
    %4848 = vmatpush1.bf16.msra.mxu0 %v1301
    %4849 = vmatprep.subr.bf16.mxu0 %v1332
    %4850 = vmatpush2.bf16.msra.mxu0 %v1331
    %4851 = vmatprep.subr.bf16.mxu0 %v1330
    %4852 = vmatpush2.bf16.msra.mxu0 %v1329
    %4853 = vmatprep.subr.bf16.mxu0 %v1328
    %4854 = vmatpush2.bf16.msra.mxu0 %v1327
    %4855 = vmatprep.subr.bf16.mxu0 %v1326
    %4856 = vmatpush2.bf16.msra.mxu0 %v1325
    %4857 = vmatprep.subr.bf16.mxu0 %v1324
    %4858 = vmatpush2.bf16.msra.mxu0 %v1323
    %4859 = vmatprep.subr.bf16.mxu0 %v1322
    %4860 = vmatpush2.bf16.msra.mxu0 %v1321
    %4861 = vmatprep.subr.bf16.mxu0 %v1320
    %4862 = vmatpush2.bf16.msra.mxu0 %v1319
    %4863 = vmatprep.subr.bf16.mxu0 %v1318
    %4864 = vmatpush2.bf16.msra.mxu0 %v1317
    %4865 = vmatprep.mubr.bf16.mxu0 %v4563
    %4866 = vmatmul.mubr.bf16.gmra.mxu0 %v4562
    %v4867 = vpop.f32.mrf.mxu0
    %v4868 = vadd.f32 %v4825, %v4867
    %v4869 = vpop.f32.mrf.mxu0
    %v4870 = vadd.f32 %v4827, %v4869
    %v4871 = vpop.f32.mrf.mxu0
    %v4872 = vadd.f32 %v4829, %v4871
    %v4873 = vpop.f32.mrf.mxu0
    %v4874 = vadd.f32 %v4831, %v4873
    %4875 = vdwg.mxu0
    %v4876 = vrot.slane %v4558, 1
    %v4877 = vrot.slane %v4559, 1
    %v4878 = vrot.slane %v4560, 1
    %v4879 = vrot.slane %v4561, 1
    %v4880 = vrot.slane %v4562, 1
    %v4881 = vrot.slane %v4563, 1
    %4888 = vmatprep.subr.bf16.mxu0 %v1970
    %4889 = vmatpush1.bf16.msra.mxu0 %v1969
    %4890 = vmatprep.subr.bf16.mxu0 %v1968
    %4891 = vmatpush1.bf16.msra.mxu0 %v1967
    %4892 = vmatprep.subr.bf16.mxu0 %v1966
    %4893 = vmatpush1.bf16.msra.mxu0 %v1965
    %4894 = vmatprep.subr.bf16.mxu0 %v1964
    %4895 = vmatpush1.bf16.msra.mxu0 %v1963
    %4896 = vmatprep.subr.bf16.mxu0 %v1962
    %4897 = vmatpush1.bf16.msra.mxu0 %v1961
    %4898 = vmatprep.subr.bf16.mxu0 %v1960
    %4899 = vmatpush1.bf16.msra.mxu0 %v1959
    %4900 = vmatprep.subr.bf16.mxu0 %v1958
    %4901 = vmatpush1.bf16.msra.mxu0 %v1957
    %4902 = vmatprep.subr.bf16.mxu0 %v1956
    %4903 = vmatpush1.bf16.msra.mxu0 %v1955
    %4904 = vmatprep.subr.bf16.mxu0 %v1986
    %4905 = vmatpush2.bf16.msra.mxu0 %v1985
    %4906 = vmatprep.subr.bf16.mxu0 %v1984
    %4907 = vmatpush2.bf16.msra.mxu0 %v1983
    %4908 = vmatprep.subr.bf16.mxu0 %v1982
    %4909 = vmatpush2.bf16.msra.mxu0 %v1981
    %4910 = vmatprep.subr.bf16.mxu0 %v1980
    %4911 = vmatpush2.bf16.msra.mxu0 %v1979
    %4912 = vmatprep.subr.bf16.mxu0 %v1978
    %4913 = vmatpush2.bf16.msra.mxu0 %v1977
    %4914 = vmatprep.subr.bf16.mxu0 %v1976
    %4915 = vmatpush2.bf16.msra.mxu0 %v1975
    %4916 = vmatprep.subr.bf16.mxu0 %v1974
    %4917 = vmatpush2.bf16.msra.mxu0 %v1973
    %4918 = vmatprep.subr.bf16.mxu0 %v1972
    %4919 = vmatpush2.bf16.msra.mxu0 %v1971
    %4920 = vmatprep.mubr.bf16.mxu0 %v4877
    %4921 = vmatmul.mubr.bf16.gmra.mxu0 %v4876
    %v4922 = vpop.f32.mrf.mxu0
    %v4923 = vadd.f32 0.0, %v4922
    %v4924 = vpop.f32.mrf.mxu0
    %v4925 = vadd.f32 0.0, %v4924
    %v4926 = vpop.f32.mrf.mxu0
    %v4927 = vadd.f32 0.0, %v4926
    %v4928 = vpop.f32.mrf.mxu0
    %v4929 = vadd.f32 0.0, %v4928
    %4930 = vdwg.mxu0
    %4931 = vmatprep.subr.bf16.mxu0 %v2002
    %4932 = vmatpush1.bf16.msra.mxu0 %v2001
    %4933 = vmatprep.subr.bf16.mxu0 %v2000
    %4934 = vmatpush1.bf16.msra.mxu0 %v1999
    %4935 = vmatprep.subr.bf16.mxu0 %v1998
    %4936 = vmatpush1.bf16.msra.mxu0 %v1997
    %4937 = vmatprep.subr.bf16.mxu0 %v1996
    %4938 = vmatpush1.bf16.msra.mxu0 %v1995
    %4939 = vmatprep.subr.bf16.mxu0 %v1994
    %4940 = vmatpush1.bf16.msra.mxu0 %v1993
    %4941 = vmatprep.subr.bf16.mxu0 %v1992
    %4942 = vmatpush1.bf16.msra.mxu0 %v1991
    %4943 = vmatprep.subr.bf16.mxu0 %v1990
    %4944 = vmatpush1.bf16.msra.mxu0 %v1989
    %4945 = vmatprep.subr.bf16.mxu0 %v1988
    %4946 = vmatpush1.bf16.msra.mxu0 %v1987
    %4947 = vmatprep.subr.bf16.mxu0 %v2018
    %4948 = vmatpush2.bf16.msra.mxu0 %v2017
    %4949 = vmatprep.subr.bf16.mxu0 %v2016
    %4950 = vmatpush2.bf16.msra.mxu0 %v2015
    %4951 = vmatprep.subr.bf16.mxu0 %v2014
    %4952 = vmatpush2.bf16.msra.mxu0 %v2013
    %4953 = vmatprep.subr.bf16.mxu0 %v2012
    %4954 = vmatpush2.bf16.msra.mxu0 %v2011
    %4955 = vmatprep.subr.bf16.mxu0 %v2010
    %4956 = vmatpush2.bf16.msra.mxu0 %v2009
    %4957 = vmatprep.subr.bf16.mxu0 %v2008
    %4958 = vmatpush2.bf16.msra.mxu0 %v2007
    %4959 = vmatprep.subr.bf16.mxu0 %v2006
    %4960 = vmatpush2.bf16.msra.mxu0 %v2005
    %4961 = vmatprep.subr.bf16.mxu0 %v2004
    %4962 = vmatpush2.bf16.msra.mxu0 %v2003
    %4963 = vmatprep.mubr.bf16.mxu0 %v4879
    %4964 = vmatmul.mubr.bf16.gmra.mxu0 %v4878
    %v4965 = vpop.f32.mrf.mxu0
    %v4966 = vadd.f32 %v4923, %v4965
    %v4967 = vpop.f32.mrf.mxu0
    %v4968 = vadd.f32 %v4925, %v4967
    %v4969 = vpop.f32.mrf.mxu0
    %v4970 = vadd.f32 %v4927, %v4969
    %v4971 = vpop.f32.mrf.mxu0
    %v4972 = vadd.f32 %v4929, %v4971
    %4973 = vdwg.mxu0
    %4974 = vmatprep.subr.bf16.mxu0 %v2034
    %4975 = vmatpush1.bf16.msra.mxu0 %v2033
    %4976 = vmatprep.subr.bf16.mxu0 %v2032
    %4977 = vmatpush1.bf16.msra.mxu0 %v2031
    %4978 = vmatprep.subr.bf16.mxu0 %v2030
    %4979 = vmatpush1.bf16.msra.mxu0 %v2029
    %4980 = vmatprep.subr.bf16.mxu0 %v2028
    %4981 = vmatpush1.bf16.msra.mxu0 %v2027
    %4982 = vmatprep.subr.bf16.mxu0 %v2026
    %4983 = vmatpush1.bf16.msra.mxu0 %v2025
    %4984 = vmatprep.subr.bf16.mxu0 %v2024
    %4985 = vmatpush1.bf16.msra.mxu0 %v2023
    %4986 = vmatprep.subr.bf16.mxu0 %v2022
    %4987 = vmatpush1.bf16.msra.mxu0 %v2021
    %4988 = vmatprep.subr.bf16.mxu0 %v2020
    %4989 = vmatpush1.bf16.msra.mxu0 %v2019
    %4990 = vmatprep.subr.bf16.mxu0 %v2050
    %4991 = vmatpush2.bf16.msra.mxu0 %v2049
    %4992 = vmatprep.subr.bf16.mxu0 %v2048
    %4993 = vmatpush2.bf16.msra.mxu0 %v2047
    %4994 = vmatprep.subr.bf16.mxu0 %v2046
    %4995 = vmatpush2.bf16.msra.mxu0 %v2045
    %4996 = vmatprep.subr.bf16.mxu0 %v2044
    %4997 = vmatpush2.bf16.msra.mxu0 %v2043
    %4998 = vmatprep.subr.bf16.mxu0 %v2042
    %4999 = vmatpush2.bf16.msra.mxu0 %v2041
    %5000 = vmatprep.subr.bf16.mxu0 %v2040
    %5001 = vmatpush2.bf16.msra.mxu0 %v2039
    %5002 = vmatprep.subr.bf16.mxu0 %v2038
    %5003 = vmatpush2.bf16.msra.mxu0 %v2037
    %5004 = vmatprep.subr.bf16.mxu0 %v2036
    %5005 = vmatpush2.bf16.msra.mxu0 %v2035
    %5006 = vmatprep.mubr.bf16.mxu0 %v4881
    %5007 = vmatmul.mubr.bf16.gmra.mxu0 %v4880
    %v5008 = vpop.f32.mrf.mxu0
    %v5009 = vadd.f32 %v4966, %v5008
    %v5010 = vpop.f32.mrf.mxu0
    %v5011 = vadd.f32 %v4968, %v5010
    %v5012 = vpop.f32.mrf.mxu0
    %v5013 = vadd.f32 %v4970, %v5012
    %v5014 = vpop.f32.mrf.mxu0
    %v5015 = vadd.f32 %v4972, %v5014
    %5016 = vdwg.mxu0
    %v5017 = vadd.f32 %v4868, %v5009
    %v5018 = vadd.f32 %v4870, %v5011
    %v5019 = vadd.f32 %v4872, %v5013
    %v5020 = vadd.f32 %v4874, %v5015
    %v5024 = vunpack.c.l.b16 %v4537
    %v5025 = vunpack.c.h.b16 %v4537
    %v5026 = vunpack.c.l.b16 %v4538
    %v5027 = vunpack.c.h.b16 %v4538
    %v5028 = vunpack.c.l.b16 %v4539
    %v5029 = vunpack.c.h.b16 %v4539
    %v5030 = vpack.c.b16 %v5024, %v5024
    %v5031 = vpack.c.b16 %v5025, %v5025
    %v5032 = vpack.c.b16 %v5026, %v5026
    %v5033 = vpack.c.b16 %v5027, %v5027
    %v5034 = vpack.c.b16 %v5028, %v5028
    %v5035 = vpack.c.b16 %v5029, %v5029
    %v5036 = vrot.slane %v4565, 1
    %v5037 = vrot.slane %v4567, 2
    %v5038 = vor.u32 %v5036, %v5037
    %v5040 = vshll.u32 %v5030, 16
    %v5042 = vrot.slane %v5040, 2
    %v5043 = vsel %vm2392, %v5038, %v5042
    %v5044 = vrot.slane %v4572, 1
    %v5045 = vrot.slane %v4574, 2
    %v5046 = vor.u32 %v5044, %v5045
    %v5048 = vshll.u32 %v5031, 16
    %v5050 = vrot.slane %v5048, 2
    %v5051 = vsel %vm2392, %v5046, %v5050
    %v5052 = vrot.slane %v4579, 1
    %v5053 = vrot.slane %v4581, 2
    %v5054 = vor.u32 %v5052, %v5053
    %v5056 = vshll.u32 %v5032, 16
    %v5058 = vrot.slane %v5056, 2
    %v5059 = vsel %vm2392, %v5054, %v5058
    %v5060 = vrot.slane %v4586, 1
    %v5061 = vrot.slane %v4588, 2
    %v5062 = vor.u32 %v5060, %v5061
    %v5064 = vshll.u32 %v5033, 16
    %v5066 = vrot.slane %v5064, 2
    %v5067 = vsel %vm2392, %v5062, %v5066
    %v5068 = vrot.slane %v4593, 1
    %v5069 = vrot.slane %v4595, 2
    %v5070 = vor.u32 %v5068, %v5069
    %v5072 = vshll.u32 %v5034, 16
    %v5074 = vrot.slane %v5072, 2
    %v5075 = vsel %vm2392, %v5070, %v5074
    %v5076 = vrot.slane %v4600, 1
    %v5077 = vrot.slane %v4602, 2
    %v5078 = vor.u32 %v5076, %v5077
    %v5080 = vshll.u32 %v5035, 16
    %v5082 = vrot.slane %v5080, 2
    %v5083 = vsel %vm2392, %v5078, %v5082
    %5090 = vmatprep.subr.bf16.mxu0 %v2750
    %5091 = vmatpush1.bf16.msra.mxu0 %v2749
    %5092 = vmatprep.subr.bf16.mxu0 %v2748
    %5093 = vmatpush1.bf16.msra.mxu0 %v2747
    %5094 = vmatprep.subr.bf16.mxu0 %v2746
    %5095 = vmatpush1.bf16.msra.mxu0 %v2745
    %5096 = vmatprep.subr.bf16.mxu0 %v2744
    %5097 = vmatpush1.bf16.msra.mxu0 %v2743
    %5098 = vmatprep.subr.bf16.mxu0 %v2742
    %5099 = vmatpush1.bf16.msra.mxu0 %v2741
    %5100 = vmatprep.subr.bf16.mxu0 %v2740
    %5101 = vmatpush1.bf16.msra.mxu0 %v2739
    %5102 = vmatprep.subr.bf16.mxu0 %v2738
    %5103 = vmatpush1.bf16.msra.mxu0 %v2737
    %5104 = vmatprep.subr.bf16.mxu0 %v2736
    %5105 = vmatpush1.bf16.msra.mxu0 %v2735
    %5106 = vmatprep.subr.bf16.mxu0 %v2766
    %5107 = vmatpush2.bf16.msra.mxu0 %v2765
    %5108 = vmatprep.subr.bf16.mxu0 %v2764
    %5109 = vmatpush2.bf16.msra.mxu0 %v2763
    %5110 = vmatprep.subr.bf16.mxu0 %v2762
    %5111 = vmatpush2.bf16.msra.mxu0 %v2761
    %5112 = vmatprep.subr.bf16.mxu0 %v2760
    %5113 = vmatpush2.bf16.msra.mxu0 %v2759
    %5114 = vmatprep.subr.bf16.mxu0 %v2758
    %5115 = vmatpush2.bf16.msra.mxu0 %v2757
    %5116 = vmatprep.subr.bf16.mxu0 %v2756
    %5117 = vmatpush2.bf16.msra.mxu0 %v2755
    %5118 = vmatprep.subr.bf16.mxu0 %v2754
    %5119 = vmatpush2.bf16.msra.mxu0 %v2753
    %5120 = vmatprep.subr.bf16.mxu0 %v2752
    %5121 = vmatpush2.bf16.msra.mxu0 %v2751
    %5122 = vmatprep.mubr.bf16.mxu0 %v5051
    %5123 = vmatmul.mubr.bf16.gmra.mxu0 %v5043
    %v5124 = vpop.f32.mrf.mxu0
    %v5125 = vadd.f32 0.0, %v5124
    %v5126 = vpop.f32.mrf.mxu0
    %v5127 = vadd.f32 0.0, %v5126
    %v5128 = vpop.f32.mrf.mxu0
    %v5129 = vadd.f32 0.0, %v5128
    %v5130 = vpop.f32.mrf.mxu0
    %v5131 = vadd.f32 0.0, %v5130
    %5132 = vdwg.mxu0
    %5133 = vmatprep.subr.bf16.mxu0 %v2782
    %5134 = vmatpush1.bf16.msra.mxu0 %v2781
    %5135 = vmatprep.subr.bf16.mxu0 %v2780
    %5136 = vmatpush1.bf16.msra.mxu0 %v2779
    %5137 = vmatprep.subr.bf16.mxu0 %v2778
    %5138 = vmatpush1.bf16.msra.mxu0 %v2777
    %5139 = vmatprep.subr.bf16.mxu0 %v2776
    %5140 = vmatpush1.bf16.msra.mxu0 %v2775
    %5141 = vmatprep.subr.bf16.mxu0 %v2774
    %5142 = vmatpush1.bf16.msra.mxu0 %v2773
    %5143 = vmatprep.subr.bf16.mxu0 %v2772
    %5144 = vmatpush1.bf16.msra.mxu0 %v2771
    %5145 = vmatprep.subr.bf16.mxu0 %v2770
    %5146 = vmatpush1.bf16.msra.mxu0 %v2769
    %5147 = vmatprep.subr.bf16.mxu0 %v2768
    %5148 = vmatpush1.bf16.msra.mxu0 %v2767
    %5149 = vmatprep.subr.bf16.mxu0 %v2798
    %5150 = vmatpush2.bf16.msra.mxu0 %v2797
    %5151 = vmatprep.subr.bf16.mxu0 %v2796
    %5152 = vmatpush2.bf16.msra.mxu0 %v2795
    %5153 = vmatprep.subr.bf16.mxu0 %v2794
    %5154 = vmatpush2.bf16.msra.mxu0 %v2793
    %5155 = vmatprep.subr.bf16.mxu0 %v2792
    %5156 = vmatpush2.bf16.msra.mxu0 %v2791
    %5157 = vmatprep.subr.bf16.mxu0 %v2790
    %5158 = vmatpush2.bf16.msra.mxu0 %v2789
    %5159 = vmatprep.subr.bf16.mxu0 %v2788
    %5160 = vmatpush2.bf16.msra.mxu0 %v2787
    %5161 = vmatprep.subr.bf16.mxu0 %v2786
    %5162 = vmatpush2.bf16.msra.mxu0 %v2785
    %5163 = vmatprep.subr.bf16.mxu0 %v2784
    %5164 = vmatpush2.bf16.msra.mxu0 %v2783
    %5165 = vmatprep.mubr.bf16.mxu0 %v5067
    %5166 = vmatmul.mubr.bf16.gmra.mxu0 %v5059
    %v5167 = vpop.f32.mrf.mxu0
    %v5168 = vadd.f32 %v5125, %v5167
    %v5169 = vpop.f32.mrf.mxu0
    %v5170 = vadd.f32 %v5127, %v5169
    %v5171 = vpop.f32.mrf.mxu0
    %v5172 = vadd.f32 %v5129, %v5171
    %v5173 = vpop.f32.mrf.mxu0
    %v5174 = vadd.f32 %v5131, %v5173
    %5175 = vdwg.mxu0
    %5176 = vmatprep.subr.bf16.mxu0 %v2814
    %5177 = vmatpush1.bf16.msra.mxu0 %v2813
    %5178 = vmatprep.subr.bf16.mxu0 %v2812
    %5179 = vmatpush1.bf16.msra.mxu0 %v2811
    %5180 = vmatprep.subr.bf16.mxu0 %v2810
    %5181 = vmatpush1.bf16.msra.mxu0 %v2809
    %5182 = vmatprep.subr.bf16.mxu0 %v2808
    %5183 = vmatpush1.bf16.msra.mxu0 %v2807
    %5184 = vmatprep.subr.bf16.mxu0 %v2806
    %5185 = vmatpush1.bf16.msra.mxu0 %v2805
    %5186 = vmatprep.subr.bf16.mxu0 %v2804
    %5187 = vmatpush1.bf16.msra.mxu0 %v2803
    %5188 = vmatprep.subr.bf16.mxu0 %v2802
    %5189 = vmatpush1.bf16.msra.mxu0 %v2801
    %5190 = vmatprep.subr.bf16.mxu0 %v2800
    %5191 = vmatpush1.bf16.msra.mxu0 %v2799
    %5192 = vmatprep.subr.bf16.mxu0 %v2830
    %5193 = vmatpush2.bf16.msra.mxu0 %v2829
    %5194 = vmatprep.subr.bf16.mxu0 %v2828
    %5195 = vmatpush2.bf16.msra.mxu0 %v2827
    %5196 = vmatprep.subr.bf16.mxu0 %v2826
    %5197 = vmatpush2.bf16.msra.mxu0 %v2825
    %5198 = vmatprep.subr.bf16.mxu0 %v2824
    %5199 = vmatpush2.bf16.msra.mxu0 %v2823
    %5200 = vmatprep.subr.bf16.mxu0 %v2822
    %5201 = vmatpush2.bf16.msra.mxu0 %v2821
    %5202 = vmatprep.subr.bf16.mxu0 %v2820
    %5203 = vmatpush2.bf16.msra.mxu0 %v2819
    %5204 = vmatprep.subr.bf16.mxu0 %v2818
    %5205 = vmatpush2.bf16.msra.mxu0 %v2817
    %5206 = vmatprep.subr.bf16.mxu0 %v2816
    %5207 = vmatpush2.bf16.msra.mxu0 %v2815
    %5208 = vmatprep.mubr.bf16.mxu0 %v5083
    %5209 = vmatmul.mubr.bf16.gmra.mxu0 %v5075
    %v5210 = vpop.f32.mrf.mxu0
    %v5211 = vadd.f32 %v5168, %v5210
    %v5212 = vpop.f32.mrf.mxu0
    %v5213 = vadd.f32 %v5170, %v5212
    %v5214 = vpop.f32.mrf.mxu0
    %v5215 = vadd.f32 %v5172, %v5214
    %v5216 = vpop.f32.mrf.mxu0
    %v5217 = vadd.f32 %v5174, %v5216
    %5218 = vdwg.mxu0
    %v5219 = vadd.f32 %v5017, %v5211
    %v5220 = vadd.f32 %v5018, %v5213
    %v5221 = vadd.f32 %v5019, %v5215
    %v5222 = vadd.f32 %v5020, %v5217
    %v5223 = vsel %vm55, %v5219, -inf
    %v5224 = vsel %vm56, %v5220, -inf
    %v5225 = vsel %vm57, %v5221, -inf
    %v5226 = vsel %vm58, %v5222, -inf
    %v5227 = vsel %vm3064, %v5225, -inf
    %v5228 = vmax.f32 %v5223, %v5227
    %v5229 = vrot.slane %v5228, 4
    %v5230 = vmax.f32 %v5228, %v5229
    %v5231 = vrot.slane %v5230, 2
    %v5232 = vmax.f32 %v5230, %v5231
    %v5233 = vrot.slane %v5232, 1
    %v5234 = vmax.f32 %v5232, %v5233
    %v5235 = vsel %vm3064, %v5226, -inf
    %v5236 = vmax.f32 %v5224, %v5235
    %v5237 = vrot.slane %v5236, 4
    %v5238 = vmax.f32 %v5236, %v5237
    %v5239 = vrot.slane %v5238, 2
    %v5240 = vmax.f32 %v5238, %v5239
    %v5241 = vrot.slane %v5240, 1
    %v5242 = vmax.f32 %v5240, %v5241
    %v5243 = vadd.f32 %v5234, %v3085
    %v5244 = vadd.f32 %v5242, %v3089
    %v5245 = vmax.f32 %v5243, 0.0
    %v5246 = vmax.f32 %v5244, 0.0
    %v5249 = vrot.slane %v3811, 7
    %v5250 = vrot.slane %v3812, 7
    %v5255 = vrot.slane %v4528, 6
    %v5256 = vrot.slane %v4529, 6
    %v5261 = vrot.slane %v5245, 5
    %v5262 = vrot.slane %v5246, 5
    %vm5265 = vcmask 1040384
    %v5266 = vsel %vm5265, %v3094, %v5249
    %v5267 = vsel %vm5265, %v3095, %v5250
    %vm5268 = vcmask 1041408
    %v5269 = vsel %vm5268, %v5266, %v5255
    %v5270 = vsel %vm5268, %v5267, %v5256
    %vm5271 = vcmask 1042432
    %v5272 = vsel %vm5271, %v5269, %v5261
    %v5273 = vsel %vm5271, %v5270, %v5262
    %v5276 = vcombine.low %v5272, %v5273
    %5278 = vst [vmem:[#allocation7] sm:$0xff] %v5276
    // Predicated region
    $region22: #{tpu_custom_call.1} parent=1 // pred_check
      _
    $region23: #{tpu_custom_call.1} parent=1 // pred_check_branch
      %5280 = sbr.rel (0) target = $region25
    $region24: #{tpu_custom_call.1} parent=1 // pred_region
      %s5282 = ssub.s32 128, 128
      %5283 = vsyncadd [#allocation4], %s5282
      %s5285 = sshll.u32 [#allocation7], 4
      %s5286 = int_to_ptr.vmem [resolvable:$true] %s5285
      %5288 = dma.vmem_to_hbm [thread:$0]  %s5286, 128, %s3, [#allocation4]
    $region25: #{tpu_custom_call.1} parent=1 // pred_fallthru
      _
    // Predicated region
    $region26: #{tpu_custom_call.1} parent=1 // pred_check
      _
    $region27: #{tpu_custom_call.1} parent=1 // pred_check_branch
      %5290 = sbr.rel (0) target = $region29
    $region28: #{tpu_custom_call.1} parent=1 // pred_region
      %5291 = dma.done [#allocation4], 128
    $region29: #{tpu_custom_call.1} parent=1 // pred_fallthru
      _
    %5292 = vsyncpa [#allocation3], 1
    %5293 = vsyncpa [#allocation6], 1
    %5294 = vsyncpa [#allocation4], 1

</llo_original>
